<compile_context>
chip_gen: v5e
topology: v5e:2x2
jax: 0.10.0
libtpu: 0.0.40
codegen_flags: <defaults>
</compile_context>

<pallas_src>
import math
import numpy as np

import jax
import jax.numpy as jnp
from jax import lax
from jax.experimental import pallas as pl
from jax.experimental.pallas import tpu as pltpu


TILE_B = 32   # images per grid step; sweep {8, 16, 32, 64}. Must be a multiple of 8.


# ----------------------------------------------------------------------------
# Fused kernel: conv1+pool+relu -> conv2+pool+relu -> fc1+relu -> fc2 -> log_softmax
# ----------------------------------------------------------------------------
def fused_net_kernel(win_ref, m1_ref, b1_ref, m2_ref, b2_ref,
                     g1_ref, bf1_ref, g2_ref, bf2_ref, o_ref):
    """One batch tile (TB = o_ref.shape[0] images) per grid step.

    win_ref : [4, 1, 6*TB, 140] bf16  conv1 fused-K windows; group m = conv row mod 4,
                                      row = s*TB + t (image t, window start 4s+m),
                                      lane = ky*28 + column.
    m1_ref  : [140, 256]  bf16  conv1 banded weights; row = ky*28 + x_in,
                                col = par*128 + px*10 + o (cols 120..127 per half zero).
    b1_ref  : [1, 128]    f32   conv1 bias tiled over pooled columns (+8 zero pads).
    m2_ref  : [5, 128, 256] bf16 conv2 banded weights per ky; row = x*10 + c (pad->128),
                                col = par*128 + px*20 + o (cols 80..127 per half zero).
    b2_ref  : [1, 128]    f32
    g1_ref  : [4, 128, 50] bf16 fc1 weights per pooled-row block r; row = px*20 + o.
    bf1_ref : [1, 50]     f32
    g2_ref  : [50, 128]   bf16  fc2 weights, output-padded to 128 lanes (cols 10.. zero).
    bf2_ref : [1, 128]    f32   fc2 bias; pad lanes = -1e9 so log_softmax ignores them.
    o_ref   : [TB, 128]   f32   log-probabilities in lanes 0..9.
    """
    f32 = jnp.float32
    bf16 = jnp.bfloat16
    tb = o_ref.shape[0]

    # ---- conv1 (4 fused-K matmuls) + 2x2 max-pool + bias + ReLU ------------------
    def conv1_cand(m):                        # conv rows y = 4s + m, whole batch tile
        z = jnp.dot(win_ref[m, 0], m1_ref[...],
                    preferred_element_type=f32)                       # [6*tb, 256]
        return jnp.maximum(z[:, :128], z[:, 128:])                    # pool over col parity

    a1e = jnp.maximum(jnp.maximum(conv1_cand(0), conv1_cand(1)) + b1_ref[...], 0.0)
    a1o = jnp.maximum(jnp.maximum(conv1_cand(2), conv1_cand(3)) + b1_ref[...], 0.0)
    a1e = a1e.astype(bf16)                    # pooled rows 2s,   [6*tb, 128]
    a1o = a1o.astype(bf16)                    # pooled rows 2s+1, [6*tb, 128]

    # ---- conv2 + 2x2 max-pool + bias + ReLU (dropout2d == identity) --------------
    def conv2_cand(a):                        # conv2 rows y2 = 2r + a
        acc = None
        for ky in range(5):
            m = a + ky                        # a1 pooled row = 2r + m
            src = a1e if m % 2 == 0 else a1o
            lhs = src[(m // 2) * tb:(m // 2 + 4) * tb, :]             # [4*tb, 128]
            d = jnp.dot(lhs, m2_ref[ky], preferred_element_type=f32)  # [4*tb, 256]
            acc = d if acc is None else acc + d
        return jnp.maximum(acc[:, :128], acc[:, 128:])                # pool over col parity

    a2 = jnp.maximum(jnp.maximum(conv2_cand(0), conv2_cand(1)) + b2_ref[...], 0.0)
    a2 = a2.astype(bf16)                      # [4*tb, 128], rows r*tb + t

    # ---- fc1 (sum over pooled-row blocks -- no lane concat) + ReLU ---------------
    h = None
    for r in range(4):
        part = jnp.dot(a2[r * tb:(r + 1) * tb, :], g1_ref[r],
                       preferred_element_type=f32)                    # [tb, 50]
        h = part if h is None else h + part
    h = jnp.maximum(h + bf1_ref[...], 0.0).astype(bf16)
    # (dropout == identity in inference)

    # ---- fc2 (128-lane padded output) + log_softmax ------------------------------
    logits = jnp.dot(h, g2_ref[...], preferred_element_type=f32) + bf2_ref[...]
    mx = jnp.max(logits, axis=-1, keepdims=True)
    lse = jnp.log(jnp.sum(jnp.exp(logits - mx), axis=-1, keepdims=True))
    o_ref[...] = logits - mx - lse


# ----------------------------------------------------------------------------
# Trace-time weight / input preprocessing (pure layout work on tiny tensors)
# ----------------------------------------------------------------------------
def _conv1_band(w1):
    # w1: [10, 1, 5, 5] -> [5, 28, 240] f32; row = x_in, col = b*120 + px*10 + o,
    # nonzero where x_in == 2*px + b + kx, value = w1[o, 0, ky, kx].
    t = np.zeros((5, 28, 2, 12), np.float32)
    for kx in range(5):
        for b in range(2):
            for px in range(12):
                t[kx, 2 * px + b + kx, b, px] = 1.0
    t = jnp.asarray(t)
    mats = [jnp.einsum("kibx,ok->ibxo", t, w1[:, 0, ky, :]).reshape(28, 240)
            for ky in range(5)]
    return jnp.stack(mats, axis=0)


def _conv2_band(w2):
    # w2: [20, 10, 5, 5] -> [5, 120, 160] f32; row = x_in*10 + c, col = b*80 + px*20 + o,
    # nonzero where x_in == 2*px + b + kx, value = w2[o, c, ky, kx].
    t = np.zeros((5, 12, 2, 4), np.float32)
    for kx in range(5):
        for b in range(2):
            for px in range(4):
                t[kx, 2 * px + b + kx, b, px] = 1.0
    t = jnp.asarray(t)
    mats = [jnp.einsum("kibx,ock->icbxo", t, w2[:, :, ky, :]).reshape(120, 160)
            for ky in range(5)]
    return jnp.stack(mats, axis=0)


def _prep_windows(x, tb):
    """[B,1,28,28] f32 -> ([4, nT, 6*tb, 140] bf16, nT, B_pad).

    window[m, i, s*tb + t, ky*28 + col] = x[i*tb + t, 0, 4*s + m + ky, col]
    i.e. the fused-K (K = 5 rows * 28 cols = 140) conv1 LHS, grouped by
    (conv-row mod 4) = m so pooling parities are plain leading-axis indices
    and each grid step's slab is one contiguous [6*tb, 140] block.
    """
    B = x.shape[0]
    nT = -(-B // tb)
    B_pad = nT * tb
    xs = x.reshape(B, 28, 28)
    if B_pad != B:
        xs = jnp.pad(xs, ((0, B_pad - B), (0, 0), (0, 0)))
    w = jnp.stack([xs[:, r:r + 5, :].reshape(B_pad, 140) for r in range(24)],
                  axis=0)                                   # [24, B_pad, 140], r = 4s+m
    w = w.reshape(6, 4, nT, tb, 140).transpose(1, 2, 0, 3, 4)   # [m, i, s, t, :]
    return w.reshape(4, nT, 6 * tb, 140).astype(jnp.bfloat16), nT, B_pad


# ----------------------------------------------------------------------------
# Forward pass (single fused, batch-tiled pallas_call)
# ----------------------------------------------------------------------------
@jax.jit
def net_forward(x, params):
    w1, b1, w2, b2, wf1, bfc1, wf2, bfc2 = params
    B = x.shape[0]
    assert x.shape[1:] == (1, 28, 28)
    tb = TILE_B
    bf16 = jnp.bfloat16

    win, nT, B_pad = _prep_windows(x, tb)

    # conv1 banded weights: ky fused into 140 rows, columns padded per parity to 128.
    m1 = _conv1_band(w1)                                           # [5, 28, 240]
    m1 = jnp.pad(m1.reshape(5, 28, 2, 120), ((0, 0), (0, 0), (0, 0), (0, 8)))
    m1 = m1.reshape(140, 256).astype(bf16)
    b1p = jnp.pad(jnp.tile(b1, 12), (0, 8)).reshape(1, 128)

    # conv2 banded weights: rows padded 120->128, columns padded per parity to 128.
    m2 = _conv2_band(w2)                                           # [5, 120, 160]
    m2 = jnp.pad(m2.reshape(5, 120, 2, 80), ((0, 0), (0, 8), (0, 0), (0, 48)))
    m2 = m2.reshape(5, 128, 256).astype(bf16)
    b2p = jnp.pad(jnp.tile(b2, 4), (0, 48)).reshape(1, 128)

    # fc1 weights permuted from PyTorch's (c, y, x) flatten to (y)-blocks of (x, c),
    # rows padded 80->128 to match a2's lane layout; fc2 output-padded to 128 lanes.
    g1 = jnp.transpose(wf1.reshape(50, 20, 4, 4), (2, 3, 1, 0)).reshape(4, 80, 50)
    g1 = jnp.pad(g1, ((0, 0), (0, 48), (0, 0))).astype(bf16)       # [4, 128, 50]
    bf1p = bfc1.reshape(1, 50)
    g2 = jnp.zeros((50, 128), jnp.float32).at[:, :10].set(wf2.T).astype(bf16)
    bf2p = jnp.full((1, 128), -1e9, jnp.float32).at[0, :10].set(bfc2)

    out = pl.pallas_call(
        fused_net_kernel,
        out_shape=jax.ShapeDtypeStruct((B_pad, 128), jnp.float32),
        grid=(nT,),
        in_specs=[
            # If input DMA is ever exposed, add pipeline_mode=pl.Buffered(3) here.
            pl.BlockSpec((4, 1, 6 * tb, 140), lambda i: (0, i, 0, 0)),
            pl.BlockSpec((140, 256), lambda i: (0, 0)),
            pl.BlockSpec((1, 128), lambda i: (0, 0)),
            pl.BlockSpec((5, 128, 256), lambda i: (0, 0, 0)),
            pl.BlockSpec((1, 128), lambda i: (0, 0)),
            pl.BlockSpec((4, 128, 50), lambda i: (0, 0, 0)),
            pl.BlockSpec((1, 50), lambda i: (0, 0)),
            pl.BlockSpec((50, 128), lambda i: (0, 0)),
            pl.BlockSpec((1, 128), lambda i: (0, 0)),
        ],
        out_specs=pl.BlockSpec((tb, 128), lambda i: (i, 0)),
        compiler_params=pltpu.CompilerParams(
            dimension_semantics=("parallel",)),
    )(win, m1, b1p, m2, b2p, g1, bf1p, g2, bf2p)
    return out[:B, :10]


# ----------------------------------------------------------------------------
# Pure-JAX references
# ----------------------------------------------------------------------------
def ref_forward(x, params, *, matmul_dtype=jnp.float32, precision=None):
    w1, b1, w2, b2, wf1, bfc1, wf2, bfc2 = params
    md = matmul_dtype

    def conv(a, w):
        dn = lax.conv_dimension_numbers(a.shape, w.shape, ("NCHW", "OIHW", "NCHW"))
        return lax.conv_general_dilated(
            a.astype(md), w.astype(md), (1, 1), "VALID", dimension_numbers=dn,
            precision=precision, preferred_element_type=jnp.float32)

    def pool(a):
        return lax.reduce_window(a, -jnp.inf, lax.max,
                                 (1, 1, 2, 2), (1, 1, 2, 2), "VALID")

    def dense(a, w):
        return jnp.dot(a.astype(md), w.T.astype(md), precision=precision,
                       preferred_element_type=jnp.float32)

    a1 = jnp.maximum(pool(conv(x, w1) + b1[None, :, None, None]), 0.0)
    a2 = jnp.maximum(pool(conv(a1, w2) + b2[None, :, None, None]), 0.0)
    a2 = a2.reshape(x.shape[0], 320)
    h = jnp.maximum(dense(a2, wf1) + bfc1, 0.0)
    logits = dense(h, wf2) + bfc2
    return jax.nn.log_softmax(logits, axis=1)


# ----------------------------------------------------------------------------
# Main
# ----------------------------------------------------------------------------
if __name__ == "__main__":
    key = jax.random.PRNGKey(0)
    ks = jax.random.split(key, 10)

    def uinit(k, shape, fan_in):
        bound = 1.0 / math.sqrt(fan_in)
        return jax.random.uniform(k, shape, jnp.float32, -bound, bound)

    # Parameter shapes exactly as in Net.__init__ (PyTorch conventions).
    w_conv1 = uinit(ks[0], (10, 1, 5, 5), 25)
    b_conv1 = uinit(ks[1], (10,), 25)
    w_conv2 = uinit(ks[2], (20, 10, 5, 5), 250)
    b_conv2 = uinit(ks[3], (20,), 250)
    w_fc1 = uinit(ks[4], (50, 320), 320)
    b_fc1 = uinit(ks[5], (50,), 320)
    w_fc2 = uinit(ks[6], (10, 50), 50)
    b_fc2 = uinit(ks[7], (10,), 50)
    params = (w_conv1, b_conv1, w_conv2, b_conv2, w_fc1, b_fc1, w_fc2, b_fc2)

    # Primary check: batch=2 (padded into one TILE_B-sized grid step).
    x = jax.random.normal(ks[8], (2, 1, 28, 28), jnp.float32)
    out = jax.block_until_ready(net_forward(x, params))
    assert out.shape == (2, 10), out.shape

    # Check 1: reference with identical matmul quantization (bf16 operands, f32
    # accumulation) -- verifies the fused kernel's math / layout plumbing.
    ref_bf16 = jax.block_until_ready(ref_forward(x, params, matmul_dtype=jnp.bfloat16))
    err_m = float(jnp.max(jnp.abs(out - ref_bf16)))
    assert jnp.allclose(out, ref_bf16, atol=5e-3, rtol=5e-3), \
        f"mismatch vs bf16-matched reference, max abs err {err_m}"

    # Check 2: full-f32 (HIGHEST precision) reference -- bounds bf16 MXU drift.
    ref_f32 = jax.block_until_ready(
        ref_forward(x, params, matmul_dtype=jnp.float32,
                    precision=lax.Precision.HIGHEST))
    err_f = float(jnp.max(jnp.abs(out - ref_f32)))
    assert jnp.allclose(out, ref_f32, atol=5e-2, rtol=5e-2), \
        f"drift vs f32 reference too large, max abs err {err_f}"

    # Check 3: batch not a multiple of TILE_B, exercising multiple grid steps + padding.
    x2 = jax.random.normal(ks[9], (40, 1, 28, 28), jnp.float32)
    out2 = jax.block_until_ready(net_forward(x2, params))
    ref2 = jax.block_until_ready(ref_forward(x2, params, matmul_dtype=jnp.bfloat16))
    err2 = float(jnp.max(jnp.abs(out2 - ref2)))
    assert out2.shape == (40, 10) and jnp.allclose(out2, ref2, atol=5e-3, rtol=5e-3), \
        f"batched-grid mismatch, max abs err {err2}"

    print("KERNEL_OK")
</pallas_src>

<mosaic_0001>
module attributes {stable_mosaic.version = 11 : i64} {
  func.func @fused_net_kernel(%arg0: i32, %arg1: memref<4x1x192x140xbf16, #tpu.memory_space<vmem>>, %arg2: memref<140x256xbf16, #tpu.memory_space<vmem>>, %arg3: memref<1x128xf32, #tpu.memory_space<vmem>>, %arg4: memref<5x128x256xbf16, #tpu.memory_space<vmem>>, %arg5: memref<1x128xf32, #tpu.memory_space<vmem>>, %arg6: memref<4x128x50xbf16, #tpu.memory_space<vmem>>, %arg7: memref<1x50xf32, #tpu.memory_space<vmem>>, %arg8: memref<50x128xbf16, #tpu.memory_space<vmem>>, %arg9: memref<1x128xf32, #tpu.memory_space<vmem>>, %arg10: memref<32x128xf32, #tpu.memory_space<vmem>>) attributes {dimension_semantics = [#tpu.dimension_semantics<parallel>], iteration_bounds = array<i64: 1>, scalar_prefetch = 0 : i64, scratch_operands = 0 : i64, tpu.core_type = #tpu.core_type<tc>, window_params = [{transform_indices = @transform_0, window_bounds = array<i64: 4, 1, 192, 140>}, {pipeline_mode = #tpu.pipeline_mode<synchronous>, transform_indices = @transform_1, window_bounds = array<i64: 140, 256>}, {pipeline_mode = #tpu.pipeline_mode<synchronous>, transform_indices = @transform_2, window_bounds = array<i64: 1, 128>}, {pipeline_mode = #tpu.pipeline_mode<synchronous>, transform_indices = @transform_3, window_bounds = array<i64: 5, 128, 256>}, {pipeline_mode = #tpu.pipeline_mode<synchronous>, transform_indices = @transform_4, window_bounds = array<i64: 1, 128>}, {pipeline_mode = #tpu.pipeline_mode<synchronous>, transform_indices = @transform_5, window_bounds = array<i64: 4, 128, 50>}, {pipeline_mode = #tpu.pipeline_mode<synchronous>, transform_indices = @transform_6, window_bounds = array<i64: 1, 50>}, {pipeline_mode = #tpu.pipeline_mode<synchronous>, transform_indices = @transform_7, window_bounds = array<i64: 50, 128>}, {pipeline_mode = #tpu.pipeline_mode<synchronous>, transform_indices = @transform_8, window_bounds = array<i64: 1, 128>}, {transform_indices = @transform_9, window_bounds = array<i64: 32, 128>}]} {
    %c0 = arith.constant 0 : index
    %c0_0 = arith.constant 0 : index
    %c0_1 = arith.constant 0 : index
    %c0_2 = arith.constant 0 : index
    %0 = vector.load %arg1[%c0, %c0_0, %c0_1, %c0_2] : memref<4x1x192x140xbf16, #tpu.memory_space<vmem>>, vector<1x1x192x140xbf16>
    %1 = vector.shape_cast %0 : vector<1x1x192x140xbf16> to vector<192x140xbf16>
    %c0_3 = arith.constant 0 : index
    %c0_4 = arith.constant 0 : index
    %2 = vector.load %arg2[%c0_3, %c0_4] : memref<140x256xbf16, #tpu.memory_space<vmem>>, vector<140x256xbf16>
    %cst = arith.constant dense<0.000000e+00> : vector<192x256xf32>
    %3 = tpu.matmul %1, %2, %cst {dimension_numbers = #tpu.dot_dimension_numbers<[1], [0], [0], [1], [0, 0, 1, 1], [], []>} : vector<192x140xbf16>, vector<140x256xbf16>, vector<192x256xf32> -> vector<192x256xf32>
    %4 = vector.extract_strided_slice %3 {offsets = [0, 0], sizes = [192, 128], strides = [1, 1]} : vector<192x256xf32> to vector<192x128xf32>
    %5 = vector.extract_strided_slice %3 {offsets = [0, 128], sizes = [192, 128], strides = [1, 1]} : vector<192x256xf32> to vector<192x128xf32>
    %6 = arith.maximumf %4, %5 : vector<192x128xf32>
    %c1 = arith.constant 1 : index
    %c0_5 = arith.constant 0 : index
    %c0_6 = arith.constant 0 : index
    %c0_7 = arith.constant 0 : index
    %7 = vector.load %arg1[%c1, %c0_5, %c0_6, %c0_7] : memref<4x1x192x140xbf16, #tpu.memory_space<vmem>>, vector<1x1x192x140xbf16>
    %8 = vector.shape_cast %7 : vector<1x1x192x140xbf16> to vector<192x140xbf16>
    %c0_8 = arith.constant 0 : index
    %c0_9 = arith.constant 0 : index
    %9 = vector.load %arg2[%c0_8, %c0_9] : memref<140x256xbf16, #tpu.memory_space<vmem>>, vector<140x256xbf16>
    %cst_10 = arith.constant dense<0.000000e+00> : vector<192x256xf32>
    %10 = tpu.matmul %8, %9, %cst_10 {dimension_numbers = #tpu.dot_dimension_numbers<[1], [0], [0], [1], [0, 0, 1, 1], [], []>} : vector<192x140xbf16>, vector<140x256xbf16>, vector<192x256xf32> -> vector<192x256xf32>
    %11 = vector.extract_strided_slice %10 {offsets = [0, 0], sizes = [192, 128], strides = [1, 1]} : vector<192x256xf32> to vector<192x128xf32>
    %12 = vector.extract_strided_slice %10 {offsets = [0, 128], sizes = [192, 128], strides = [1, 1]} : vector<192x256xf32> to vector<192x128xf32>
    %13 = arith.maximumf %11, %12 : vector<192x128xf32>
    %14 = arith.maximumf %6, %13 : vector<192x128xf32>
    %c0_11 = arith.constant 0 : index
    %c0_12 = arith.constant 0 : index
    %15 = vector.load %arg3[%c0_11, %c0_12] : memref<1x128xf32, #tpu.memory_space<vmem>>, vector<1x128xf32>
    %16 = vector.broadcast %15 : vector<1x128xf32> to vector<192x128xf32>
    %17 = arith.addf %14, %16 : vector<192x128xf32>
    %cst_13 = arith.constant 0.000000e+00 : f32
    %18 = vector.broadcast %cst_13 : f32 to vector<192x128xf32>
    %19 = arith.maximumf %17, %18 : vector<192x128xf32>
    %c2 = arith.constant 2 : index
    %c0_14 = arith.constant 0 : index
    %c0_15 = arith.constant 0 : index
    %c0_16 = arith.constant 0 : index
    %20 = vector.load %arg1[%c2, %c0_14, %c0_15, %c0_16] : memref<4x1x192x140xbf16, #tpu.memory_space<vmem>>, vector<1x1x192x140xbf16>
    %21 = vector.shape_cast %20 : vector<1x1x192x140xbf16> to vector<192x140xbf16>
    %c0_17 = arith.constant 0 : index
    %c0_18 = arith.constant 0 : index
    %22 = vector.load %arg2[%c0_17, %c0_18] : memref<140x256xbf16, #tpu.memory_space<vmem>>, vector<140x256xbf16>
    %cst_19 = arith.constant dense<0.000000e+00> : vector<192x256xf32>
    %23 = tpu.matmul %21, %22, %cst_19 {dimension_numbers = #tpu.dot_dimension_numbers<[1], [0], [0], [1], [0, 0, 1, 1], [], []>} : vector<192x140xbf16>, vector<140x256xbf16>, vector<192x256xf32> -> vector<192x256xf32>
    %24 = vector.extract_strided_slice %23 {offsets = [0, 0], sizes = [192, 128], strides = [1, 1]} : vector<192x256xf32> to vector<192x128xf32>
    %25 = vector.extract_strided_slice %23 {offsets = [0, 128], sizes = [192, 128], strides = [1, 1]} : vector<192x256xf32> to vector<192x128xf32>
    %26 = arith.maximumf %24, %25 : vector<192x128xf32>
    %c3 = arith.constant 3 : index
    %c0_20 = arith.constant 0 : index
    %c0_21 = arith.constant 0 : index
    %c0_22 = arith.constant 0 : index
    %27 = vector.load %arg1[%c3, %c0_20, %c0_21, %c0_22] : memref<4x1x192x140xbf16, #tpu.memory_space<vmem>>, vector<1x1x192x140xbf16>
    %28 = vector.shape_cast %27 : vector<1x1x192x140xbf16> to vector<192x140xbf16>
    %c0_23 = arith.constant 0 : index
    %c0_24 = arith.constant 0 : index
    %29 = vector.load %arg2[%c0_23, %c0_24] : memref<140x256xbf16, #tpu.memory_space<vmem>>, vector<140x256xbf16>
    %cst_25 = arith.constant dense<0.000000e+00> : vector<192x256xf32>
    %30 = tpu.matmul %28, %29, %cst_25 {dimension_numbers = #tpu.dot_dimension_numbers<[1], [0], [0], [1], [0, 0, 1, 1], [], []>} : vector<192x140xbf16>, vector<140x256xbf16>, vector<192x256xf32> -> vector<192x256xf32>
    %31 = vector.extract_strided_slice %30 {offsets = [0, 0], sizes = [192, 128], strides = [1, 1]} : vector<192x256xf32> to vector<192x128xf32>
    %32 = vector.extract_strided_slice %30 {offsets = [0, 128], sizes = [192, 128], strides = [1, 1]} : vector<192x256xf32> to vector<192x128xf32>
    %33 = arith.maximumf %31, %32 : vector<192x128xf32>
    %34 = arith.maximumf %26, %33 : vector<192x128xf32>
    %c0_26 = arith.constant 0 : index
    %c0_27 = arith.constant 0 : index
    %35 = vector.load %arg3[%c0_26, %c0_27] : memref<1x128xf32, #tpu.memory_space<vmem>>, vector<1x128xf32>
    %36 = vector.broadcast %35 : vector<1x128xf32> to vector<192x128xf32>
    %37 = arith.addf %34, %36 : vector<192x128xf32>
    %cst_28 = arith.constant 0.000000e+00 : f32
    %38 = vector.broadcast %cst_28 : f32 to vector<192x128xf32>
    %39 = arith.maximumf %37, %38 : vector<192x128xf32>
    %40 = arith.truncf %19 : vector<192x128xf32> to vector<192x128xbf16>
    %41 = arith.truncf %39 : vector<192x128xf32> to vector<192x128xbf16>
    %42 = vector.extract_strided_slice %40 {offsets = [0, 0], sizes = [128, 128], strides = [1, 1]} : vector<192x128xbf16> to vector<128x128xbf16>
    %c0_29 = arith.constant 0 : index
    %c0_30 = arith.constant 0 : index
    %c0_31 = arith.constant 0 : index
    %43 = vector.load %arg4[%c0_29, %c0_30, %c0_31] : memref<5x128x256xbf16, #tpu.memory_space<vmem>>, vector<1x128x256xbf16>
    %44 = vector.shape_cast %43 : vector<1x128x256xbf16> to vector<128x256xbf16>
    %cst_32 = arith.constant dense<0.000000e+00> : vector<128x256xf32>
    %45 = tpu.matmul %42, %44, %cst_32 {dimension_numbers = #tpu.dot_dimension_numbers<[1], [0], [0], [1], [0, 0, 1, 1], [], []>} : vector<128x128xbf16>, vector<128x256xbf16>, vector<128x256xf32> -> vector<128x256xf32>
    %46 = vector.extract_strided_slice %41 {offsets = [0, 0], sizes = [128, 128], strides = [1, 1]} : vector<192x128xbf16> to vector<128x128xbf16>
    %c1_33 = arith.constant 1 : index
    %c0_34 = arith.constant 0 : index
    %c0_35 = arith.constant 0 : index
    %47 = vector.load %arg4[%c1_33, %c0_34, %c0_35] : memref<5x128x256xbf16, #tpu.memory_space<vmem>>, vector<1x128x256xbf16>
    %48 = vector.shape_cast %47 : vector<1x128x256xbf16> to vector<128x256xbf16>
    %cst_36 = arith.constant dense<0.000000e+00> : vector<128x256xf32>
    %49 = tpu.matmul %46, %48, %cst_36 {dimension_numbers = #tpu.dot_dimension_numbers<[1], [0], [0], [1], [0, 0, 1, 1], [], []>} : vector<128x128xbf16>, vector<128x256xbf16>, vector<128x256xf32> -> vector<128x256xf32>
    %50 = arith.addf %45, %49 : vector<128x256xf32>
    %51 = vector.extract_strided_slice %40 {offsets = [32, 0], sizes = [128, 128], strides = [1, 1]} : vector<192x128xbf16> to vector<128x128xbf16>
    %c2_37 = arith.constant 2 : index
    %c0_38 = arith.constant 0 : index
    %c0_39 = arith.constant 0 : index
    %52 = vector.load %arg4[%c2_37, %c0_38, %c0_39] : memref<5x128x256xbf16, #tpu.memory_space<vmem>>, vector<1x128x256xbf16>
    %53 = vector.shape_cast %52 : vector<1x128x256xbf16> to vector<128x256xbf16>
    %cst_40 = arith.constant dense<0.000000e+00> : vector<128x256xf32>
    %54 = tpu.matmul %51, %53, %cst_40 {dimension_numbers = #tpu.dot_dimension_numbers<[1], [0], [0], [1], [0, 0, 1, 1], [], []>} : vector<128x128xbf16>, vector<128x256xbf16>, vector<128x256xf32> -> vector<128x256xf32>
    %55 = arith.addf %50, %54 : vector<128x256xf32>
    %56 = vector.extract_strided_slice %41 {offsets = [32, 0], sizes = [128, 128], strides = [1, 1]} : vector<192x128xbf16> to vector<128x128xbf16>
    %c3_41 = arith.constant 3 : index
    %c0_42 = arith.constant 0 : index
    %c0_43 = arith.constant 0 : index
    %57 = vector.load %arg4[%c3_41, %c0_42, %c0_43] : memref<5x128x256xbf16, #tpu.memory_space<vmem>>, vector<1x128x256xbf16>
    %58 = vector.shape_cast %57 : vector<1x128x256xbf16> to vector<128x256xbf16>
    %cst_44 = arith.constant dense<0.000000e+00> : vector<128x256xf32>
    %59 = tpu.matmul %56, %58, %cst_44 {dimension_numbers = #tpu.dot_dimension_numbers<[1], [0], [0], [1], [0, 0, 1, 1], [], []>} : vector<128x128xbf16>, vector<128x256xbf16>, vector<128x256xf32> -> vector<128x256xf32>
    %60 = arith.addf %55, %59 : vector<128x256xf32>
    %61 = vector.extract_strided_slice %40 {offsets = [64, 0], sizes = [128, 128], strides = [1, 1]} : vector<192x128xbf16> to vector<128x128xbf16>
    %c4 = arith.constant 4 : index
    %c0_45 = arith.constant 0 : index
    %c0_46 = arith.constant 0 : index
    %62 = vector.load %arg4[%c4, %c0_45, %c0_46] : memref<5x128x256xbf16, #tpu.memory_space<vmem>>, vector<1x128x256xbf16>
    %63 = vector.shape_cast %62 : vector<1x128x256xbf16> to vector<128x256xbf16>
    %cst_47 = arith.constant dense<0.000000e+00> : vector<128x256xf32>
    %64 = tpu.matmul %61, %63, %cst_47 {dimension_numbers = #tpu.dot_dimension_numbers<[1], [0], [0], [1], [0, 0, 1, 1], [], []>} : vector<128x128xbf16>, vector<128x256xbf16>, vector<128x256xf32> -> vector<128x256xf32>
    %65 = arith.addf %60, %64 : vector<128x256xf32>
    %66 = vector.extract_strided_slice %65 {offsets = [0, 0], sizes = [128, 128], strides = [1, 1]} : vector<128x256xf32> to vector<128x128xf32>
    %67 = vector.extract_strided_slice %65 {offsets = [0, 128], sizes = [128, 128], strides = [1, 1]} : vector<128x256xf32> to vector<128x128xf32>
    %68 = arith.maximumf %66, %67 : vector<128x128xf32>
    %69 = vector.extract_strided_slice %41 {offsets = [0, 0], sizes = [128, 128], strides = [1, 1]} : vector<192x128xbf16> to vector<128x128xbf16>
    %c0_48 = arith.constant 0 : index
    %c0_49 = arith.constant 0 : index
    %c0_50 = arith.constant 0 : index
    %70 = vector.load %arg4[%c0_48, %c0_49, %c0_50] : memref<5x128x256xbf16, #tpu.memory_space<vmem>>, vector<1x128x256xbf16>
    %71 = vector.shape_cast %70 : vector<1x128x256xbf16> to vector<128x256xbf16>
    %cst_51 = arith.constant dense<0.000000e+00> : vector<128x256xf32>
    %72 = tpu.matmul %69, %71, %cst_51 {dimension_numbers = #tpu.dot_dimension_numbers<[1], [0], [0], [1], [0, 0, 1, 1], [], []>} : vector<128x128xbf16>, vector<128x256xbf16>, vector<128x256xf32> -> vector<128x256xf32>
    %73 = vector.extract_strided_slice %40 {offsets = [32, 0], sizes = [128, 128], strides = [1, 1]} : vector<192x128xbf16> to vector<128x128xbf16>
    %c1_52 = arith.constant 1 : index
    %c0_53 = arith.constant 0 : index
    %c0_54 = arith.constant 0 : index
    %74 = vector.load %arg4[%c1_52, %c0_53, %c0_54] : memref<5x128x256xbf16, #tpu.memory_space<vmem>>, vector<1x128x256xbf16>
    %75 = vector.shape_cast %74 : vector<1x128x256xbf16> to vector<128x256xbf16>
    %cst_55 = arith.constant dense<0.000000e+00> : vector<128x256xf32>
    %76 = tpu.matmul %73, %75, %cst_55 {dimension_numbers = #tpu.dot_dimension_numbers<[1], [0], [0], [1], [0, 0, 1, 1], [], []>} : vector<128x128xbf16>, vector<128x256xbf16>, vector<128x256xf32> -> vector<128x256xf32>
    %77 = arith.addf %72, %76 : vector<128x256xf32>
    %78 = vector.extract_strided_slice %41 {offsets = [32, 0], sizes = [128, 128], strides = [1, 1]} : vector<192x128xbf16> to vector<128x128xbf16>
    %c2_56 = arith.constant 2 : index
    %c0_57 = arith.constant 0 : index
    %c0_58 = arith.constant 0 : index
    %79 = vector.load %arg4[%c2_56, %c0_57, %c0_58] : memref<5x128x256xbf16, #tpu.memory_space<vmem>>, vector<1x128x256xbf16>
    %80 = vector.shape_cast %79 : vector<1x128x256xbf16> to vector<128x256xbf16>
    %cst_59 = arith.constant dense<0.000000e+00> : vector<128x256xf32>
    %81 = tpu.matmul %78, %80, %cst_59 {dimension_numbers = #tpu.dot_dimension_numbers<[1], [0], [0], [1], [0, 0, 1, 1], [], []>} : vector<128x128xbf16>, vector<128x256xbf16>, vector<128x256xf32> -> vector<128x256xf32>
    %82 = arith.addf %77, %81 : vector<128x256xf32>
    %83 = vector.extract_strided_slice %40 {offsets = [64, 0], sizes = [128, 128], strides = [1, 1]} : vector<192x128xbf16> to vector<128x128xbf16>
    %c3_60 = arith.constant 3 : index
    %c0_61 = arith.constant 0 : index
    %c0_62 = arith.constant 0 : index
    %84 = vector.load %arg4[%c3_60, %c0_61, %c0_62] : memref<5x128x256xbf16, #tpu.memory_space<vmem>>, vector<1x128x256xbf16>
    %85 = vector.shape_cast %84 : vector<1x128x256xbf16> to vector<128x256xbf16>
    %cst_63 = arith.constant dense<0.000000e+00> : vector<128x256xf32>
    %86 = tpu.matmul %83, %85, %cst_63 {dimension_numbers = #tpu.dot_dimension_numbers<[1], [0], [0], [1], [0, 0, 1, 1], [], []>} : vector<128x128xbf16>, vector<128x256xbf16>, vector<128x256xf32> -> vector<128x256xf32>
    %87 = arith.addf %82, %86 : vector<128x256xf32>
    %88 = vector.extract_strided_slice %41 {offsets = [64, 0], sizes = [128, 128], strides = [1, 1]} : vector<192x128xbf16> to vector<128x128xbf16>
    %c4_64 = arith.constant 4 : index
    %c0_65 = arith.constant 0 : index
    %c0_66 = arith.constant 0 : index
    %89 = vector.load %arg4[%c4_64, %c0_65, %c0_66] : memref<5x128x256xbf16, #tpu.memory_space<vmem>>, vector<1x128x256xbf16>
    %90 = vector.shape_cast %89 : vector<1x128x256xbf16> to vector<128x256xbf16>
    %cst_67 = arith.constant dense<0.000000e+00> : vector<128x256xf32>
    %91 = tpu.matmul %88, %90, %cst_67 {dimension_numbers = #tpu.dot_dimension_numbers<[1], [0], [0], [1], [0, 0, 1, 1], [], []>} : vector<128x128xbf16>, vector<128x256xbf16>, vector<128x256xf32> -> vector<128x256xf32>
    %92 = arith.addf %87, %91 : vector<128x256xf32>
    %93 = vector.extract_strided_slice %92 {offsets = [0, 0], sizes = [128, 128], strides = [1, 1]} : vector<128x256xf32> to vector<128x128xf32>
    %94 = vector.extract_strided_slice %92 {offsets = [0, 128], sizes = [128, 128], strides = [1, 1]} : vector<128x256xf32> to vector<128x128xf32>
    %95 = arith.maximumf %93, %94 : vector<128x128xf32>
    %96 = arith.maximumf %68, %95 : vector<128x128xf32>
    %c0_68 = arith.constant 0 : index
    %c0_69 = arith.constant 0 : index
    %97 = vector.load %arg5[%c0_68, %c0_69] : memref<1x128xf32, #tpu.memory_space<vmem>>, vector<1x128xf32>
    %98 = vector.broadcast %97 : vector<1x128xf32> to vector<128x128xf32>
    %99 = arith.addf %96, %98 : vector<128x128xf32>
    %cst_70 = arith.constant 0.000000e+00 : f32
    %100 = vector.broadcast %cst_70 : f32 to vector<128x128xf32>
    %101 = arith.maximumf %99, %100 : vector<128x128xf32>
    %102 = arith.truncf %101 : vector<128x128xf32> to vector<128x128xbf16>
    %103 = vector.extract_strided_slice %102 {offsets = [0, 0], sizes = [32, 128], strides = [1, 1]} : vector<128x128xbf16> to vector<32x128xbf16>
    %c0_71 = arith.constant 0 : index
    %c0_72 = arith.constant 0 : index
    %c0_73 = arith.constant 0 : index
    %104 = vector.load %arg6[%c0_71, %c0_72, %c0_73] : memref<4x128x50xbf16, #tpu.memory_space<vmem>>, vector<1x128x50xbf16>
    %105 = vector.shape_cast %104 : vector<1x128x50xbf16> to vector<128x50xbf16>
    %cst_74 = arith.constant dense<0.000000e+00> : vector<32x50xf32>
    %106 = tpu.matmul %103, %105, %cst_74 {dimension_numbers = #tpu.dot_dimension_numbers<[1], [0], [0], [1], [0, 0, 1, 1], [], []>} : vector<32x128xbf16>, vector<128x50xbf16>, vector<32x50xf32> -> vector<32x50xf32>
    %107 = vector.extract_strided_slice %102 {offsets = [32, 0], sizes = [32, 128], strides = [1, 1]} : vector<128x128xbf16> to vector<32x128xbf16>
    %c1_75 = arith.constant 1 : index
    %c0_76 = arith.constant 0 : index
    %c0_77 = arith.constant 0 : index
    %108 = vector.load %arg6[%c1_75, %c0_76, %c0_77] : memref<4x128x50xbf16, #tpu.memory_space<vmem>>, vector<1x128x50xbf16>
    %109 = vector.shape_cast %108 : vector<1x128x50xbf16> to vector<128x50xbf16>
    %cst_78 = arith.constant dense<0.000000e+00> : vector<32x50xf32>
    %110 = tpu.matmul %107, %109, %cst_78 {dimension_numbers = #tpu.dot_dimension_numbers<[1], [0], [0], [1], [0, 0, 1, 1], [], []>} : vector<32x128xbf16>, vector<128x50xbf16>, vector<32x50xf32> -> vector<32x50xf32>
    %111 = arith.addf %106, %110 : vector<32x50xf32>
    %112 = vector.extract_strided_slice %102 {offsets = [64, 0], sizes = [32, 128], strides = [1, 1]} : vector<128x128xbf16> to vector<32x128xbf16>
    %c2_79 = arith.constant 2 : index
    %c0_80 = arith.constant 0 : index
    %c0_81 = arith.constant 0 : index
    %113 = vector.load %arg6[%c2_79, %c0_80, %c0_81] : memref<4x128x50xbf16, #tpu.memory_space<vmem>>, vector<1x128x50xbf16>
    %114 = vector.shape_cast %113 : vector<1x128x50xbf16> to vector<128x50xbf16>
    %cst_82 = arith.constant dense<0.000000e+00> : vector<32x50xf32>
    %115 = tpu.matmul %112, %114, %cst_82 {dimension_numbers = #tpu.dot_dimension_numbers<[1], [0], [0], [1], [0, 0, 1, 1], [], []>} : vector<32x128xbf16>, vector<128x50xbf16>, vector<32x50xf32> -> vector<32x50xf32>
    %116 = arith.addf %111, %115 : vector<32x50xf32>
    %117 = vector.extract_strided_slice %102 {offsets = [96, 0], sizes = [32, 128], strides = [1, 1]} : vector<128x128xbf16> to vector<32x128xbf16>
    %c3_83 = arith.constant 3 : index
    %c0_84 = arith.constant 0 : index
    %c0_85 = arith.constant 0 : index
    %118 = vector.load %arg6[%c3_83, %c0_84, %c0_85] : memref<4x128x50xbf16, #tpu.memory_space<vmem>>, vector<1x128x50xbf16>
    %119 = vector.shape_cast %118 : vector<1x128x50xbf16> to vector<128x50xbf16>
    %cst_86 = arith.constant dense<0.000000e+00> : vector<32x50xf32>
    %120 = tpu.matmul %117, %119, %cst_86 {dimension_numbers = #tpu.dot_dimension_numbers<[1], [0], [0], [1], [0, 0, 1, 1], [], []>} : vector<32x128xbf16>, vector<128x50xbf16>, vector<32x50xf32> -> vector<32x50xf32>
    %121 = arith.addf %116, %120 : vector<32x50xf32>
    %c0_87 = arith.constant 0 : index
    %c0_88 = arith.constant 0 : index
    %122 = vector.load %arg7[%c0_87, %c0_88] : memref<1x50xf32, #tpu.memory_space<vmem>>, vector<1x50xf32>
    %123 = vector.broadcast %122 : vector<1x50xf32> to vector<32x50xf32>
    %124 = arith.addf %121, %123 : vector<32x50xf32>
    %cst_89 = arith.constant 0.000000e+00 : f32
    %125 = vector.broadcast %cst_89 : f32 to vector<32x50xf32>
    %126 = arith.maximumf %124, %125 : vector<32x50xf32>
    %127 = arith.truncf %126 : vector<32x50xf32> to vector<32x50xbf16>
    %c0_90 = arith.constant 0 : index
    %c0_91 = arith.constant 0 : index
    %128 = vector.load %arg8[%c0_90, %c0_91] : memref<50x128xbf16, #tpu.memory_space<vmem>>, vector<50x128xbf16>
    %cst_92 = arith.constant dense<0.000000e+00> : vector<32x128xf32>
    %129 = tpu.matmul %127, %128, %cst_92 {dimension_numbers = #tpu.dot_dimension_numbers<[1], [0], [0], [1], [0, 0, 1, 1], [], []>} : vector<32x50xbf16>, vector<50x128xbf16>, vector<32x128xf32> -> vector<32x128xf32>
    %c0_93 = arith.constant 0 : index
    %c0_94 = arith.constant 0 : index
    %130 = vector.load %arg9[%c0_93, %c0_94] : memref<1x128xf32, #tpu.memory_space<vmem>>, vector<1x128xf32>
    %131 = vector.broadcast %130 : vector<1x128xf32> to vector<32x128xf32>
    %132 = arith.addf %129, %131 : vector<32x128xf32>
    %cst_95 = arith.constant dense<0xFF800000> : vector<32xf32>
    %133 = vector.multi_reduction <maximumf>, %132, %cst_95 [1] : vector<32x128xf32> to vector<32xf32>
    %134 = vector.shape_cast %133 : vector<32xf32> to vector<32x1xf32>
    %135 = vector.broadcast %134 : vector<32x1xf32> to vector<32x128xf32>
    %136 = arith.subf %132, %135 : vector<32x128xf32>
    %137 = math.exp %136 : vector<32x128xf32>
    %cst_96 = arith.constant dense<0.000000e+00> : vector<32xf32>
    %138 = vector.multi_reduction <add>, %137, %cst_96 [1] : vector<32x128xf32> to vector<32xf32>
    %139 = vector.shape_cast %138 : vector<32xf32> to vector<32x1xf32>
    %140 = math.log %139 : vector<32x1xf32>
    %141 = vector.broadcast %134 : vector<32x1xf32> to vector<32x128xf32>
    %142 = arith.subf %132, %141 : vector<32x128xf32>
    %143 = vector.broadcast %140 : vector<32x1xf32> to vector<32x128xf32>
    %144 = arith.subf %142, %143 : vector<32x128xf32>
    %c0_97 = arith.constant 0 : index
    %c0_98 = arith.constant 0 : index
    %145 = vector.load %arg10[%c0_97, %c0_98] : memref<32x128xf32, #tpu.memory_space<vmem>>, vector<32x128xf32>
    tpu.vector_store %arg10[%c0_97, %c0_98], %144 {strides = array<i32>} : memref<32x128xf32, #tpu.memory_space<vmem>>, vector<32x128xf32>,
    return
  }
  func.func @transform_0(%arg0: i32) -> (i32, i32, i32, i32) {
    %c0_i32 = arith.constant 0 : i32
    %c0_i32_0 = arith.constant 0 : i32
    %c0_i32_1 = arith.constant 0 : i32
    %c0_i32_2 = arith.constant 0 : i32
    return %c0_i32, %arg0, %c0_i32_0, %c0_i32_1 : i32, i32, i32, i32
  }
  func.func @transform_1(%arg0: i32) -> (i32, i32) {
    %c0_i32 = arith.constant 0 : i32
    %c0_i32_0 = arith.constant 0 : i32
    %c0_i32_1 = arith.constant 0 : i32
    return %c0_i32, %c0_i32_0 : i32, i32
  }
  func.func @transform_2(%arg0: i32) -> (i32, i32) {
    %c0_i32 = arith.constant 0 : i32
    %c0_i32_0 = arith.constant 0 : i32
    %c0_i32_1 = arith.constant 0 : i32
    return %c0_i32, %c0_i32_0 : i32, i32
  }
  func.func @transform_3(%arg0: i32) -> (i32, i32, i32) {
    %c0_i32 = arith.constant 0 : i32
    %c0_i32_0 = arith.constant 0 : i32
    %c0_i32_1 = arith.constant 0 : i32
    %c0_i32_2 = arith.constant 0 : i32
    return %c0_i32, %c0_i32_0, %c0_i32_1 : i32, i32, i32
  }
  func.func @transform_4(%arg0: i32) -> (i32, i32) {
    %c0_i32 = arith.constant 0 : i32
    %c0_i32_0 = arith.constant 0 : i32
    %c0_i32_1 = arith.constant 0 : i32
    return %c0_i32, %c0_i32_0 : i32, i32
  }
  func.func @transform_5(%arg0: i32) -> (i32, i32, i32) {
    %c0_i32 = arith.constant 0 : i32
    %c0_i32_0 = arith.constant 0 : i32
    %c0_i32_1 = arith.constant 0 : i32
    %c0_i32_2 = arith.constant 0 : i32
    return %c0_i32, %c0_i32_0, %c0_i32_1 : i32, i32, i32
  }
  func.func @transform_6(%arg0: i32) -> (i32, i32) {
    %c0_i32 = arith.constant 0 : i32
    %c0_i32_0 = arith.constant 0 : i32
    %c0_i32_1 = arith.constant 0 : i32
    return %c0_i32, %c0_i32_0 : i32, i32
  }
  func.func @transform_7(%arg0: i32) -> (i32, i32) {
    %c0_i32 = arith.constant 0 : i32
    %c0_i32_0 = arith.constant 0 : i32
    %c0_i32_1 = arith.constant 0 : i32
    return %c0_i32, %c0_i32_0 : i32, i32
  }
  func.func @transform_8(%arg0: i32) -> (i32, i32) {
    %c0_i32 = arith.constant 0 : i32
    %c0_i32_0 = arith.constant 0 : i32
    %c0_i32_1 = arith.constant 0 : i32
    return %c0_i32, %c0_i32_0 : i32, i32
  }
  func.func @transform_9(%arg0: i32) -> (i32, i32) {
    %c0_i32 = arith.constant 0 : i32
    %c0_i32_0 = arith.constant 0 : i32
    return %arg0, %c0_i32 : i32, i32
  }
}

</mosaic_0001>

<llo_original>
// kernel: tile.13
$region0: #{tile.13}
  #allocation0 [shape = 's32[1]{0}', space=sflag, size = 0x4, scoped, tag = 'scoped memory for tile.13']
  %s0 = inlined_call_operand.vmem [shape: f32[10], index: 0, kind: input, shape index: {}]
  %s1 = inlined_call_operand.vmem [shape: f32[12,10], index: 1, kind: output, shape index: {}]
  // Predicated region
  $region2: #{tile.13} parent=0 // pred_check
    _
  $region3: #{tile.13} parent=0 // pred_check_branch
    %3 = sbr.rel (0) target = $region5
  $region4: #{tile.13} parent=0 // pred_region
    _
  $region5: #{tile.13} parent=0 // pred_fallthru
    _
  %v4 = vld [vmem:[%s0] ss:$0 sm:$0xff]
  %5 = vst [vmem:[%s1] sm:$0xff] %v4
  %s6 = scalar_lea.vmem %s1, 8
  %7 = vst [vmem:[%s6] sm:$0xff] %v4

// kernel: tile.14
$region0: #{tile.14}
  %s0 = inlined_call_operand.vmem [shape: f32[12,10], index: 0, kind: input, shape index: {}]
  %s1 = inlined_call_operand.vmem [shape: f32[120], index: 1, kind: output, shape index: {}]
  $region1: #{tile.14} parent=0
    #allocation0 [shape = 'u8[4096]{0}', space=vmem, size = 0x1000, scoped, tag = 'scoped mem for output reshape']
    %v2 = vld [vmem:[%s0] sm:$0x1]
    %vm3 = vcmask 80896
    %4 = vst.msk [vmem:[#allocation0] sm:$0x1] %vm3, %v2
    %s5 = scalar_lea.vmem %s0, 11
    %v6 = vld [vmem:[%s5] sm:$0x1]
    %7 = vrot.lane.b32.xlu0 %v6, 110
    %v8 = vpop.permute.xlu0 %7
    %vm9 = vcmask 982896
    %10 = vst.msk [vmem:[#allocation0] sm:$0x1] %vm9, %v8
    %s11 = scalar_lea.vmem %s0, 10
    %v12 = vld [vmem:[%s11] sm:$0x1]
    %13 = vrot.lane.b32.xlu0 %v12, 100
    %v14 = vpop.permute.xlu0 %13
    %vm15 = vcmask 900896
    %16 = vst.msk [vmem:[#allocation0] sm:$0x1] %vm15, %v14
    %s17 = scalar_lea.vmem %s0, 9
    %v18 = vld [vmem:[%s17] sm:$0x1]
    %19 = vrot.lane.b32.xlu0 %v18, 90
    %v20 = vpop.permute.xlu0 %19
    %vm21 = vcmask 818896
    %22 = vst.msk [vmem:[#allocation0] sm:$0x1] %vm21, %v20
    %s23 = scalar_lea.vmem %s0, 8
    %v24 = vld [vmem:[%s23] sm:$0x1]
    %25 = vrot.lane.b32.xlu0 %v24, 80
    %v26 = vpop.permute.xlu0 %25
    %vm27 = vcmask 736896
    %28 = vst.msk [vmem:[#allocation0] sm:$0x1] %vm27, %v26
    %s29 = scalar_lea.vmem %s0, 7
    %v30 = vld [vmem:[%s29] sm:$0x1]
    %31 = vrot.lane.b32.xlu0 %v30, 70
    %v32 = vpop.permute.xlu0 %31
    %vm33 = vcmask 654896
    %34 = vst.msk [vmem:[#allocation0] sm:$0x1] %vm33, %v32
    %s35 = scalar_lea.vmem %s0, 6
    %v36 = vld [vmem:[%s35] sm:$0x1]
    %37 = vrot.lane.b32.xlu0 %v36, 60
    %v38 = vpop.permute.xlu0 %37
    %vm39 = vcmask 572896
    %40 = vst.msk [vmem:[#allocation0] sm:$0x1] %vm39, %v38
    %s41 = scalar_lea.vmem %s0, 5
    %v42 = vld [vmem:[%s41] sm:$0x1]
    %43 = vrot.lane.b32.xlu0 %v42, 50
    %v44 = vpop.permute.xlu0 %43
    %vm45 = vcmask 490896
    %46 = vst.msk [vmem:[#allocation0] sm:$0x1] %vm45, %v44
    %s47 = scalar_lea.vmem %s0, 4
    %v48 = vld [vmem:[%s47] sm:$0x1]
    %49 = vrot.lane.b32.xlu0 %v48, 40
    %v50 = vpop.permute.xlu0 %49
    %vm51 = vcmask 408896
    %52 = vst.msk [vmem:[#allocation0] sm:$0x1] %vm51, %v50
    %s53 = scalar_lea.vmem %s0, 3
    %v54 = vld [vmem:[%s53] sm:$0x1]
    %55 = vrot.lane.b32.xlu0 %v54, 30
    %v56 = vpop.permute.xlu0 %55
    %vm57 = vcmask 326896
    %58 = vst.msk [vmem:[#allocation0] sm:$0x1] %vm57, %v56
    %s59 = scalar_lea.vmem %s0, 2
    %v60 = vld [vmem:[%s59] sm:$0x1]
    %61 = vrot.lane.b32.xlu0 %v60, 20
    %v62 = vpop.permute.xlu0 %61
    %vm63 = vcmask 244896
    %64 = vst.msk [vmem:[#allocation0] sm:$0x1] %vm63, %v62
    %s65 = scalar_lea.vmem %s0, 1
    %v66 = vld [vmem:[%s65] sm:$0x1]
    %67 = vrot.lane.b32.xlu0 %v66, 10
    %v68 = vpop.permute.xlu0 %67
    %vm69 = vcmask 162896
    %70 = vst.msk [vmem:[#allocation0] sm:$0x1] %vm69, %v68
    %s72 = ssub.s32 2, 1
    %v73 = vld [vmem:[#allocation0] sm:%s72]
    %s75 = ssub.s32 2, 1
    %76 = vst [vmem:[%s1] sm:%s75] %v73

// kernel: tile.18
$region0: #{tile.18}
  #allocation0 [shape = 's32[1]{0}', space=sflag, size = 0x4, scoped, tag = 'scoped memory for tile.18']
  %s0 = inlined_call_operand.vmem [shape: f32[20], index: 0, kind: input, shape index: {}]
  %s1 = inlined_call_operand.vmem [shape: f32[4,20], index: 1, kind: output, shape index: {}]
  // Predicated region
  $region2: #{tile.18} parent=0 // pred_check
    _
  $region3: #{tile.18} parent=0 // pred_check_branch
    %3 = sbr.rel (0) target = $region5
  $region4: #{tile.18} parent=0 // pred_region
    _
  $region5: #{tile.18} parent=0 // pred_fallthru
    _
  %v4 = vld [vmem:[%s0] ss:$0 sm:$0xff]
  %5 = vst [vmem:[%s1] sm:$0xf] %v4

// kernel: tile.19
$region0: #{tile.19}
  %s0 = inlined_call_operand.vmem [shape: f32[4,20], index: 0, kind: input, shape index: {}]
  %s1 = inlined_call_operand.vmem [shape: f32[80], index: 1, kind: output, shape index: {}]
  $region1: #{tile.19} parent=0
    #allocation0 [shape = 'u8[4096]{0}', space=vmem, size = 0x1000, scoped, tag = 'scoped mem for output reshape']
    #allocation1 [shape = 'u8[4096]{0}', space=vmem, size = 0x1000, scoped, tag = 'scoped mem for input reshape']
    %s3 = ssub.s32 16, 1
    %v4 = vld [vmem:[%s0] sm:%s3]
    %5 = vst [vmem:[#allocation1] sm:%s3] %v4
    %v6 = vld [vmem:[#allocation1] sm:$0x1]
    %vm7 = vcmask 162816
    %8 = vst.msk [vmem:[#allocation0] sm:$0x1] %vm7, %v6
    %s9 = scalar_lea.vmem [#allocation1], 3
    %v10 = vld [vmem:[%s9] sm:$0x1]
    %11 = vrot.lane.b32.xlu0 %v10, 60
    %v12 = vpop.permute.xlu0 %11
    %vm13 = vcmask 654816
    %14 = vst.msk [vmem:[#allocation0] sm:$0x1] %vm13, %v12
    %s15 = scalar_lea.vmem [#allocation1], 2
    %v16 = vld [vmem:[%s15] sm:$0x1]
    %17 = vrot.lane.b32.xlu0 %v16, 40
    %v18 = vpop.permute.xlu0 %17
    %vm19 = vcmask 490816
    %20 = vst.msk [vmem:[#allocation0] sm:$0x1] %vm19, %v18
    %s21 = scalar_lea.vmem [#allocation1], 1
    %v22 = vld [vmem:[%s21] sm:$0x1]
    %23 = vrot.lane.b32.xlu0 %v22, 20
    %v24 = vpop.permute.xlu0 %23
    %vm25 = vcmask 326816
    %26 = vst.msk [vmem:[#allocation0] sm:$0x1] %vm25, %v24
    %s28 = ssub.s32 2, 1
    %v29 = vld [vmem:[#allocation0] sm:%s28]
    %s31 = ssub.s32 2, 1
    %32 = vst [vmem:[%s1] sm:%s31] %v29

// kernel: net_forward.1
$region0: #{net_forward.1}
  #allocation0 [shape = 'u32[]', space=smem, size = 0x4, offset = 0x4, fixed_abs, tag = 'smem constant byte address 0x4 - core index']
  #allocation1 [shape = 'u32[72,128]{1,0:T(1,128)}', space=vmem, size = 0x9000, scoped, tag = 'internal scratch']
  %s0 = inlined_call_operand.vmem [shape: bf16[4,1,192,140], index: 0, kind: input, shape index: {}]
  %s1 = inlined_call_operand.vmem [shape: bf16[140,256], index: 1, kind: input, shape index: {}]
  %s2 = inlined_call_operand.vmem [shape: f32[1,128], index: 2, kind: input, shape index: {}]
  %s3 = inlined_call_operand.vmem [shape: bf16[5,128,256], index: 3, kind: input, shape index: {}]
  %s4 = inlined_call_operand.vmem [shape: f32[1,128], index: 4, kind: input, shape index: {}]
  %s5 = inlined_call_operand.vmem [shape: bf16[4,128,50], index: 5, kind: input, shape index: {}]
  %s6 = inlined_call_operand.vmem [shape: f32[1,50], index: 6, kind: input, shape index: {}]
  %s7 = inlined_call_operand.vmem [shape: bf16[50,128], index: 7, kind: input, shape index: {}]
  %s8 = inlined_call_operand.vmem [shape: f32[1,128], index: 8, kind: input, shape index: {}]
  %s9 = inlined_call_operand.vmem [shape: f32[32,128], index: 9, kind: output, shape index: {}]
  %s10 = sld [smem:[#allocation0]]
  $region46: #{net_forward.1} parent=0
    _
  %s12 = ssub.s32 1, %s10
  %s13 = scalar_select 0, %s12, %s10
  // Predicated region
  $region2: #{net_forward.1} parent=0 // pred_check
    _
  $region3: #{net_forward.1} parent=0 // pred_check_branch
    %15 = sbr.rel (0) target = $region5
  $region4: #{net_forward.1} parent=0 // pred_region
    _
  $region5: #{net_forward.1} parent=0 // pred_fallthru
    _
  // Predicated region
  $region6: #{net_forward.1} parent=0 // pred_check
    _
  $region7: #{net_forward.1} parent=0 // pred_check_branch
    %17 = sbr.rel (0) target = $region9
  $region8: #{net_forward.1} parent=0 // pred_region
    _
  $region9: #{net_forward.1} parent=0 // pred_fallthru
    _
  // Predicated region
  $region10: #{net_forward.1} parent=0 // pred_check
    _
  $region11: #{net_forward.1} parent=0 // pred_check_branch
    %19 = sbr.rel (0) target = $region13
  $region12: #{net_forward.1} parent=0 // pred_region
    _
  $region13: #{net_forward.1} parent=0 // pred_fallthru
    _
  // Predicated region
  $region14: #{net_forward.1} parent=0 // pred_check
    _
  $region15: #{net_forward.1} parent=0 // pred_check_branch
    %21 = sbr.rel (0) target = $region17
  $region16: #{net_forward.1} parent=0 // pred_region
    _
  $region17: #{net_forward.1} parent=0 // pred_fallthru
    _
  // Predicated region
  $region18: #{net_forward.1} parent=0 // pred_check
    _
  $region19: #{net_forward.1} parent=0 // pred_check_branch
    %23 = sbr.rel (0) target = $region21
  $region20: #{net_forward.1} parent=0 // pred_region
    _
  $region21: #{net_forward.1} parent=0 // pred_fallthru
    _
  // Predicated region
  $region22: #{net_forward.1} parent=0 // pred_check
    _
  $region23: #{net_forward.1} parent=0 // pred_check_branch
    %25 = sbr.rel (0) target = $region25
  $region24: #{net_forward.1} parent=0 // pred_region
    _
  $region25: #{net_forward.1} parent=0 // pred_fallthru
    _
  // Predicated region
  $region26: #{net_forward.1} parent=0 // pred_check
    _
  $region27: #{net_forward.1} parent=0 // pred_check_branch
    %27 = sbr.rel (0) target = $region29
  $region28: #{net_forward.1} parent=0 // pred_region
    _
  $region29: #{net_forward.1} parent=0 // pred_fallthru
    _
  // Predicated region
  $region30: #{net_forward.1} parent=0 // pred_check
    _
  $region31: #{net_forward.1} parent=0 // pred_check_branch
    %29 = sbr.rel (0) target = $region33
  $region32: #{net_forward.1} parent=0 // pred_region
    _
  $region33: #{net_forward.1} parent=0 // pred_fallthru
    _
  // Predicated region
  $region34: #{net_forward.1} parent=0 // pred_check
    _
  $region35: #{net_forward.1} parent=0 // pred_check_branch
    %31 = sbr.rel (0) target = $region37
  $region36: #{net_forward.1} parent=0 // pred_region
    _
  $region37: #{net_forward.1} parent=0 // pred_fallthru
    _
  %v33 = vld [vmem:[%s0] sm:$0xff]
  %v34 = vld [vmem:[%s0 + $0x8] sm:$0xff]
  %v35 = vld [vmem:[%s0 + $0x10] sm:$0xff]
  %v36 = vld [vmem:[%s0 + $0x18] sm:$0xff]
  %v37 = vld [vmem:[%s0 + $0x20] sm:$0xff]
  %v38 = vld [vmem:[%s0 + $0x28] sm:$0xff]
  %v39 = vld [vmem:[%s0 + $0x30] sm:$0xff]
  %v40 = vld [vmem:[%s0 + $0x38] sm:$0xff]
  %v41 = vld [vmem:[%s0 + $0x40] sm:$0xff]
  %v42 = vld [vmem:[%s0 + $0x48] sm:$0xff]
  %v43 = vld [vmem:[%s0 + $0x50] sm:$0xff]
  %v44 = vld [vmem:[%s0 + $0x58] sm:$0xff]
  %v45 = vld [vmem:[%s0 + $0x60] sm:$0xff]
  %v46 = vld [vmem:[%s0 + $0x68] sm:$0xff]
  %v47 = vld [vmem:[%s0 + $0x70] sm:$0xff]
  %v48 = vld [vmem:[%s0 + $0x78] sm:$0xff]
  %v49 = vld [vmem:[%s0 + $0x80] sm:$0xff]
  %v50 = vld [vmem:[%s0 + $0x88] sm:$0xff]
  %v51 = vld [vmem:[%s0 + $0x90] sm:$0xff]
  %v52 = vld [vmem:[%s0 + $0x98] sm:$0xff]
  %v53 = vld [vmem:[%s0 + $0xa0] sm:$0xff]
  %v54 = vld [vmem:[%s0 + $0xa8] sm:$0xff]
  %v55 = vld [vmem:[%s0 + $0xb0] sm:$0xff]
  %v56 = vld [vmem:[%s0 + $0xb8] sm:$0xff]
  %v57 = vld [vmem:[%s1] sm:$0xff]
  %v58 = vld [vmem:[%s1 + $0x8] sm:$0xff]
  %v59 = vld [vmem:[%s1 + $0x10] sm:$0xff]
  %v60 = vld [vmem:[%s1 + $0x18] sm:$0xff]
  %v61 = vld [vmem:[%s1 + $0x20] sm:$0xff]
  %v62 = vld [vmem:[%s1 + $0x28] sm:$0xff]
  %v63 = vld [vmem:[%s1 + $0x30] sm:$0xff]
  %v64 = vld [vmem:[%s1 + $0x38] sm:$0xff]
  %v65 = vld [vmem:[%s1 + $0x40] sm:$0xff]
  %v66 = vld [vmem:[%s1 + $0x48] sm:$0xff]
  %v67 = vld [vmem:[%s1 + $0x50] sm:$0xff]
  %v68 = vld [vmem:[%s1 + $0x58] sm:$0xff]
  %v69 = vld [vmem:[%s1 + $0x60] sm:$0xff]
  %v70 = vld [vmem:[%s1 + $0x68] sm:$0xff]
  %v71 = vld [vmem:[%s1 + $0x70] sm:$0xff]
  %v72 = vld [vmem:[%s1 + $0x78] sm:$0xff]
  %v73 = vld [vmem:[%s1 + $0x80] sm:$0xff]
  %v74 = vld [vmem:[%s1 + $0x88] sm:$0x33]
  %v99 = vunpack.c.l.b16 %v33
  %v100 = vunpack.c.h.b16 %v33
  %v101 = vunpack.c.l.b16 %v34
  %v102 = vunpack.c.h.b16 %v34
  %v103 = vunpack.c.l.b16 %v35
  %v104 = vunpack.c.h.b16 %v35
  %v105 = vunpack.c.l.b16 %v36
  %v106 = vunpack.c.h.b16 %v36
  %v107 = vunpack.c.l.b16 %v37
  %v108 = vunpack.c.h.b16 %v37
  %v109 = vunpack.c.l.b16 %v38
  %v110 = vunpack.c.h.b16 %v38
  %v111 = vunpack.c.l.b16 %v39
  %v112 = vunpack.c.h.b16 %v39
  %v113 = vunpack.c.l.b16 %v40
  %v114 = vunpack.c.h.b16 %v40
  %v115 = vunpack.c.l.b16 %v41
  %v116 = vunpack.c.h.b16 %v41
  %v117 = vunpack.c.l.b16 %v42
  %v118 = vunpack.c.h.b16 %v42
  %v119 = vunpack.c.l.b16 %v43
  %v120 = vunpack.c.h.b16 %v43
  %v121 = vunpack.c.l.b16 %v44
  %v122 = vunpack.c.h.b16 %v44
  %v123 = vunpack.c.l.b16 %v45
  %v124 = vunpack.c.h.b16 %v45
  %v125 = vunpack.c.l.b16 %v46
  %v126 = vunpack.c.h.b16 %v46
  %v127 = vunpack.c.l.b16 %v47
  %v128 = vunpack.c.h.b16 %v47
  %v129 = vunpack.c.l.b16 %v48
  %v130 = vunpack.c.h.b16 %v48
  %v131 = vunpack.c.l.b16 %v49
  %v132 = vunpack.c.h.b16 %v49
  %v133 = vunpack.c.l.b16 %v50
  %v134 = vunpack.c.h.b16 %v50
  %v135 = vunpack.c.l.b16 %v51
  %v136 = vunpack.c.h.b16 %v51
  %v137 = vunpack.c.l.b16 %v52
  %v138 = vunpack.c.h.b16 %v52
  %v139 = vunpack.c.l.b16 %v53
  %v140 = vunpack.c.h.b16 %v53
  %v141 = vunpack.c.l.b16 %v54
  %v142 = vunpack.c.h.b16 %v54
  %v143 = vunpack.c.l.b16 %v55
  %v144 = vunpack.c.h.b16 %v55
  %v145 = vunpack.c.l.b16 %v56
  %v146 = vunpack.c.h.b16 %v56
  %v147 = vpack.c.b16 %v101, %v99
  %v148 = vpack.c.b16 %v102, %v100
  %v149 = vpack.c.b16 %v105, %v103
  %v150 = vpack.c.b16 %v106, %v104
  %v151 = vpack.c.b16 %v109, %v107
  %v152 = vpack.c.b16 %v110, %v108
  %v153 = vpack.c.b16 %v113, %v111
  %v154 = vpack.c.b16 %v114, %v112
  %v155 = vpack.c.b16 %v117, %v115
  %v156 = vpack.c.b16 %v118, %v116
  %v157 = vpack.c.b16 %v121, %v119
  %v158 = vpack.c.b16 %v122, %v120
  %v159 = vpack.c.b16 %v125, %v123
  %v160 = vpack.c.b16 %v126, %v124
  %v161 = vpack.c.b16 %v129, %v127
  %v162 = vpack.c.b16 %v130, %v128
  %v163 = vpack.c.b16 %v133, %v131
  %v164 = vpack.c.b16 %v134, %v132
  %v165 = vpack.c.b16 %v137, %v135
  %v166 = vpack.c.b16 %v138, %v136
  %v167 = vpack.c.b16 %v141, %v139
  %v168 = vpack.c.b16 %v142, %v140
  %v169 = vpack.c.b16 %v145, %v143
  %v170 = vpack.c.b16 %v146, %v144
  %v201 = vunpack.c.l.b16 %v57
  %v202 = vunpack.c.h.b16 %v57
  %v203 = vunpack.c.l.b16 %v58
  %v204 = vunpack.c.h.b16 %v58
  %v205 = vunpack.c.l.b16 %v59
  %v206 = vunpack.c.h.b16 %v59
  %v207 = vunpack.c.l.b16 %v60
  %v208 = vunpack.c.h.b16 %v60
  %v209 = vunpack.c.l.b16 %v61
  %v210 = vunpack.c.h.b16 %v61
  %v211 = vunpack.c.l.b16 %v62
  %v212 = vunpack.c.h.b16 %v62
  %v213 = vunpack.c.l.b16 %v63
  %v214 = vunpack.c.h.b16 %v63
  %v215 = vunpack.c.l.b16 %v64
  %v216 = vunpack.c.h.b16 %v64
  %v217 = vunpack.c.l.b16 %v65
  %v218 = vunpack.c.h.b16 %v65
  %v219 = vunpack.c.l.b16 %v66
  %v220 = vunpack.c.h.b16 %v66
  %v221 = vunpack.c.l.b16 %v67
  %v222 = vunpack.c.h.b16 %v67
  %v223 = vunpack.c.l.b16 %v68
  %v224 = vunpack.c.h.b16 %v68
  %v225 = vunpack.c.l.b16 %v69
  %v226 = vunpack.c.h.b16 %v69
  %v227 = vunpack.c.l.b16 %v70
  %v228 = vunpack.c.h.b16 %v70
  %v229 = vunpack.c.l.b16 %v71
  %v230 = vunpack.c.h.b16 %v71
  %v231 = vunpack.c.l.b16 %v72
  %v232 = vunpack.c.h.b16 %v72
  %v233 = vunpack.c.l.b16 %v73
  %v234 = vunpack.c.h.b16 %v73
  %v235 = vunpack.c.l.b16 %v74
  %v236 = vunpack.c.h.b16 %v74
  %v237 = vpack.c.b16 %v203, %v201
  %v238 = vpack.c.b16 %v204, %v202
  %v239 = vpack.c.b16 %v207, %v205
  %v240 = vpack.c.b16 %v208, %v206
  %v241 = vpack.c.b16 %v211, %v209
  %v242 = vpack.c.b16 %v212, %v210
  %v243 = vpack.c.b16 %v215, %v213
  %v244 = vpack.c.b16 %v216, %v214
  %v245 = vpack.c.b16 %v219, %v217
  %v246 = vpack.c.b16 %v220, %v218
  %v247 = vpack.c.b16 %v223, %v221
  %v248 = vpack.c.b16 %v224, %v222
  %v249 = vpack.c.b16 %v227, %v225
  %v250 = vpack.c.b16 %v228, %v226
  %v251 = vpack.c.b16 %v231, %v229
  %v252 = vpack.c.b16 %v232, %v230
  %v253 = vpack.c.b16 %v235, %v233
  %v254 = vpack.c.b16 %v236, %v234
  %vm271 = vcmask 97280
  %v273 = vsel %vm271, %v148, 0
  %v276 = vsel %vm271, %v150, 0
  %v279 = vsel %vm271, %v152, 0
  %v282 = vsel %vm271, %v154, 0
  %v285 = vsel %vm271, %v156, 0
  %v288 = vsel %vm271, %v158, 0
  %v291 = vsel %vm271, %v160, 0
  %v294 = vsel %vm271, %v162, 0
  %v297 = vsel %vm271, %v164, 0
  %v300 = vsel %vm271, %v166, 0
  %v303 = vsel %vm271, %v168, 0
  %v306 = vsel %vm271, %v170, 0
  %vm308 = vcmask 1045504
  %v310 = vsel %vm308, %v253, 0
  %v313 = vsel %vm308, %v254, 0
  %315 = vmatpush.bf16.msra.mxu0 %v251
  %316 = vmatpush.bf16.msra.mxu0 %v249
  %317 = vmatpush.bf16.msra.mxu0 %v247
  %318 = vmatpush.bf16.msra.mxu0 %v245
  %319 = vmatpush.bf16.msra.mxu0 %v243
  %320 = vmatpush.bf16.msra.mxu0 %v241
  %321 = vmatpush.bf16.msra.mxu0 %v239
  %322 = vmatpush.bf16.msra.mxu0 %v237
  %323 = vmatmul.bf16.gmra.mxu0 %v147
  %v324 = vpop.f32.mrf.mxu0
  %v325 = vadd.f32 0.0, %v324
  %v326 = vpop.f32.mrf.mxu0
  %v327 = vadd.f32 0.0, %v326
  %328 = vmatmul.bf16.gmra.mxu0 %v149
  %v329 = vpop.f32.mrf.mxu0
  %v330 = vadd.f32 0.0, %v329
  %v331 = vpop.f32.mrf.mxu0
  %v332 = vadd.f32 0.0, %v331
  %333 = vmatmul.bf16.gmra.mxu0 %v151
  %v334 = vpop.f32.mrf.mxu0
  %v335 = vadd.f32 0.0, %v334
  %v336 = vpop.f32.mrf.mxu0
  %v337 = vadd.f32 0.0, %v336
  %338 = vmatmul.bf16.gmra.mxu0 %v153
  %v339 = vpop.f32.mrf.mxu0
  %v340 = vadd.f32 0.0, %v339
  %v341 = vpop.f32.mrf.mxu0
  %v342 = vadd.f32 0.0, %v341
  %343 = vmatmul.bf16.gmra.mxu0 %v155
  %v344 = vpop.f32.mrf.mxu0
  %v345 = vadd.f32 0.0, %v344
  %v346 = vpop.f32.mrf.mxu0
  %v347 = vadd.f32 0.0, %v346
  %348 = vmatmul.bf16.gmra.mxu0 %v157
  %v349 = vpop.f32.mrf.mxu0
  %v350 = vadd.f32 0.0, %v349
  %v351 = vpop.f32.mrf.mxu0
  %v352 = vadd.f32 0.0, %v351
  %353 = vmatmul.bf16.gmra.mxu0 %v159
  %v354 = vpop.f32.mrf.mxu0
  %v355 = vadd.f32 0.0, %v354
  %v356 = vpop.f32.mrf.mxu0
  %v357 = vadd.f32 0.0, %v356
  %358 = vmatmul.bf16.gmra.mxu0 %v161
  %v359 = vpop.f32.mrf.mxu0
  %v360 = vadd.f32 0.0, %v359
  %v361 = vpop.f32.mrf.mxu0
  %v362 = vadd.f32 0.0, %v361
  %363 = vmatmul.bf16.gmra.mxu0 %v163
  %v364 = vpop.f32.mrf.mxu0
  %v365 = vadd.f32 0.0, %v364
  %v366 = vpop.f32.mrf.mxu0
  %v367 = vadd.f32 0.0, %v366
  %368 = vmatmul.bf16.gmra.mxu0 %v165
  %v369 = vpop.f32.mrf.mxu0
  %v370 = vadd.f32 0.0, %v369
  %v371 = vpop.f32.mrf.mxu0
  %v372 = vadd.f32 0.0, %v371
  %373 = vmatmul.bf16.gmra.mxu0 %v167
  %v374 = vpop.f32.mrf.mxu0
  %v375 = vadd.f32 0.0, %v374
  %v376 = vpop.f32.mrf.mxu0
  %v377 = vadd.f32 0.0, %v376
  %378 = vmatmul.bf16.gmra.mxu0 %v169
  %v379 = vpop.f32.mrf.mxu0
  %v380 = vadd.f32 0.0, %v379
  %v381 = vpop.f32.mrf.mxu0
  %v382 = vadd.f32 0.0, %v381
  %383 = vdwg.mxu0
  %384 = vmatpush.bf16.msra.mxu0 0
  %385 = vmatpush.bf16.msra.mxu0 0
  %386 = vmatpush.bf16.msra.mxu0 0
  %387 = vmatpush.bf16.msra.mxu0 0
  %388 = vmatpush.bf16.msra.mxu0 0
  %389 = vmatpush.bf16.msra.mxu0 0
  %390 = vmatpush.bf16.msra.mxu0 0
  %391 = vmatpush.bf16.msra.mxu0 %v310
  %392 = vmatmul.bf16.gmra.mxu0 %v273
  %v393 = vpop.f32.mrf.mxu0
  %v394 = vadd.f32 %v325, %v393
  %v395 = vpop.f32.mrf.mxu0
  %v396 = vadd.f32 %v327, %v395
  %397 = vmatmul.bf16.gmra.mxu0 %v276
  %v398 = vpop.f32.mrf.mxu0
  %v399 = vadd.f32 %v330, %v398
  %v400 = vpop.f32.mrf.mxu0
  %v401 = vadd.f32 %v332, %v400
  %402 = vmatmul.bf16.gmra.mxu0 %v279
  %v403 = vpop.f32.mrf.mxu0
  %v404 = vadd.f32 %v335, %v403
  %v405 = vpop.f32.mrf.mxu0
  %v406 = vadd.f32 %v337, %v405
  %407 = vmatmul.bf16.gmra.mxu0 %v282
  %v408 = vpop.f32.mrf.mxu0
  %v409 = vadd.f32 %v340, %v408
  %v410 = vpop.f32.mrf.mxu0
  %v411 = vadd.f32 %v342, %v410
  %412 = vmatmul.bf16.gmra.mxu0 %v285
  %v413 = vpop.f32.mrf.mxu0
  %v414 = vadd.f32 %v345, %v413
  %v415 = vpop.f32.mrf.mxu0
  %v416 = vadd.f32 %v347, %v415
  %417 = vmatmul.bf16.gmra.mxu0 %v288
  %v418 = vpop.f32.mrf.mxu0
  %v419 = vadd.f32 %v350, %v418
  %v420 = vpop.f32.mrf.mxu0
  %v421 = vadd.f32 %v352, %v420
  %422 = vmatmul.bf16.gmra.mxu0 %v291
  %v423 = vpop.f32.mrf.mxu0
  %v424 = vadd.f32 %v355, %v423
  %v425 = vpop.f32.mrf.mxu0
  %v426 = vadd.f32 %v357, %v425
  %427 = vmatmul.bf16.gmra.mxu0 %v294
  %v428 = vpop.f32.mrf.mxu0
  %v429 = vadd.f32 %v360, %v428
  %v430 = vpop.f32.mrf.mxu0
  %v431 = vadd.f32 %v362, %v430
  %432 = vmatmul.bf16.gmra.mxu0 %v297
  %v433 = vpop.f32.mrf.mxu0
  %v434 = vadd.f32 %v365, %v433
  %v435 = vpop.f32.mrf.mxu0
  %v436 = vadd.f32 %v367, %v435
  %437 = vmatmul.bf16.gmra.mxu0 %v300
  %v438 = vpop.f32.mrf.mxu0
  %v439 = vadd.f32 %v370, %v438
  %v440 = vpop.f32.mrf.mxu0
  %v441 = vadd.f32 %v372, %v440
  %442 = vmatmul.bf16.gmra.mxu0 %v303
  %v443 = vpop.f32.mrf.mxu0
  %v444 = vadd.f32 %v375, %v443
  %v445 = vpop.f32.mrf.mxu0
  %v446 = vadd.f32 %v377, %v445
  %447 = vmatmul.bf16.gmra.mxu0 %v306
  %v448 = vpop.f32.mrf.mxu0
  %v449 = vadd.f32 %v380, %v448
  %v450 = vpop.f32.mrf.mxu0
  %v451 = vadd.f32 %v382, %v450
  %452 = vdwg.mxu0
  %453 = vmatpush.bf16.msra.mxu0 %v252
  %454 = vmatpush.bf16.msra.mxu0 %v250
  %455 = vmatpush.bf16.msra.mxu0 %v248
  %456 = vmatpush.bf16.msra.mxu0 %v246
  %457 = vmatpush.bf16.msra.mxu0 %v244
  %458 = vmatpush.bf16.msra.mxu0 %v242
  %459 = vmatpush.bf16.msra.mxu0 %v240
  %460 = vmatpush.bf16.msra.mxu0 %v238
  %461 = vmatmul.bf16.gmra.mxu0 %v147
  %v462 = vpop.f32.mrf.mxu0
  %v463 = vadd.f32 0.0, %v462
  %v464 = vpop.f32.mrf.mxu0
  %v465 = vadd.f32 0.0, %v464
  %466 = vmatmul.bf16.gmra.mxu0 %v149
  %v467 = vpop.f32.mrf.mxu0
  %v468 = vadd.f32 0.0, %v467
  %v469 = vpop.f32.mrf.mxu0
  %v470 = vadd.f32 0.0, %v469
  %471 = vmatmul.bf16.gmra.mxu0 %v151
  %v472 = vpop.f32.mrf.mxu0
  %v473 = vadd.f32 0.0, %v472
  %v474 = vpop.f32.mrf.mxu0
  %v475 = vadd.f32 0.0, %v474
  %476 = vmatmul.bf16.gmra.mxu0 %v153
  %v477 = vpop.f32.mrf.mxu0
  %v478 = vadd.f32 0.0, %v477
  %v479 = vpop.f32.mrf.mxu0
  %v480 = vadd.f32 0.0, %v479
  %481 = vmatmul.bf16.gmra.mxu0 %v155
  %v482 = vpop.f32.mrf.mxu0
  %v483 = vadd.f32 0.0, %v482
  %v484 = vpop.f32.mrf.mxu0
  %v485 = vadd.f32 0.0, %v484
  %486 = vmatmul.bf16.gmra.mxu0 %v157
  %v487 = vpop.f32.mrf.mxu0
  %v488 = vadd.f32 0.0, %v487
  %v489 = vpop.f32.mrf.mxu0
  %v490 = vadd.f32 0.0, %v489
  %491 = vmatmul.bf16.gmra.mxu0 %v159
  %v492 = vpop.f32.mrf.mxu0
  %v493 = vadd.f32 0.0, %v492
  %v494 = vpop.f32.mrf.mxu0
  %v495 = vadd.f32 0.0, %v494
  %496 = vmatmul.bf16.gmra.mxu0 %v161
  %v497 = vpop.f32.mrf.mxu0
  %v498 = vadd.f32 0.0, %v497
  %v499 = vpop.f32.mrf.mxu0
  %v500 = vadd.f32 0.0, %v499
  %501 = vmatmul.bf16.gmra.mxu0 %v163
  %v502 = vpop.f32.mrf.mxu0
  %v503 = vadd.f32 0.0, %v502
  %v504 = vpop.f32.mrf.mxu0
  %v505 = vadd.f32 0.0, %v504
  %506 = vmatmul.bf16.gmra.mxu0 %v165
  %v507 = vpop.f32.mrf.mxu0
  %v508 = vadd.f32 0.0, %v507
  %v509 = vpop.f32.mrf.mxu0
  %v510 = vadd.f32 0.0, %v509
  %511 = vmatmul.bf16.gmra.mxu0 %v167
  %v512 = vpop.f32.mrf.mxu0
  %v513 = vadd.f32 0.0, %v512
  %v514 = vpop.f32.mrf.mxu0
  %v515 = vadd.f32 0.0, %v514
  %516 = vmatmul.bf16.gmra.mxu0 %v169
  %v517 = vpop.f32.mrf.mxu0
  %v518 = vadd.f32 0.0, %v517
  %v519 = vpop.f32.mrf.mxu0
  %v520 = vadd.f32 0.0, %v519
  %521 = vdwg.mxu0
  %522 = vmatpush.bf16.msra.mxu0 0
  %523 = vmatpush.bf16.msra.mxu0 0
  %524 = vmatpush.bf16.msra.mxu0 0
  %525 = vmatpush.bf16.msra.mxu0 0
  %526 = vmatpush.bf16.msra.mxu0 0
  %527 = vmatpush.bf16.msra.mxu0 0
  %528 = vmatpush.bf16.msra.mxu0 0
  %529 = vmatpush.bf16.msra.mxu0 %v313
  %530 = vmatmul.bf16.gmra.mxu0 %v273
  %v531 = vpop.f32.mrf.mxu0
  %v532 = vadd.f32 %v463, %v531
  %v533 = vpop.f32.mrf.mxu0
  %v534 = vadd.f32 %v465, %v533
  %535 = vmatmul.bf16.gmra.mxu0 %v276
  %v536 = vpop.f32.mrf.mxu0
  %v537 = vadd.f32 %v468, %v536
  %v538 = vpop.f32.mrf.mxu0
  %v539 = vadd.f32 %v470, %v538
  %540 = vmatmul.bf16.gmra.mxu0 %v279
  %v541 = vpop.f32.mrf.mxu0
  %v542 = vadd.f32 %v473, %v541
  %v543 = vpop.f32.mrf.mxu0
  %v544 = vadd.f32 %v475, %v543
  %545 = vmatmul.bf16.gmra.mxu0 %v282
  %v546 = vpop.f32.mrf.mxu0
  %v547 = vadd.f32 %v478, %v546
  %v548 = vpop.f32.mrf.mxu0
  %v549 = vadd.f32 %v480, %v548
  %550 = vmatmul.bf16.gmra.mxu0 %v285
  %v551 = vpop.f32.mrf.mxu0
  %v552 = vadd.f32 %v483, %v551
  %v553 = vpop.f32.mrf.mxu0
  %v554 = vadd.f32 %v485, %v553
  %555 = vmatmul.bf16.gmra.mxu0 %v288
  %v556 = vpop.f32.mrf.mxu0
  %v557 = vadd.f32 %v488, %v556
  %v558 = vpop.f32.mrf.mxu0
  %v559 = vadd.f32 %v490, %v558
  %560 = vmatmul.bf16.gmra.mxu0 %v291
  %v561 = vpop.f32.mrf.mxu0
  %v562 = vadd.f32 %v493, %v561
  %v563 = vpop.f32.mrf.mxu0
  %v564 = vadd.f32 %v495, %v563
  %565 = vmatmul.bf16.gmra.mxu0 %v294
  %v566 = vpop.f32.mrf.mxu0
  %v567 = vadd.f32 %v498, %v566
  %v568 = vpop.f32.mrf.mxu0
  %v569 = vadd.f32 %v500, %v568
  %570 = vmatmul.bf16.gmra.mxu0 %v297
  %v571 = vpop.f32.mrf.mxu0
  %v572 = vadd.f32 %v503, %v571
  %v573 = vpop.f32.mrf.mxu0
  %v574 = vadd.f32 %v505, %v573
  %575 = vmatmul.bf16.gmra.mxu0 %v300
  %v576 = vpop.f32.mrf.mxu0
  %v577 = vadd.f32 %v508, %v576
  %v578 = vpop.f32.mrf.mxu0
  %v579 = vadd.f32 %v510, %v578
  %580 = vmatmul.bf16.gmra.mxu0 %v303
  %v581 = vpop.f32.mrf.mxu0
  %v582 = vadd.f32 %v513, %v581
  %v583 = vpop.f32.mrf.mxu0
  %v584 = vadd.f32 %v515, %v583
  %585 = vmatmul.bf16.gmra.mxu0 %v306
  %v586 = vpop.f32.mrf.mxu0
  %v587 = vadd.f32 %v518, %v586
  %v588 = vpop.f32.mrf.mxu0
  %v589 = vadd.f32 %v520, %v588
  %590 = vdwg.mxu0
  %v591 = vmax.f32 %v394, %v532
  %v592 = vmax.f32 %v396, %v534
  %v593 = vmax.f32 %v399, %v537
  %v594 = vmax.f32 %v401, %v539
  %v595 = vmax.f32 %v404, %v542
  %v596 = vmax.f32 %v406, %v544
  %v597 = vmax.f32 %v409, %v547
  %v598 = vmax.f32 %v411, %v549
  %v599 = vmax.f32 %v414, %v552
  %v600 = vmax.f32 %v416, %v554
  %v601 = vmax.f32 %v419, %v557
  %v602 = vmax.f32 %v421, %v559
  %v603 = vmax.f32 %v424, %v562
  %v604 = vmax.f32 %v426, %v564
  %v605 = vmax.f32 %v429, %v567
  %v606 = vmax.f32 %v431, %v569
  %v607 = vmax.f32 %v434, %v572
  %v608 = vmax.f32 %v436, %v574
  %v609 = vmax.f32 %v439, %v577
  %v610 = vmax.f32 %v441, %v579
  %v611 = vmax.f32 %v444, %v582
  %v612 = vmax.f32 %v446, %v584
  %v613 = vmax.f32 %v449, %v587
  %v614 = vmax.f32 %v451, %v589
  %s615 = scalar_lea.vmem %s0, 192
  %v616 = vld [vmem:[%s615] sm:$0xff]
  %v617 = vld [vmem:[%s615 + $0x8] sm:$0xff]
  %v618 = vld [vmem:[%s615 + $0x10] sm:$0xff]
  %v619 = vld [vmem:[%s615 + $0x18] sm:$0xff]
  %v620 = vld [vmem:[%s615 + $0x20] sm:$0xff]
  %v621 = vld [vmem:[%s615 + $0x28] sm:$0xff]
  %v622 = vld [vmem:[%s615 + $0x30] sm:$0xff]
  %v623 = vld [vmem:[%s615 + $0x38] sm:$0xff]
  %v624 = vld [vmem:[%s615 + $0x40] sm:$0xff]
  %v625 = vld [vmem:[%s615 + $0x48] sm:$0xff]
  %v626 = vld [vmem:[%s615 + $0x50] sm:$0xff]
  %v627 = vld [vmem:[%s615 + $0x58] sm:$0xff]
  %v628 = vld [vmem:[%s615 + $0x60] sm:$0xff]
  %v629 = vld [vmem:[%s615 + $0x68] sm:$0xff]
  %v630 = vld [vmem:[%s615 + $0x70] sm:$0xff]
  %v631 = vld [vmem:[%s615 + $0x78] sm:$0xff]
  %v632 = vld [vmem:[%s615 + $0x80] sm:$0xff]
  %v633 = vld [vmem:[%s615 + $0x88] sm:$0xff]
  %v634 = vld [vmem:[%s615 + $0x90] sm:$0xff]
  %v635 = vld [vmem:[%s615 + $0x98] sm:$0xff]
  %v636 = vld [vmem:[%s615 + $0xa0] sm:$0xff]
  %v637 = vld [vmem:[%s615 + $0xa8] sm:$0xff]
  %v638 = vld [vmem:[%s615 + $0xb0] sm:$0xff]
  %v639 = vld [vmem:[%s615 + $0xb8] sm:$0xff]
  %v664 = vunpack.c.l.b16 %v616
  %v665 = vunpack.c.h.b16 %v616
  %v666 = vunpack.c.l.b16 %v617
  %v667 = vunpack.c.h.b16 %v617
  %v668 = vunpack.c.l.b16 %v618
  %v669 = vunpack.c.h.b16 %v618
  %v670 = vunpack.c.l.b16 %v619
  %v671 = vunpack.c.h.b16 %v619
  %v672 = vunpack.c.l.b16 %v620
  %v673 = vunpack.c.h.b16 %v620
  %v674 = vunpack.c.l.b16 %v621
  %v675 = vunpack.c.h.b16 %v621
  %v676 = vunpack.c.l.b16 %v622
  %v677 = vunpack.c.h.b16 %v622
  %v678 = vunpack.c.l.b16 %v623
  %v679 = vunpack.c.h.b16 %v623
  %v680 = vunpack.c.l.b16 %v624
  %v681 = vunpack.c.h.b16 %v624
  %v682 = vunpack.c.l.b16 %v625
  %v683 = vunpack.c.h.b16 %v625
  %v684 = vunpack.c.l.b16 %v626
  %v685 = vunpack.c.h.b16 %v626
  %v686 = vunpack.c.l.b16 %v627
  %v687 = vunpack.c.h.b16 %v627
  %v688 = vunpack.c.l.b16 %v628
  %v689 = vunpack.c.h.b16 %v628
  %v690 = vunpack.c.l.b16 %v629
  %v691 = vunpack.c.h.b16 %v629
  %v692 = vunpack.c.l.b16 %v630
  %v693 = vunpack.c.h.b16 %v630
  %v694 = vunpack.c.l.b16 %v631
  %v695 = vunpack.c.h.b16 %v631
  %v696 = vunpack.c.l.b16 %v632
  %v697 = vunpack.c.h.b16 %v632
  %v698 = vunpack.c.l.b16 %v633
  %v699 = vunpack.c.h.b16 %v633
  %v700 = vunpack.c.l.b16 %v634
  %v701 = vunpack.c.h.b16 %v634
  %v702 = vunpack.c.l.b16 %v635
  %v703 = vunpack.c.h.b16 %v635
  %v704 = vunpack.c.l.b16 %v636
  %v705 = vunpack.c.h.b16 %v636
  %v706 = vunpack.c.l.b16 %v637
  %v707 = vunpack.c.h.b16 %v637
  %v708 = vunpack.c.l.b16 %v638
  %v709 = vunpack.c.h.b16 %v638
  %v710 = vunpack.c.l.b16 %v639
  %v711 = vunpack.c.h.b16 %v639
  %v712 = vpack.c.b16 %v666, %v664
  %v713 = vpack.c.b16 %v667, %v665
  %v714 = vpack.c.b16 %v670, %v668
  %v715 = vpack.c.b16 %v671, %v669
  %v716 = vpack.c.b16 %v674, %v672
  %v717 = vpack.c.b16 %v675, %v673
  %v718 = vpack.c.b16 %v678, %v676
  %v719 = vpack.c.b16 %v679, %v677
  %v720 = vpack.c.b16 %v682, %v680
  %v721 = vpack.c.b16 %v683, %v681
  %v722 = vpack.c.b16 %v686, %v684
  %v723 = vpack.c.b16 %v687, %v685
  %v724 = vpack.c.b16 %v690, %v688
  %v725 = vpack.c.b16 %v691, %v689
  %v726 = vpack.c.b16 %v694, %v692
  %v727 = vpack.c.b16 %v695, %v693
  %v728 = vpack.c.b16 %v698, %v696
  %v729 = vpack.c.b16 %v699, %v697
  %v730 = vpack.c.b16 %v702, %v700
  %v731 = vpack.c.b16 %v703, %v701
  %v732 = vpack.c.b16 %v706, %v704
  %v733 = vpack.c.b16 %v707, %v705
  %v734 = vpack.c.b16 %v710, %v708
  %v735 = vpack.c.b16 %v711, %v709
  %v749 = vsel %vm271, %v713, 0
  %v752 = vsel %vm271, %v715, 0
  %v755 = vsel %vm271, %v717, 0
  %v758 = vsel %vm271, %v719, 0
  %v761 = vsel %vm271, %v721, 0
  %v764 = vsel %vm271, %v723, 0
  %v767 = vsel %vm271, %v725, 0
  %v770 = vsel %vm271, %v727, 0
  %v773 = vsel %vm271, %v729, 0
  %v776 = vsel %vm271, %v731, 0
  %v779 = vsel %vm271, %v733, 0
  %v782 = vsel %vm271, %v735, 0
  %784 = vmatpush.bf16.msra.mxu0 %v251
  %785 = vmatpush.bf16.msra.mxu0 %v249
  %786 = vmatpush.bf16.msra.mxu0 %v247
  %787 = vmatpush.bf16.msra.mxu0 %v245
  %788 = vmatpush.bf16.msra.mxu0 %v243
  %789 = vmatpush.bf16.msra.mxu0 %v241
  %790 = vmatpush.bf16.msra.mxu0 %v239
  %791 = vmatpush.bf16.msra.mxu0 %v237
  %792 = vmatmul.bf16.gmra.mxu0 %v712
  %v793 = vpop.f32.mrf.mxu0
  %v794 = vadd.f32 0.0, %v793
  %v795 = vpop.f32.mrf.mxu0
  %v796 = vadd.f32 0.0, %v795
  %797 = vmatmul.bf16.gmra.mxu0 %v714
  %v798 = vpop.f32.mrf.mxu0
  %v799 = vadd.f32 0.0, %v798
  %v800 = vpop.f32.mrf.mxu0
  %v801 = vadd.f32 0.0, %v800
  %802 = vmatmul.bf16.gmra.mxu0 %v716
  %v803 = vpop.f32.mrf.mxu0
  %v804 = vadd.f32 0.0, %v803
  %v805 = vpop.f32.mrf.mxu0
  %v806 = vadd.f32 0.0, %v805
  %807 = vmatmul.bf16.gmra.mxu0 %v718
  %v808 = vpop.f32.mrf.mxu0
  %v809 = vadd.f32 0.0, %v808
  %v810 = vpop.f32.mrf.mxu0
  %v811 = vadd.f32 0.0, %v810
  %812 = vmatmul.bf16.gmra.mxu0 %v720
  %v813 = vpop.f32.mrf.mxu0
  %v814 = vadd.f32 0.0, %v813
  %v815 = vpop.f32.mrf.mxu0
  %v816 = vadd.f32 0.0, %v815
  %817 = vmatmul.bf16.gmra.mxu0 %v722
  %v818 = vpop.f32.mrf.mxu0
  %v819 = vadd.f32 0.0, %v818
  %v820 = vpop.f32.mrf.mxu0
  %v821 = vadd.f32 0.0, %v820
  %822 = vmatmul.bf16.gmra.mxu0 %v724
  %v823 = vpop.f32.mrf.mxu0
  %v824 = vadd.f32 0.0, %v823
  %v825 = vpop.f32.mrf.mxu0
  %v826 = vadd.f32 0.0, %v825
  %827 = vmatmul.bf16.gmra.mxu0 %v726
  %v828 = vpop.f32.mrf.mxu0
  %v829 = vadd.f32 0.0, %v828
  %v830 = vpop.f32.mrf.mxu0
  %v831 = vadd.f32 0.0, %v830
  %832 = vmatmul.bf16.gmra.mxu0 %v728
  %v833 = vpop.f32.mrf.mxu0
  %v834 = vadd.f32 0.0, %v833
  %v835 = vpop.f32.mrf.mxu0
  %v836 = vadd.f32 0.0, %v835
  %837 = vmatmul.bf16.gmra.mxu0 %v730
  %v838 = vpop.f32.mrf.mxu0
  %v839 = vadd.f32 0.0, %v838
  %v840 = vpop.f32.mrf.mxu0
  %v841 = vadd.f32 0.0, %v840
  %842 = vmatmul.bf16.gmra.mxu0 %v732
  %v843 = vpop.f32.mrf.mxu0
  %v844 = vadd.f32 0.0, %v843
  %v845 = vpop.f32.mrf.mxu0
  %v846 = vadd.f32 0.0, %v845
  %847 = vmatmul.bf16.gmra.mxu0 %v734
  %v848 = vpop.f32.mrf.mxu0
  %v849 = vadd.f32 0.0, %v848
  %v850 = vpop.f32.mrf.mxu0
  %v851 = vadd.f32 0.0, %v850
  %852 = vdwg.mxu0
  %853 = vmatpush.bf16.msra.mxu0 0
  %854 = vmatpush.bf16.msra.mxu0 0
  %855 = vmatpush.bf16.msra.mxu0 0
  %856 = vmatpush.bf16.msra.mxu0 0
  %857 = vmatpush.bf16.msra.mxu0 0
  %858 = vmatpush.bf16.msra.mxu0 0
  %859 = vmatpush.bf16.msra.mxu0 0
  %860 = vmatpush.bf16.msra.mxu0 %v310
  %861 = vmatmul.bf16.gmra.mxu0 %v749
  %v862 = vpop.f32.mrf.mxu0
  %v863 = vadd.f32 %v794, %v862
  %v864 = vpop.f32.mrf.mxu0
  %v865 = vadd.f32 %v796, %v864
  %866 = vmatmul.bf16.gmra.mxu0 %v752
  %v867 = vpop.f32.mrf.mxu0
  %v868 = vadd.f32 %v799, %v867
  %v869 = vpop.f32.mrf.mxu0
  %v870 = vadd.f32 %v801, %v869
  %871 = vmatmul.bf16.gmra.mxu0 %v755
  %v872 = vpop.f32.mrf.mxu0
  %v873 = vadd.f32 %v804, %v872
  %v874 = vpop.f32.mrf.mxu0
  %v875 = vadd.f32 %v806, %v874
  %876 = vmatmul.bf16.gmra.mxu0 %v758
  %v877 = vpop.f32.mrf.mxu0
  %v878 = vadd.f32 %v809, %v877
  %v879 = vpop.f32.mrf.mxu0
  %v880 = vadd.f32 %v811, %v879
  %881 = vmatmul.bf16.gmra.mxu0 %v761
  %v882 = vpop.f32.mrf.mxu0
  %v883 = vadd.f32 %v814, %v882
  %v884 = vpop.f32.mrf.mxu0
  %v885 = vadd.f32 %v816, %v884
  %886 = vmatmul.bf16.gmra.mxu0 %v764
  %v887 = vpop.f32.mrf.mxu0
  %v888 = vadd.f32 %v819, %v887
  %v889 = vpop.f32.mrf.mxu0
  %v890 = vadd.f32 %v821, %v889
  %891 = vmatmul.bf16.gmra.mxu0 %v767
  %v892 = vpop.f32.mrf.mxu0
  %v893 = vadd.f32 %v824, %v892
  %v894 = vpop.f32.mrf.mxu0
  %v895 = vadd.f32 %v826, %v894
  %896 = vmatmul.bf16.gmra.mxu0 %v770
  %v897 = vpop.f32.mrf.mxu0
  %v898 = vadd.f32 %v829, %v897
  %v899 = vpop.f32.mrf.mxu0
  %v900 = vadd.f32 %v831, %v899
  %901 = vmatmul.bf16.gmra.mxu0 %v773
  %v902 = vpop.f32.mrf.mxu0
  %v903 = vadd.f32 %v834, %v902
  %v904 = vpop.f32.mrf.mxu0
  %v905 = vadd.f32 %v836, %v904
  %906 = vmatmul.bf16.gmra.mxu0 %v776
  %v907 = vpop.f32.mrf.mxu0
  %v908 = vadd.f32 %v839, %v907
  %v909 = vpop.f32.mrf.mxu0
  %v910 = vadd.f32 %v841, %v909
  %911 = vmatmul.bf16.gmra.mxu0 %v779
  %v912 = vpop.f32.mrf.mxu0
  %v913 = vadd.f32 %v844, %v912
  %v914 = vpop.f32.mrf.mxu0
  %v915 = vadd.f32 %v846, %v914
  %916 = vmatmul.bf16.gmra.mxu0 %v782
  %v917 = vpop.f32.mrf.mxu0
  %v918 = vadd.f32 %v849, %v917
  %v919 = vpop.f32.mrf.mxu0
  %v920 = vadd.f32 %v851, %v919
  %921 = vdwg.mxu0
  %922 = vmatpush.bf16.msra.mxu0 %v252
  %923 = vmatpush.bf16.msra.mxu0 %v250
  %924 = vmatpush.bf16.msra.mxu0 %v248
  %925 = vmatpush.bf16.msra.mxu0 %v246
  %926 = vmatpush.bf16.msra.mxu0 %v244
  %927 = vmatpush.bf16.msra.mxu0 %v242
  %928 = vmatpush.bf16.msra.mxu0 %v240
  %929 = vmatpush.bf16.msra.mxu0 %v238
  %930 = vmatmul.bf16.gmra.mxu0 %v712
  %v931 = vpop.f32.mrf.mxu0
  %v932 = vadd.f32 0.0, %v931
  %v933 = vpop.f32.mrf.mxu0
  %v934 = vadd.f32 0.0, %v933
  %935 = vmatmul.bf16.gmra.mxu0 %v714
  %v936 = vpop.f32.mrf.mxu0
  %v937 = vadd.f32 0.0, %v936
  %v938 = vpop.f32.mrf.mxu0
  %v939 = vadd.f32 0.0, %v938
  %940 = vmatmul.bf16.gmra.mxu0 %v716
  %v941 = vpop.f32.mrf.mxu0
  %v942 = vadd.f32 0.0, %v941
  %v943 = vpop.f32.mrf.mxu0
  %v944 = vadd.f32 0.0, %v943
  %945 = vmatmul.bf16.gmra.mxu0 %v718
  %v946 = vpop.f32.mrf.mxu0
  %v947 = vadd.f32 0.0, %v946
  %v948 = vpop.f32.mrf.mxu0
  %v949 = vadd.f32 0.0, %v948
  %950 = vmatmul.bf16.gmra.mxu0 %v720
  %v951 = vpop.f32.mrf.mxu0
  %v952 = vadd.f32 0.0, %v951
  %v953 = vpop.f32.mrf.mxu0
  %v954 = vadd.f32 0.0, %v953
  %955 = vmatmul.bf16.gmra.mxu0 %v722
  %v956 = vpop.f32.mrf.mxu0
  %v957 = vadd.f32 0.0, %v956
  %v958 = vpop.f32.mrf.mxu0
  %v959 = vadd.f32 0.0, %v958
  %960 = vmatmul.bf16.gmra.mxu0 %v724
  %v961 = vpop.f32.mrf.mxu0
  %v962 = vadd.f32 0.0, %v961
  %v963 = vpop.f32.mrf.mxu0
  %v964 = vadd.f32 0.0, %v963
  %965 = vmatmul.bf16.gmra.mxu0 %v726
  %v966 = vpop.f32.mrf.mxu0
  %v967 = vadd.f32 0.0, %v966
  %v968 = vpop.f32.mrf.mxu0
  %v969 = vadd.f32 0.0, %v968
  %970 = vmatmul.bf16.gmra.mxu0 %v728
  %v971 = vpop.f32.mrf.mxu0
  %v972 = vadd.f32 0.0, %v971
  %v973 = vpop.f32.mrf.mxu0
  %v974 = vadd.f32 0.0, %v973
  %975 = vmatmul.bf16.gmra.mxu0 %v730
  %v976 = vpop.f32.mrf.mxu0
  %v977 = vadd.f32 0.0, %v976
  %v978 = vpop.f32.mrf.mxu0
  %v979 = vadd.f32 0.0, %v978
  %980 = vmatmul.bf16.gmra.mxu0 %v732
  %v981 = vpop.f32.mrf.mxu0
  %v982 = vadd.f32 0.0, %v981
  %v983 = vpop.f32.mrf.mxu0
  %v984 = vadd.f32 0.0, %v983
  %985 = vmatmul.bf16.gmra.mxu0 %v734
  %v986 = vpop.f32.mrf.mxu0
  %v987 = vadd.f32 0.0, %v986
  %v988 = vpop.f32.mrf.mxu0
  %v989 = vadd.f32 0.0, %v988
  %990 = vdwg.mxu0
  %991 = vmatpush.bf16.msra.mxu0 0
  %992 = vmatpush.bf16.msra.mxu0 0
  %993 = vmatpush.bf16.msra.mxu0 0
  %994 = vmatpush.bf16.msra.mxu0 0
  %995 = vmatpush.bf16.msra.mxu0 0
  %996 = vmatpush.bf16.msra.mxu0 0
  %997 = vmatpush.bf16.msra.mxu0 0
  %998 = vmatpush.bf16.msra.mxu0 %v313
  %999 = vmatmul.bf16.gmra.mxu0 %v749
  %v1000 = vpop.f32.mrf.mxu0
  %v1001 = vadd.f32 %v932, %v1000
  %v1002 = vpop.f32.mrf.mxu0
  %v1003 = vadd.f32 %v934, %v1002
  %1004 = vmatmul.bf16.gmra.mxu0 %v752
  %v1005 = vpop.f32.mrf.mxu0
  %v1006 = vadd.f32 %v937, %v1005
  %v1007 = vpop.f32.mrf.mxu0
  %v1008 = vadd.f32 %v939, %v1007
  %1009 = vmatmul.bf16.gmra.mxu0 %v755
  %v1010 = vpop.f32.mrf.mxu0
  %v1011 = vadd.f32 %v942, %v1010
  %v1012 = vpop.f32.mrf.mxu0
  %v1013 = vadd.f32 %v944, %v1012
  %1014 = vmatmul.bf16.gmra.mxu0 %v758
  %v1015 = vpop.f32.mrf.mxu0
  %v1016 = vadd.f32 %v947, %v1015
  %v1017 = vpop.f32.mrf.mxu0
  %v1018 = vadd.f32 %v949, %v1017
  %1019 = vmatmul.bf16.gmra.mxu0 %v761
  %v1020 = vpop.f32.mrf.mxu0
  %v1021 = vadd.f32 %v952, %v1020
  %v1022 = vpop.f32.mrf.mxu0
  %v1023 = vadd.f32 %v954, %v1022
  %1024 = vmatmul.bf16.gmra.mxu0 %v764
  %v1025 = vpop.f32.mrf.mxu0
  %v1026 = vadd.f32 %v957, %v1025
  %v1027 = vpop.f32.mrf.mxu0
  %v1028 = vadd.f32 %v959, %v1027
  %1029 = vmatmul.bf16.gmra.mxu0 %v767
  %v1030 = vpop.f32.mrf.mxu0
  %v1031 = vadd.f32 %v962, %v1030
  %v1032 = vpop.f32.mrf.mxu0
  %v1033 = vadd.f32 %v964, %v1032
  %1034 = vmatmul.bf16.gmra.mxu0 %v770
  %v1035 = vpop.f32.mrf.mxu0
  %v1036 = vadd.f32 %v967, %v1035
  %v1037 = vpop.f32.mrf.mxu0
  %v1038 = vadd.f32 %v969, %v1037
  %1039 = vmatmul.bf16.gmra.mxu0 %v773
  %v1040 = vpop.f32.mrf.mxu0
  %v1041 = vadd.f32 %v972, %v1040
  %v1042 = vpop.f32.mrf.mxu0
  %v1043 = vadd.f32 %v974, %v1042
  %1044 = vmatmul.bf16.gmra.mxu0 %v776
  %v1045 = vpop.f32.mrf.mxu0
  %v1046 = vadd.f32 %v977, %v1045
  %v1047 = vpop.f32.mrf.mxu0
  %v1048 = vadd.f32 %v979, %v1047
  %1049 = vmatmul.bf16.gmra.mxu0 %v779
  %v1050 = vpop.f32.mrf.mxu0
  %v1051 = vadd.f32 %v982, %v1050
  %v1052 = vpop.f32.mrf.mxu0
  %v1053 = vadd.f32 %v984, %v1052
  %1054 = vmatmul.bf16.gmra.mxu0 %v782
  %v1055 = vpop.f32.mrf.mxu0
  %v1056 = vadd.f32 %v987, %v1055
  %v1057 = vpop.f32.mrf.mxu0
  %v1058 = vadd.f32 %v989, %v1057
  %1059 = vdwg.mxu0
  %v1060 = vmax.f32 %v863, %v1001
  %v1061 = vmax.f32 %v865, %v1003
  %v1062 = vmax.f32 %v868, %v1006
  %v1063 = vmax.f32 %v870, %v1008
  %v1064 = vmax.f32 %v873, %v1011
  %v1065 = vmax.f32 %v875, %v1013
  %v1066 = vmax.f32 %v878, %v1016
  %v1067 = vmax.f32 %v880, %v1018
  %v1068 = vmax.f32 %v883, %v1021
  %v1069 = vmax.f32 %v885, %v1023
  %v1070 = vmax.f32 %v888, %v1026
  %v1071 = vmax.f32 %v890, %v1028
  %v1072 = vmax.f32 %v893, %v1031
  %v1073 = vmax.f32 %v895, %v1033
  %v1074 = vmax.f32 %v898, %v1036
  %v1075 = vmax.f32 %v900, %v1038
  %v1076 = vmax.f32 %v903, %v1041
  %v1077 = vmax.f32 %v905, %v1043
  %v1078 = vmax.f32 %v908, %v1046
  %v1079 = vmax.f32 %v910, %v1048
  %v1080 = vmax.f32 %v913, %v1051
  %v1081 = vmax.f32 %v915, %v1053
  %v1082 = vmax.f32 %v918, %v1056
  %v1083 = vmax.f32 %v920, %v1058
  %v1084 = vmax.f32 %v591, %v1060
  %v1085 = vmax.f32 %v592, %v1061
  %v1086 = vmax.f32 %v593, %v1062
  %v1087 = vmax.f32 %v594, %v1063
  %v1088 = vmax.f32 %v595, %v1064
  %v1089 = vmax.f32 %v596, %v1065
  %v1090 = vmax.f32 %v597, %v1066
  %v1091 = vmax.f32 %v598, %v1067
  %v1092 = vmax.f32 %v599, %v1068
  %v1093 = vmax.f32 %v600, %v1069
  %v1094 = vmax.f32 %v601, %v1070
  %v1095 = vmax.f32 %v602, %v1071
  %v1096 = vmax.f32 %v603, %v1072
  %v1097 = vmax.f32 %v604, %v1073
  %v1098 = vmax.f32 %v605, %v1074
  %v1099 = vmax.f32 %v606, %v1075
  %v1100 = vmax.f32 %v607, %v1076
  %v1101 = vmax.f32 %v608, %v1077
  %v1102 = vmax.f32 %v609, %v1078
  %v1103 = vmax.f32 %v610, %v1079
  %v1104 = vmax.f32 %v611, %v1080
  %v1105 = vmax.f32 %v612, %v1081
  %v1106 = vmax.f32 %v613, %v1082
  %v1107 = vmax.f32 %v614, %v1083
  %v1108 = vld [vmem:[%s2] sm:$0x1]
  %v1110 = vperm.slane %v1108, 0
  %v1112 = vadd.f32 %v1084, %v1110
  %v1113 = vadd.f32 %v1085, %v1110
  %v1114 = vadd.f32 %v1086, %v1110
  %v1115 = vadd.f32 %v1087, %v1110
  %v1116 = vadd.f32 %v1088, %v1110
  %v1117 = vadd.f32 %v1089, %v1110
  %v1118 = vadd.f32 %v1090, %v1110
  %v1119 = vadd.f32 %v1091, %v1110
  %v1120 = vadd.f32 %v1092, %v1110
  %v1121 = vadd.f32 %v1093, %v1110
  %v1122 = vadd.f32 %v1094, %v1110
  %v1123 = vadd.f32 %v1095, %v1110
  %v1124 = vadd.f32 %v1096, %v1110
  %v1125 = vadd.f32 %v1097, %v1110
  %v1126 = vadd.f32 %v1098, %v1110
  %v1127 = vadd.f32 %v1099, %v1110
  %v1128 = vadd.f32 %v1100, %v1110
  %v1129 = vadd.f32 %v1101, %v1110
  %v1130 = vadd.f32 %v1102, %v1110
  %v1131 = vadd.f32 %v1103, %v1110
  %v1132 = vadd.f32 %v1104, %v1110
  %v1133 = vadd.f32 %v1105, %v1110
  %v1134 = vadd.f32 %v1106, %v1110
  %v1135 = vadd.f32 %v1107, %v1110
  %v1136 = vmax.f32 %v1112, 0.0
  %v1137 = vmax.f32 %v1113, 0.0
  %v1138 = vmax.f32 %v1114, 0.0
  %v1139 = vmax.f32 %v1115, 0.0
  %v1140 = vmax.f32 %v1116, 0.0
  %v1141 = vmax.f32 %v1117, 0.0
  %v1142 = vmax.f32 %v1118, 0.0
  %v1143 = vmax.f32 %v1119, 0.0
  %v1144 = vmax.f32 %v1120, 0.0
  %v1145 = vmax.f32 %v1121, 0.0
  %v1146 = vmax.f32 %v1122, 0.0
  %v1147 = vmax.f32 %v1123, 0.0
  %v1148 = vmax.f32 %v1124, 0.0
  %v1149 = vmax.f32 %v1125, 0.0
  %v1150 = vmax.f32 %v1126, 0.0
  %v1151 = vmax.f32 %v1127, 0.0
  %v1152 = vmax.f32 %v1128, 0.0
  %v1153 = vmax.f32 %v1129, 0.0
  %v1154 = vmax.f32 %v1130, 0.0
  %v1155 = vmax.f32 %v1131, 0.0
  %v1156 = vmax.f32 %v1132, 0.0
  %v1157 = vmax.f32 %v1133, 0.0
  %v1158 = vmax.f32 %v1134, 0.0
  %v1159 = vmax.f32 %v1135, 0.0
  %s1160 = scalar_lea.vmem %s0, 384
  %v1161 = vld [vmem:[%s1160] sm:$0xff]
  %v1162 = vld [vmem:[%s1160 + $0x8] sm:$0xff]
  %v1163 = vld [vmem:[%s1160 + $0x10] sm:$0xff]
  %v1164 = vld [vmem:[%s1160 + $0x18] sm:$0xff]
  %v1165 = vld [vmem:[%s1160 + $0x20] sm:$0xff]
  %v1166 = vld [vmem:[%s1160 + $0x28] sm:$0xff]
  %v1167 = vld [vmem:[%s1160 + $0x30] sm:$0xff]
  %v1168 = vld [vmem:[%s1160 + $0x38] sm:$0xff]
  %v1169 = vld [vmem:[%s1160 + $0x40] sm:$0xff]
  %v1170 = vld [vmem:[%s1160 + $0x48] sm:$0xff]
  %v1171 = vld [vmem:[%s1160 + $0x50] sm:$0xff]
  %v1172 = vld [vmem:[%s1160 + $0x58] sm:$0xff]
  %v1173 = vld [vmem:[%s1160 + $0x60] sm:$0xff]
  %v1174 = vld [vmem:[%s1160 + $0x68] sm:$0xff]
  %v1175 = vld [vmem:[%s1160 + $0x70] sm:$0xff]
  %v1176 = vld [vmem:[%s1160 + $0x78] sm:$0xff]
  %v1177 = vld [vmem:[%s1160 + $0x80] sm:$0xff]
  %v1178 = vld [vmem:[%s1160 + $0x88] sm:$0xff]
  %v1179 = vld [vmem:[%s1160 + $0x90] sm:$0xff]
  %v1180 = vld [vmem:[%s1160 + $0x98] sm:$0xff]
  %v1181 = vld [vmem:[%s1160 + $0xa0] sm:$0xff]
  %v1182 = vld [vmem:[%s1160 + $0xa8] sm:$0xff]
  %v1183 = vld [vmem:[%s1160 + $0xb0] sm:$0xff]
  %v1184 = vld [vmem:[%s1160 + $0xb8] sm:$0xff]
  %v1209 = vunpack.c.l.b16 %v1161
  %v1210 = vunpack.c.h.b16 %v1161
  %v1211 = vunpack.c.l.b16 %v1162
  %v1212 = vunpack.c.h.b16 %v1162
  %v1213 = vunpack.c.l.b16 %v1163
  %v1214 = vunpack.c.h.b16 %v1163
  %v1215 = vunpack.c.l.b16 %v1164
  %v1216 = vunpack.c.h.b16 %v1164
  %v1217 = vunpack.c.l.b16 %v1165
  %v1218 = vunpack.c.h.b16 %v1165
  %v1219 = vunpack.c.l.b16 %v1166
  %v1220 = vunpack.c.h.b16 %v1166
  %v1221 = vunpack.c.l.b16 %v1167
  %v1222 = vunpack.c.h.b16 %v1167
  %v1223 = vunpack.c.l.b16 %v1168
  %v1224 = vunpack.c.h.b16 %v1168
  %v1225 = vunpack.c.l.b16 %v1169
  %v1226 = vunpack.c.h.b16 %v1169
  %v1227 = vunpack.c.l.b16 %v1170
  %v1228 = vunpack.c.h.b16 %v1170
  %v1229 = vunpack.c.l.b16 %v1171
  %v1230 = vunpack.c.h.b16 %v1171
  %v1231 = vunpack.c.l.b16 %v1172
  %v1232 = vunpack.c.h.b16 %v1172
  %v1233 = vunpack.c.l.b16 %v1173
  %v1234 = vunpack.c.h.b16 %v1173
  %v1235 = vunpack.c.l.b16 %v1174
  %v1236 = vunpack.c.h.b16 %v1174
  %v1237 = vunpack.c.l.b16 %v1175
  %v1238 = vunpack.c.h.b16 %v1175
  %v1239 = vunpack.c.l.b16 %v1176
  %v1240 = vunpack.c.h.b16 %v1176
  %v1241 = vunpack.c.l.b16 %v1177
  %v1242 = vunpack.c.h.b16 %v1177
  %v1243 = vunpack.c.l.b16 %v1178
  %v1244 = vunpack.c.h.b16 %v1178
  %v1245 = vunpack.c.l.b16 %v1179
  %v1246 = vunpack.c.h.b16 %v1179
  %v1247 = vunpack.c.l.b16 %v1180
  %v1248 = vunpack.c.h.b16 %v1180
  %v1249 = vunpack.c.l.b16 %v1181
  %v1250 = vunpack.c.h.b16 %v1181
  %v1251 = vunpack.c.l.b16 %v1182
  %v1252 = vunpack.c.h.b16 %v1182
  %v1253 = vunpack.c.l.b16 %v1183
  %v1254 = vunpack.c.h.b16 %v1183
  %v1255 = vunpack.c.l.b16 %v1184
  %v1256 = vunpack.c.h.b16 %v1184
  %v1257 = vpack.c.b16 %v1211, %v1209
  %v1258 = vpack.c.b16 %v1212, %v1210
  %v1259 = vpack.c.b16 %v1215, %v1213
  %v1260 = vpack.c.b16 %v1216, %v1214
  %v1261 = vpack.c.b16 %v1219, %v1217
  %v1262 = vpack.c.b16 %v1220, %v1218
  %v1263 = vpack.c.b16 %v1223, %v1221
  %v1264 = vpack.c.b16 %v1224, %v1222
  %v1265 = vpack.c.b16 %v1227, %v1225
  %v1266 = vpack.c.b16 %v1228, %v1226
  %v1267 = vpack.c.b16 %v1231, %v1229
  %v1268 = vpack.c.b16 %v1232, %v1230
  %v1269 = vpack.c.b16 %v1235, %v1233
  %v1270 = vpack.c.b16 %v1236, %v1234
  %v1271 = vpack.c.b16 %v1239, %v1237
  %v1272 = vpack.c.b16 %v1240, %v1238
  %v1273 = vpack.c.b16 %v1243, %v1241
  %v1274 = vpack.c.b16 %v1244, %v1242
  %v1275 = vpack.c.b16 %v1247, %v1245
  %v1276 = vpack.c.b16 %v1248, %v1246
  %v1277 = vpack.c.b16 %v1251, %v1249
  %v1278 = vpack.c.b16 %v1252, %v1250
  %v1279 = vpack.c.b16 %v1255, %v1253
  %v1280 = vpack.c.b16 %v1256, %v1254
  %v1294 = vsel %vm271, %v1258, 0
  %v1297 = vsel %vm271, %v1260, 0
  %v1300 = vsel %vm271, %v1262, 0
  %v1303 = vsel %vm271, %v1264, 0
  %v1306 = vsel %vm271, %v1266, 0
  %v1309 = vsel %vm271, %v1268, 0
  %v1312 = vsel %vm271, %v1270, 0
  %v1315 = vsel %vm271, %v1272, 0
  %v1318 = vsel %vm271, %v1274, 0
  %v1321 = vsel %vm271, %v1276, 0
  %v1324 = vsel %vm271, %v1278, 0
  %v1327 = vsel %vm271, %v1280, 0
  %1329 = vmatpush.bf16.msra.mxu0 %v251
  %1330 = vmatpush.bf16.msra.mxu0 %v249
  %1331 = vmatpush.bf16.msra.mxu0 %v247
  %1332 = vmatpush.bf16.msra.mxu0 %v245
  %1333 = vmatpush.bf16.msra.mxu0 %v243
  %1334 = vmatpush.bf16.msra.mxu0 %v241
  %1335 = vmatpush.bf16.msra.mxu0 %v239
  %1336 = vmatpush.bf16.msra.mxu0 %v237
  %1337 = vmatmul.bf16.gmra.mxu0 %v1257
  %v1338 = vpop.f32.mrf.mxu0
  %v1339 = vadd.f32 0.0, %v1338
  %v1340 = vpop.f32.mrf.mxu0
  %v1341 = vadd.f32 0.0, %v1340
  %1342 = vmatmul.bf16.gmra.mxu0 %v1259
  %v1343 = vpop.f32.mrf.mxu0
  %v1344 = vadd.f32 0.0, %v1343
  %v1345 = vpop.f32.mrf.mxu0
  %v1346 = vadd.f32 0.0, %v1345
  %1347 = vmatmul.bf16.gmra.mxu0 %v1261
  %v1348 = vpop.f32.mrf.mxu0
  %v1349 = vadd.f32 0.0, %v1348
  %v1350 = vpop.f32.mrf.mxu0
  %v1351 = vadd.f32 0.0, %v1350
  %1352 = vmatmul.bf16.gmra.mxu0 %v1263
  %v1353 = vpop.f32.mrf.mxu0
  %v1354 = vadd.f32 0.0, %v1353
  %v1355 = vpop.f32.mrf.mxu0
  %v1356 = vadd.f32 0.0, %v1355
  %1357 = vmatmul.bf16.gmra.mxu0 %v1265
  %v1358 = vpop.f32.mrf.mxu0
  %v1359 = vadd.f32 0.0, %v1358
  %v1360 = vpop.f32.mrf.mxu0
  %v1361 = vadd.f32 0.0, %v1360
  %1362 = vmatmul.bf16.gmra.mxu0 %v1267
  %v1363 = vpop.f32.mrf.mxu0
  %v1364 = vadd.f32 0.0, %v1363
  %v1365 = vpop.f32.mrf.mxu0
  %v1366 = vadd.f32 0.0, %v1365
  %1367 = vmatmul.bf16.gmra.mxu0 %v1269
  %v1368 = vpop.f32.mrf.mxu0
  %v1369 = vadd.f32 0.0, %v1368
  %v1370 = vpop.f32.mrf.mxu0
  %v1371 = vadd.f32 0.0, %v1370
  %1372 = vmatmul.bf16.gmra.mxu0 %v1271
  %v1373 = vpop.f32.mrf.mxu0
  %v1374 = vadd.f32 0.0, %v1373
  %v1375 = vpop.f32.mrf.mxu0
  %v1376 = vadd.f32 0.0, %v1375
  %1377 = vmatmul.bf16.gmra.mxu0 %v1273
  %v1378 = vpop.f32.mrf.mxu0
  %v1379 = vadd.f32 0.0, %v1378
  %v1380 = vpop.f32.mrf.mxu0
  %v1381 = vadd.f32 0.0, %v1380
  %1382 = vmatmul.bf16.gmra.mxu0 %v1275
  %v1383 = vpop.f32.mrf.mxu0
  %v1384 = vadd.f32 0.0, %v1383
  %v1385 = vpop.f32.mrf.mxu0
  %v1386 = vadd.f32 0.0, %v1385
  %1387 = vmatmul.bf16.gmra.mxu0 %v1277
  %v1388 = vpop.f32.mrf.mxu0
  %v1389 = vadd.f32 0.0, %v1388
  %v1390 = vpop.f32.mrf.mxu0
  %v1391 = vadd.f32 0.0, %v1390
  %1392 = vmatmul.bf16.gmra.mxu0 %v1279
  %v1393 = vpop.f32.mrf.mxu0
  %v1394 = vadd.f32 0.0, %v1393
  %v1395 = vpop.f32.mrf.mxu0
  %v1396 = vadd.f32 0.0, %v1395
  %1397 = vdwg.mxu0
  %1398 = vmatpush.bf16.msra.mxu0 0
  %1399 = vmatpush.bf16.msra.mxu0 0
  %1400 = vmatpush.bf16.msra.mxu0 0
  %1401 = vmatpush.bf16.msra.mxu0 0
  %1402 = vmatpush.bf16.msra.mxu0 0
  %1403 = vmatpush.bf16.msra.mxu0 0
  %1404 = vmatpush.bf16.msra.mxu0 0
  %1405 = vmatpush.bf16.msra.mxu0 %v310
  %1406 = vmatmul.bf16.gmra.mxu0 %v1294
  %v1407 = vpop.f32.mrf.mxu0
  %v1408 = vadd.f32 %v1339, %v1407
  %v1409 = vpop.f32.mrf.mxu0
  %v1410 = vadd.f32 %v1341, %v1409
  %1411 = vmatmul.bf16.gmra.mxu0 %v1297
  %v1412 = vpop.f32.mrf.mxu0
  %v1413 = vadd.f32 %v1344, %v1412
  %v1414 = vpop.f32.mrf.mxu0
  %v1415 = vadd.f32 %v1346, %v1414
  %1416 = vmatmul.bf16.gmra.mxu0 %v1300
  %v1417 = vpop.f32.mrf.mxu0
  %v1418 = vadd.f32 %v1349, %v1417
  %v1419 = vpop.f32.mrf.mxu0
  %v1420 = vadd.f32 %v1351, %v1419
  %1421 = vmatmul.bf16.gmra.mxu0 %v1303
  %v1422 = vpop.f32.mrf.mxu0
  %v1423 = vadd.f32 %v1354, %v1422
  %v1424 = vpop.f32.mrf.mxu0
  %v1425 = vadd.f32 %v1356, %v1424
  %1426 = vmatmul.bf16.gmra.mxu0 %v1306
  %v1427 = vpop.f32.mrf.mxu0
  %v1428 = vadd.f32 %v1359, %v1427
  %v1429 = vpop.f32.mrf.mxu0
  %v1430 = vadd.f32 %v1361, %v1429
  %1431 = vmatmul.bf16.gmra.mxu0 %v1309
  %v1432 = vpop.f32.mrf.mxu0
  %v1433 = vadd.f32 %v1364, %v1432
  %v1434 = vpop.f32.mrf.mxu0
  %v1435 = vadd.f32 %v1366, %v1434
  %1436 = vmatmul.bf16.gmra.mxu0 %v1312
  %v1437 = vpop.f32.mrf.mxu0
  %v1438 = vadd.f32 %v1369, %v1437
  %v1439 = vpop.f32.mrf.mxu0
  %v1440 = vadd.f32 %v1371, %v1439
  %1441 = vmatmul.bf16.gmra.mxu0 %v1315
  %v1442 = vpop.f32.mrf.mxu0
  %v1443 = vadd.f32 %v1374, %v1442
  %v1444 = vpop.f32.mrf.mxu0
  %v1445 = vadd.f32 %v1376, %v1444
  %1446 = vmatmul.bf16.gmra.mxu0 %v1318
  %v1447 = vpop.f32.mrf.mxu0
  %v1448 = vadd.f32 %v1379, %v1447
  %v1449 = vpop.f32.mrf.mxu0
  %v1450 = vadd.f32 %v1381, %v1449
  %1451 = vmatmul.bf16.gmra.mxu0 %v1321
  %v1452 = vpop.f32.mrf.mxu0
  %v1453 = vadd.f32 %v1384, %v1452
  %v1454 = vpop.f32.mrf.mxu0
  %v1455 = vadd.f32 %v1386, %v1454
  %1456 = vmatmul.bf16.gmra.mxu0 %v1324
  %v1457 = vpop.f32.mrf.mxu0
  %v1458 = vadd.f32 %v1389, %v1457
  %v1459 = vpop.f32.mrf.mxu0
  %v1460 = vadd.f32 %v1391, %v1459
  %1461 = vmatmul.bf16.gmra.mxu0 %v1327
  %v1462 = vpop.f32.mrf.mxu0
  %v1463 = vadd.f32 %v1394, %v1462
  %v1464 = vpop.f32.mrf.mxu0
  %v1465 = vadd.f32 %v1396, %v1464
  %1466 = vdwg.mxu0
  %1467 = vmatpush.bf16.msra.mxu0 %v252
  %1468 = vmatpush.bf16.msra.mxu0 %v250
  %1469 = vmatpush.bf16.msra.mxu0 %v248
  %1470 = vmatpush.bf16.msra.mxu0 %v246
  %1471 = vmatpush.bf16.msra.mxu0 %v244
  %1472 = vmatpush.bf16.msra.mxu0 %v242
  %1473 = vmatpush.bf16.msra.mxu0 %v240
  %1474 = vmatpush.bf16.msra.mxu0 %v238
  %1475 = vmatmul.bf16.gmra.mxu0 %v1257
  %v1476 = vpop.f32.mrf.mxu0
  %v1477 = vadd.f32 0.0, %v1476
  %v1478 = vpop.f32.mrf.mxu0
  %v1479 = vadd.f32 0.0, %v1478
  %1480 = vmatmul.bf16.gmra.mxu0 %v1259
  %v1481 = vpop.f32.mrf.mxu0
  %v1482 = vadd.f32 0.0, %v1481
  %v1483 = vpop.f32.mrf.mxu0
  %v1484 = vadd.f32 0.0, %v1483
  %1485 = vmatmul.bf16.gmra.mxu0 %v1261
  %v1486 = vpop.f32.mrf.mxu0
  %v1487 = vadd.f32 0.0, %v1486
  %v1488 = vpop.f32.mrf.mxu0
  %v1489 = vadd.f32 0.0, %v1488
  %1490 = vmatmul.bf16.gmra.mxu0 %v1263
  %v1491 = vpop.f32.mrf.mxu0
  %v1492 = vadd.f32 0.0, %v1491
  %v1493 = vpop.f32.mrf.mxu0
  %v1494 = vadd.f32 0.0, %v1493
  %1495 = vmatmul.bf16.gmra.mxu0 %v1265
  %v1496 = vpop.f32.mrf.mxu0
  %v1497 = vadd.f32 0.0, %v1496
  %v1498 = vpop.f32.mrf.mxu0
  %v1499 = vadd.f32 0.0, %v1498
  %1500 = vmatmul.bf16.gmra.mxu0 %v1267
  %v1501 = vpop.f32.mrf.mxu0
  %v1502 = vadd.f32 0.0, %v1501
  %v1503 = vpop.f32.mrf.mxu0
  %v1504 = vadd.f32 0.0, %v1503
  %1505 = vmatmul.bf16.gmra.mxu0 %v1269
  %v1506 = vpop.f32.mrf.mxu0
  %v1507 = vadd.f32 0.0, %v1506
  %v1508 = vpop.f32.mrf.mxu0
  %v1509 = vadd.f32 0.0, %v1508
  %1510 = vmatmul.bf16.gmra.mxu0 %v1271
  %v1511 = vpop.f32.mrf.mxu0
  %v1512 = vadd.f32 0.0, %v1511
  %v1513 = vpop.f32.mrf.mxu0
  %v1514 = vadd.f32 0.0, %v1513
  %1515 = vmatmul.bf16.gmra.mxu0 %v1273
  %v1516 = vpop.f32.mrf.mxu0
  %v1517 = vadd.f32 0.0, %v1516
  %v1518 = vpop.f32.mrf.mxu0
  %v1519 = vadd.f32 0.0, %v1518
  %1520 = vmatmul.bf16.gmra.mxu0 %v1275
  %v1521 = vpop.f32.mrf.mxu0
  %v1522 = vadd.f32 0.0, %v1521
  %v1523 = vpop.f32.mrf.mxu0
  %v1524 = vadd.f32 0.0, %v1523
  %1525 = vmatmul.bf16.gmra.mxu0 %v1277
  %v1526 = vpop.f32.mrf.mxu0
  %v1527 = vadd.f32 0.0, %v1526
  %v1528 = vpop.f32.mrf.mxu0
  %v1529 = vadd.f32 0.0, %v1528
  %1530 = vmatmul.bf16.gmra.mxu0 %v1279
  %v1531 = vpop.f32.mrf.mxu0
  %v1532 = vadd.f32 0.0, %v1531
  %v1533 = vpop.f32.mrf.mxu0
  %v1534 = vadd.f32 0.0, %v1533
  %1535 = vdwg.mxu0
  %1536 = vmatpush.bf16.msra.mxu0 0
  %1537 = vmatpush.bf16.msra.mxu0 0
  %1538 = vmatpush.bf16.msra.mxu0 0
  %1539 = vmatpush.bf16.msra.mxu0 0
  %1540 = vmatpush.bf16.msra.mxu0 0
  %1541 = vmatpush.bf16.msra.mxu0 0
  %1542 = vmatpush.bf16.msra.mxu0 0
  %1543 = vmatpush.bf16.msra.mxu0 %v313
  %1544 = vmatmul.bf16.gmra.mxu0 %v1294
  %v1545 = vpop.f32.mrf.mxu0
  %v1546 = vadd.f32 %v1477, %v1545
  %v1547 = vpop.f32.mrf.mxu0
  %v1548 = vadd.f32 %v1479, %v1547
  %1549 = vmatmul.bf16.gmra.mxu0 %v1297
  %v1550 = vpop.f32.mrf.mxu0
  %v1551 = vadd.f32 %v1482, %v1550
  %v1552 = vpop.f32.mrf.mxu0
  %v1553 = vadd.f32 %v1484, %v1552
  %1554 = vmatmul.bf16.gmra.mxu0 %v1300
  %v1555 = vpop.f32.mrf.mxu0
  %v1556 = vadd.f32 %v1487, %v1555
  %v1557 = vpop.f32.mrf.mxu0
  %v1558 = vadd.f32 %v1489, %v1557
  %1559 = vmatmul.bf16.gmra.mxu0 %v1303
  %v1560 = vpop.f32.mrf.mxu0
  %v1561 = vadd.f32 %v1492, %v1560
  %v1562 = vpop.f32.mrf.mxu0
  %v1563 = vadd.f32 %v1494, %v1562
  %1564 = vmatmul.bf16.gmra.mxu0 %v1306
  %v1565 = vpop.f32.mrf.mxu0
  %v1566 = vadd.f32 %v1497, %v1565
  %v1567 = vpop.f32.mrf.mxu0
  %v1568 = vadd.f32 %v1499, %v1567
  %1569 = vmatmul.bf16.gmra.mxu0 %v1309
  %v1570 = vpop.f32.mrf.mxu0
  %v1571 = vadd.f32 %v1502, %v1570
  %v1572 = vpop.f32.mrf.mxu0
  %v1573 = vadd.f32 %v1504, %v1572
  %1574 = vmatmul.bf16.gmra.mxu0 %v1312
  %v1575 = vpop.f32.mrf.mxu0
  %v1576 = vadd.f32 %v1507, %v1575
  %v1577 = vpop.f32.mrf.mxu0
  %v1578 = vadd.f32 %v1509, %v1577
  %1579 = vmatmul.bf16.gmra.mxu0 %v1315
  %v1580 = vpop.f32.mrf.mxu0
  %v1581 = vadd.f32 %v1512, %v1580
  %v1582 = vpop.f32.mrf.mxu0
  %v1583 = vadd.f32 %v1514, %v1582
  %1584 = vmatmul.bf16.gmra.mxu0 %v1318
  %v1585 = vpop.f32.mrf.mxu0
  %v1586 = vadd.f32 %v1517, %v1585
  %v1587 = vpop.f32.mrf.mxu0
  %v1588 = vadd.f32 %v1519, %v1587
  %1589 = vmatmul.bf16.gmra.mxu0 %v1321
  %v1590 = vpop.f32.mrf.mxu0
  %v1591 = vadd.f32 %v1522, %v1590
  %v1592 = vpop.f32.mrf.mxu0
  %v1593 = vadd.f32 %v1524, %v1592
  %1594 = vmatmul.bf16.gmra.mxu0 %v1324
  %v1595 = vpop.f32.mrf.mxu0
  %v1596 = vadd.f32 %v1527, %v1595
  %v1597 = vpop.f32.mrf.mxu0
  %v1598 = vadd.f32 %v1529, %v1597
  %1599 = vmatmul.bf16.gmra.mxu0 %v1327
  %v1600 = vpop.f32.mrf.mxu0
  %v1601 = vadd.f32 %v1532, %v1600
  %v1602 = vpop.f32.mrf.mxu0
  %v1603 = vadd.f32 %v1534, %v1602
  %1604 = vdwg.mxu0
  %v1605 = vmax.f32 %v1408, %v1546
  %v1606 = vmax.f32 %v1410, %v1548
  %v1607 = vmax.f32 %v1413, %v1551
  %v1608 = vmax.f32 %v1415, %v1553
  %v1609 = vmax.f32 %v1418, %v1556
  %v1610 = vmax.f32 %v1420, %v1558
  %v1611 = vmax.f32 %v1423, %v1561
  %v1612 = vmax.f32 %v1425, %v1563
  %v1613 = vmax.f32 %v1428, %v1566
  %v1614 = vmax.f32 %v1430, %v1568
  %v1615 = vmax.f32 %v1433, %v1571
  %v1616 = vmax.f32 %v1435, %v1573
  %v1617 = vmax.f32 %v1438, %v1576
  %v1618 = vmax.f32 %v1440, %v1578
  %v1619 = vmax.f32 %v1443, %v1581
  %v1620 = vmax.f32 %v1445, %v1583
  %v1621 = vmax.f32 %v1448, %v1586
  %v1622 = vmax.f32 %v1450, %v1588
  %v1623 = vmax.f32 %v1453, %v1591
  %v1624 = vmax.f32 %v1455, %v1593
  %v1625 = vmax.f32 %v1458, %v1596
  %v1626 = vmax.f32 %v1460, %v1598
  %v1627 = vmax.f32 %v1463, %v1601
  %v1628 = vmax.f32 %v1465, %v1603
  %s1629 = scalar_lea.vmem %s0, 576
  %v1630 = vld [vmem:[%s1629] sm:$0xff]
  %v1631 = vld [vmem:[%s1629 + $0x8] sm:$0xff]
  %v1632 = vld [vmem:[%s1629 + $0x10] sm:$0xff]
  %v1633 = vld [vmem:[%s1629 + $0x18] sm:$0xff]
  %v1634 = vld [vmem:[%s1629 + $0x20] sm:$0xff]
  %v1635 = vld [vmem:[%s1629 + $0x28] sm:$0xff]
  %v1636 = vld [vmem:[%s1629 + $0x30] sm:$0xff]
  %v1637 = vld [vmem:[%s1629 + $0x38] sm:$0xff]
  %v1638 = vld [vmem:[%s1629 + $0x40] sm:$0xff]
  %v1639 = vld [vmem:[%s1629 + $0x48] sm:$0xff]
  %v1640 = vld [vmem:[%s1629 + $0x50] sm:$0xff]
  %v1641 = vld [vmem:[%s1629 + $0x58] sm:$0xff]
  %v1642 = vld [vmem:[%s1629 + $0x60] sm:$0xff]
  %v1643 = vld [vmem:[%s1629 + $0x68] sm:$0xff]
  %v1644 = vld [vmem:[%s1629 + $0x70] sm:$0xff]
  %v1645 = vld [vmem:[%s1629 + $0x78] sm:$0xff]
  %v1646 = vld [vmem:[%s1629 + $0x80] sm:$0xff]
  %v1647 = vld [vmem:[%s1629 + $0x88] sm:$0xff]
  %v1648 = vld [vmem:[%s1629 + $0x90] sm:$0xff]
  %v1649 = vld [vmem:[%s1629 + $0x98] sm:$0xff]
  %v1650 = vld [vmem:[%s1629 + $0xa0] sm:$0xff]
  %v1651 = vld [vmem:[%s1629 + $0xa8] sm:$0xff]
  %v1652 = vld [vmem:[%s1629 + $0xb0] sm:$0xff]
  %v1653 = vld [vmem:[%s1629 + $0xb8] sm:$0xff]
  %v1678 = vunpack.c.l.b16 %v1630
  %v1679 = vunpack.c.h.b16 %v1630
  %v1680 = vunpack.c.l.b16 %v1631
  %v1681 = vunpack.c.h.b16 %v1631
  %v1682 = vunpack.c.l.b16 %v1632
  %v1683 = vunpack.c.h.b16 %v1632
  %v1684 = vunpack.c.l.b16 %v1633
  %v1685 = vunpack.c.h.b16 %v1633
  %v1686 = vunpack.c.l.b16 %v1634
  %v1687 = vunpack.c.h.b16 %v1634
  %v1688 = vunpack.c.l.b16 %v1635
  %v1689 = vunpack.c.h.b16 %v1635
  %v1690 = vunpack.c.l.b16 %v1636
  %v1691 = vunpack.c.h.b16 %v1636
  %v1692 = vunpack.c.l.b16 %v1637
  %v1693 = vunpack.c.h.b16 %v1637
  %v1694 = vunpack.c.l.b16 %v1638
  %v1695 = vunpack.c.h.b16 %v1638
  %v1696 = vunpack.c.l.b16 %v1639
  %v1697 = vunpack.c.h.b16 %v1639
  %v1698 = vunpack.c.l.b16 %v1640
  %v1699 = vunpack.c.h.b16 %v1640
  %v1700 = vunpack.c.l.b16 %v1641
  %v1701 = vunpack.c.h.b16 %v1641
  %v1702 = vunpack.c.l.b16 %v1642
  %v1703 = vunpack.c.h.b16 %v1642
  %v1704 = vunpack.c.l.b16 %v1643
  %v1705 = vunpack.c.h.b16 %v1643
  %v1706 = vunpack.c.l.b16 %v1644
  %v1707 = vunpack.c.h.b16 %v1644
  %v1708 = vunpack.c.l.b16 %v1645
  %v1709 = vunpack.c.h.b16 %v1645
  %v1710 = vunpack.c.l.b16 %v1646
  %v1711 = vunpack.c.h.b16 %v1646
  %v1712 = vunpack.c.l.b16 %v1647
  %v1713 = vunpack.c.h.b16 %v1647
  %v1714 = vunpack.c.l.b16 %v1648
  %v1715 = vunpack.c.h.b16 %v1648
  %v1716 = vunpack.c.l.b16 %v1649
  %v1717 = vunpack.c.h.b16 %v1649
  %v1718 = vunpack.c.l.b16 %v1650
  %v1719 = vunpack.c.h.b16 %v1650
  %v1720 = vunpack.c.l.b16 %v1651
  %v1721 = vunpack.c.h.b16 %v1651
  %v1722 = vunpack.c.l.b16 %v1652
  %v1723 = vunpack.c.h.b16 %v1652
  %v1724 = vunpack.c.l.b16 %v1653
  %v1725 = vunpack.c.h.b16 %v1653
  %v1726 = vpack.c.b16 %v1680, %v1678
  %v1727 = vpack.c.b16 %v1681, %v1679
  %v1728 = vpack.c.b16 %v1684, %v1682
  %v1729 = vpack.c.b16 %v1685, %v1683
  %v1730 = vpack.c.b16 %v1688, %v1686
  %v1731 = vpack.c.b16 %v1689, %v1687
  %v1732 = vpack.c.b16 %v1692, %v1690
  %v1733 = vpack.c.b16 %v1693, %v1691
  %v1734 = vpack.c.b16 %v1696, %v1694
  %v1735 = vpack.c.b16 %v1697, %v1695
  %v1736 = vpack.c.b16 %v1700, %v1698
  %v1737 = vpack.c.b16 %v1701, %v1699
  %v1738 = vpack.c.b16 %v1704, %v1702
  %v1739 = vpack.c.b16 %v1705, %v1703
  %v1740 = vpack.c.b16 %v1708, %v1706
  %v1741 = vpack.c.b16 %v1709, %v1707
  %v1742 = vpack.c.b16 %v1712, %v1710
  %v1743 = vpack.c.b16 %v1713, %v1711
  %v1744 = vpack.c.b16 %v1716, %v1714
  %v1745 = vpack.c.b16 %v1717, %v1715
  %v1746 = vpack.c.b16 %v1720, %v1718
  %v1747 = vpack.c.b16 %v1721, %v1719
  %v1748 = vpack.c.b16 %v1724, %v1722
  %v1749 = vpack.c.b16 %v1725, %v1723
  %v1763 = vsel %vm271, %v1727, 0
  %v1766 = vsel %vm271, %v1729, 0
  %v1769 = vsel %vm271, %v1731, 0
  %v1772 = vsel %vm271, %v1733, 0
  %v1775 = vsel %vm271, %v1735, 0
  %v1778 = vsel %vm271, %v1737, 0
  %v1781 = vsel %vm271, %v1739, 0
  %v1784 = vsel %vm271, %v1741, 0
  %v1787 = vsel %vm271, %v1743, 0
  %v1790 = vsel %vm271, %v1745, 0
  %v1793 = vsel %vm271, %v1747, 0
  %v1796 = vsel %vm271, %v1749, 0
  %1798 = vmatpush.bf16.msra.mxu0 %v251
  %1799 = vmatpush.bf16.msra.mxu0 %v249
  %1800 = vmatpush.bf16.msra.mxu0 %v247
  %1801 = vmatpush.bf16.msra.mxu0 %v245
  %1802 = vmatpush.bf16.msra.mxu0 %v243
  %1803 = vmatpush.bf16.msra.mxu0 %v241
  %1804 = vmatpush.bf16.msra.mxu0 %v239
  %1805 = vmatpush.bf16.msra.mxu0 %v237
  %1806 = vmatmul.bf16.gmra.mxu0 %v1726
  %v1807 = vpop.f32.mrf.mxu0
  %v1808 = vadd.f32 0.0, %v1807
  %v1809 = vpop.f32.mrf.mxu0
  %v1810 = vadd.f32 0.0, %v1809
  %1811 = vmatmul.bf16.gmra.mxu0 %v1728
  %v1812 = vpop.f32.mrf.mxu0
  %v1813 = vadd.f32 0.0, %v1812
  %v1814 = vpop.f32.mrf.mxu0
  %v1815 = vadd.f32 0.0, %v1814
  %1816 = vmatmul.bf16.gmra.mxu0 %v1730
  %v1817 = vpop.f32.mrf.mxu0
  %v1818 = vadd.f32 0.0, %v1817
  %v1819 = vpop.f32.mrf.mxu0
  %v1820 = vadd.f32 0.0, %v1819
  %1821 = vmatmul.bf16.gmra.mxu0 %v1732
  %v1822 = vpop.f32.mrf.mxu0
  %v1823 = vadd.f32 0.0, %v1822
  %v1824 = vpop.f32.mrf.mxu0
  %v1825 = vadd.f32 0.0, %v1824
  %1826 = vmatmul.bf16.gmra.mxu0 %v1734
  %v1827 = vpop.f32.mrf.mxu0
  %v1828 = vadd.f32 0.0, %v1827
  %v1829 = vpop.f32.mrf.mxu0
  %v1830 = vadd.f32 0.0, %v1829
  %1831 = vmatmul.bf16.gmra.mxu0 %v1736
  %v1832 = vpop.f32.mrf.mxu0
  %v1833 = vadd.f32 0.0, %v1832
  %v1834 = vpop.f32.mrf.mxu0
  %v1835 = vadd.f32 0.0, %v1834
  %1836 = vmatmul.bf16.gmra.mxu0 %v1738
  %v1837 = vpop.f32.mrf.mxu0
  %v1838 = vadd.f32 0.0, %v1837
  %v1839 = vpop.f32.mrf.mxu0
  %v1840 = vadd.f32 0.0, %v1839
  %1841 = vmatmul.bf16.gmra.mxu0 %v1740
  %v1842 = vpop.f32.mrf.mxu0
  %v1843 = vadd.f32 0.0, %v1842
  %v1844 = vpop.f32.mrf.mxu0
  %v1845 = vadd.f32 0.0, %v1844
  %1846 = vmatmul.bf16.gmra.mxu0 %v1742
  %v1847 = vpop.f32.mrf.mxu0
  %v1848 = vadd.f32 0.0, %v1847
  %v1849 = vpop.f32.mrf.mxu0
  %v1850 = vadd.f32 0.0, %v1849
  %1851 = vmatmul.bf16.gmra.mxu0 %v1744
  %v1852 = vpop.f32.mrf.mxu0
  %v1853 = vadd.f32 0.0, %v1852
  %v1854 = vpop.f32.mrf.mxu0
  %v1855 = vadd.f32 0.0, %v1854
  %1856 = vmatmul.bf16.gmra.mxu0 %v1746
  %v1857 = vpop.f32.mrf.mxu0
  %v1858 = vadd.f32 0.0, %v1857
  %v1859 = vpop.f32.mrf.mxu0
  %v1860 = vadd.f32 0.0, %v1859
  %1861 = vmatmul.bf16.gmra.mxu0 %v1748
  %v1862 = vpop.f32.mrf.mxu0
  %v1863 = vadd.f32 0.0, %v1862
  %v1864 = vpop.f32.mrf.mxu0
  %v1865 = vadd.f32 0.0, %v1864
  %1866 = vdwg.mxu0
  %1867 = vmatpush.bf16.msra.mxu0 0
  %1868 = vmatpush.bf16.msra.mxu0 0
  %1869 = vmatpush.bf16.msra.mxu0 0
  %1870 = vmatpush.bf16.msra.mxu0 0
  %1871 = vmatpush.bf16.msra.mxu0 0
  %1872 = vmatpush.bf16.msra.mxu0 0
  %1873 = vmatpush.bf16.msra.mxu0 0
  %1874 = vmatpush.bf16.msra.mxu0 %v310
  %1875 = vmatmul.bf16.gmra.mxu0 %v1763
  %v1876 = vpop.f32.mrf.mxu0
  %v1877 = vadd.f32 %v1808, %v1876
  %v1878 = vpop.f32.mrf.mxu0
  %v1879 = vadd.f32 %v1810, %v1878
  %1880 = vmatmul.bf16.gmra.mxu0 %v1766
  %v1881 = vpop.f32.mrf.mxu0
  %v1882 = vadd.f32 %v1813, %v1881
  %v1883 = vpop.f32.mrf.mxu0
  %v1884 = vadd.f32 %v1815, %v1883
  %1885 = vmatmul.bf16.gmra.mxu0 %v1769
  %v1886 = vpop.f32.mrf.mxu0
  %v1887 = vadd.f32 %v1818, %v1886
  %v1888 = vpop.f32.mrf.mxu0
  %v1889 = vadd.f32 %v1820, %v1888
  %1890 = vmatmul.bf16.gmra.mxu0 %v1772
  %v1891 = vpop.f32.mrf.mxu0
  %v1892 = vadd.f32 %v1823, %v1891
  %v1893 = vpop.f32.mrf.mxu0
  %v1894 = vadd.f32 %v1825, %v1893
  %1895 = vmatmul.bf16.gmra.mxu0 %v1775
  %v1896 = vpop.f32.mrf.mxu0
  %v1897 = vadd.f32 %v1828, %v1896
  %v1898 = vpop.f32.mrf.mxu0
  %v1899 = vadd.f32 %v1830, %v1898
  %1900 = vmatmul.bf16.gmra.mxu0 %v1778
  %v1901 = vpop.f32.mrf.mxu0
  %v1902 = vadd.f32 %v1833, %v1901
  %v1903 = vpop.f32.mrf.mxu0
  %v1904 = vadd.f32 %v1835, %v1903
  %1905 = vmatmul.bf16.gmra.mxu0 %v1781
  %v1906 = vpop.f32.mrf.mxu0
  %v1907 = vadd.f32 %v1838, %v1906
  %v1908 = vpop.f32.mrf.mxu0
  %v1909 = vadd.f32 %v1840, %v1908
  %1910 = vmatmul.bf16.gmra.mxu0 %v1784
  %v1911 = vpop.f32.mrf.mxu0
  %v1912 = vadd.f32 %v1843, %v1911
  %v1913 = vpop.f32.mrf.mxu0
  %v1914 = vadd.f32 %v1845, %v1913
  %1915 = vmatmul.bf16.gmra.mxu0 %v1787
  %v1916 = vpop.f32.mrf.mxu0
  %v1917 = vadd.f32 %v1848, %v1916
  %v1918 = vpop.f32.mrf.mxu0
  %v1919 = vadd.f32 %v1850, %v1918
  %1920 = vmatmul.bf16.gmra.mxu0 %v1790
  %v1921 = vpop.f32.mrf.mxu0
  %v1922 = vadd.f32 %v1853, %v1921
  %v1923 = vpop.f32.mrf.mxu0
  %v1924 = vadd.f32 %v1855, %v1923
  %1925 = vmatmul.bf16.gmra.mxu0 %v1793
  %v1926 = vpop.f32.mrf.mxu0
  %v1927 = vadd.f32 %v1858, %v1926
  %v1928 = vpop.f32.mrf.mxu0
  %v1929 = vadd.f32 %v1860, %v1928
  %1930 = vmatmul.bf16.gmra.mxu0 %v1796
  %v1931 = vpop.f32.mrf.mxu0
  %v1932 = vadd.f32 %v1863, %v1931
  %v1933 = vpop.f32.mrf.mxu0
  %v1934 = vadd.f32 %v1865, %v1933
  %1935 = vdwg.mxu0
  %1936 = vmatpush.bf16.msra.mxu0 %v252
  %1937 = vmatpush.bf16.msra.mxu0 %v250
  %1938 = vmatpush.bf16.msra.mxu0 %v248
  %1939 = vmatpush.bf16.msra.mxu0 %v246
  %1940 = vmatpush.bf16.msra.mxu0 %v244
  %1941 = vmatpush.bf16.msra.mxu0 %v242
  %1942 = vmatpush.bf16.msra.mxu0 %v240
  %1943 = vmatpush.bf16.msra.mxu0 %v238
  %1944 = vmatmul.bf16.gmra.mxu0 %v1726
  %v1945 = vpop.f32.mrf.mxu0
  %v1946 = vadd.f32 0.0, %v1945
  %v1947 = vpop.f32.mrf.mxu0
  %v1948 = vadd.f32 0.0, %v1947
  %1949 = vmatmul.bf16.gmra.mxu0 %v1728
  %v1950 = vpop.f32.mrf.mxu0
  %v1951 = vadd.f32 0.0, %v1950
  %v1952 = vpop.f32.mrf.mxu0
  %v1953 = vadd.f32 0.0, %v1952
  %1954 = vmatmul.bf16.gmra.mxu0 %v1730
  %v1955 = vpop.f32.mrf.mxu0
  %v1956 = vadd.f32 0.0, %v1955
  %v1957 = vpop.f32.mrf.mxu0
  %v1958 = vadd.f32 0.0, %v1957
  %1959 = vmatmul.bf16.gmra.mxu0 %v1732
  %v1960 = vpop.f32.mrf.mxu0
  %v1961 = vadd.f32 0.0, %v1960
  %v1962 = vpop.f32.mrf.mxu0
  %v1963 = vadd.f32 0.0, %v1962
  %1964 = vmatmul.bf16.gmra.mxu0 %v1734
  %v1965 = vpop.f32.mrf.mxu0
  %v1966 = vadd.f32 0.0, %v1965
  %v1967 = vpop.f32.mrf.mxu0
  %v1968 = vadd.f32 0.0, %v1967
  %1969 = vmatmul.bf16.gmra.mxu0 %v1736
  %v1970 = vpop.f32.mrf.mxu0
  %v1971 = vadd.f32 0.0, %v1970
  %v1972 = vpop.f32.mrf.mxu0
  %v1973 = vadd.f32 0.0, %v1972
  %1974 = vmatmul.bf16.gmra.mxu0 %v1738
  %v1975 = vpop.f32.mrf.mxu0
  %v1976 = vadd.f32 0.0, %v1975
  %v1977 = vpop.f32.mrf.mxu0
  %v1978 = vadd.f32 0.0, %v1977
  %1979 = vmatmul.bf16.gmra.mxu0 %v1740
  %v1980 = vpop.f32.mrf.mxu0
  %v1981 = vadd.f32 0.0, %v1980
  %v1982 = vpop.f32.mrf.mxu0
  %v1983 = vadd.f32 0.0, %v1982
  %1984 = vmatmul.bf16.gmra.mxu0 %v1742
  %v1985 = vpop.f32.mrf.mxu0
  %v1986 = vadd.f32 0.0, %v1985
  %v1987 = vpop.f32.mrf.mxu0
  %v1988 = vadd.f32 0.0, %v1987
  %1989 = vmatmul.bf16.gmra.mxu0 %v1744
  %v1990 = vpop.f32.mrf.mxu0
  %v1991 = vadd.f32 0.0, %v1990
  %v1992 = vpop.f32.mrf.mxu0
  %v1993 = vadd.f32 0.0, %v1992
  %1994 = vmatmul.bf16.gmra.mxu0 %v1746
  %v1995 = vpop.f32.mrf.mxu0
  %v1996 = vadd.f32 0.0, %v1995
  %v1997 = vpop.f32.mrf.mxu0
  %v1998 = vadd.f32 0.0, %v1997
  %1999 = vmatmul.bf16.gmra.mxu0 %v1748
  %v2000 = vpop.f32.mrf.mxu0
  %v2001 = vadd.f32 0.0, %v2000
  %v2002 = vpop.f32.mrf.mxu0
  %v2003 = vadd.f32 0.0, %v2002
  %2004 = vdwg.mxu0
  %2005 = vmatpush.bf16.msra.mxu0 0
  %2006 = vmatpush.bf16.msra.mxu0 0
  %2007 = vmatpush.bf16.msra.mxu0 0
  %2008 = vmatpush.bf16.msra.mxu0 0
  %2009 = vmatpush.bf16.msra.mxu0 0
  %2010 = vmatpush.bf16.msra.mxu0 0
  %2011 = vmatpush.bf16.msra.mxu0 0
  %2012 = vmatpush.bf16.msra.mxu0 %v313
  %2013 = vmatmul.bf16.gmra.mxu0 %v1763
  %v2014 = vpop.f32.mrf.mxu0
  %v2015 = vadd.f32 %v1946, %v2014
  %v2016 = vpop.f32.mrf.mxu0
  %v2017 = vadd.f32 %v1948, %v2016
  %2018 = vmatmul.bf16.gmra.mxu0 %v1766
  %v2019 = vpop.f32.mrf.mxu0
  %v2020 = vadd.f32 %v1951, %v2019
  %v2021 = vpop.f32.mrf.mxu0
  %v2022 = vadd.f32 %v1953, %v2021
  %2023 = vmatmul.bf16.gmra.mxu0 %v1769
  %v2024 = vpop.f32.mrf.mxu0
  %v2025 = vadd.f32 %v1956, %v2024
  %v2026 = vpop.f32.mrf.mxu0
  %v2027 = vadd.f32 %v1958, %v2026
  %2028 = vmatmul.bf16.gmra.mxu0 %v1772
  %v2029 = vpop.f32.mrf.mxu0
  %v2030 = vadd.f32 %v1961, %v2029
  %v2031 = vpop.f32.mrf.mxu0
  %v2032 = vadd.f32 %v1963, %v2031
  %2033 = vmatmul.bf16.gmra.mxu0 %v1775
  %v2034 = vpop.f32.mrf.mxu0
  %v2035 = vadd.f32 %v1966, %v2034
  %v2036 = vpop.f32.mrf.mxu0
  %v2037 = vadd.f32 %v1968, %v2036
  %2038 = vmatmul.bf16.gmra.mxu0 %v1778
  %v2039 = vpop.f32.mrf.mxu0
  %v2040 = vadd.f32 %v1971, %v2039
  %v2041 = vpop.f32.mrf.mxu0
  %v2042 = vadd.f32 %v1973, %v2041
  %2043 = vmatmul.bf16.gmra.mxu0 %v1781
  %v2044 = vpop.f32.mrf.mxu0
  %v2045 = vadd.f32 %v1976, %v2044
  %v2046 = vpop.f32.mrf.mxu0
  %v2047 = vadd.f32 %v1978, %v2046
  %2048 = vmatmul.bf16.gmra.mxu0 %v1784
  %v2049 = vpop.f32.mrf.mxu0
  %v2050 = vadd.f32 %v1981, %v2049
  %v2051 = vpop.f32.mrf.mxu0
  %v2052 = vadd.f32 %v1983, %v2051
  %2053 = vmatmul.bf16.gmra.mxu0 %v1787
  %v2054 = vpop.f32.mrf.mxu0
  %v2055 = vadd.f32 %v1986, %v2054
  %v2056 = vpop.f32.mrf.mxu0
  %v2057 = vadd.f32 %v1988, %v2056
  %2058 = vmatmul.bf16.gmra.mxu0 %v1790
  %v2059 = vpop.f32.mrf.mxu0
  %v2060 = vadd.f32 %v1991, %v2059
  %v2061 = vpop.f32.mrf.mxu0
  %v2062 = vadd.f32 %v1993, %v2061
  %2063 = vmatmul.bf16.gmra.mxu0 %v1793
  %v2064 = vpop.f32.mrf.mxu0
  %v2065 = vadd.f32 %v1996, %v2064
  %v2066 = vpop.f32.mrf.mxu0
  %v2067 = vadd.f32 %v1998, %v2066
  %2068 = vmatmul.bf16.gmra.mxu0 %v1796
  %v2069 = vpop.f32.mrf.mxu0
  %v2070 = vadd.f32 %v2001, %v2069
  %v2071 = vpop.f32.mrf.mxu0
  %v2072 = vadd.f32 %v2003, %v2071
  %2073 = vdwg.mxu0
  %v2074 = vmax.f32 %v1877, %v2015
  %v2075 = vmax.f32 %v1879, %v2017
  %v2076 = vmax.f32 %v1882, %v2020
  %v2077 = vmax.f32 %v1884, %v2022
  %v2078 = vmax.f32 %v1887, %v2025
  %v2079 = vmax.f32 %v1889, %v2027
  %v2080 = vmax.f32 %v1892, %v2030
  %v2081 = vmax.f32 %v1894, %v2032
  %v2082 = vmax.f32 %v1897, %v2035
  %v2083 = vmax.f32 %v1899, %v2037
  %v2084 = vmax.f32 %v1902, %v2040
  %v2085 = vmax.f32 %v1904, %v2042
  %v2086 = vmax.f32 %v1907, %v2045
  %v2087 = vmax.f32 %v1909, %v2047
  %v2088 = vmax.f32 %v1912, %v2050
  %v2089 = vmax.f32 %v1914, %v2052
  %v2090 = vmax.f32 %v1917, %v2055
  %v2091 = vmax.f32 %v1919, %v2057
  %v2092 = vmax.f32 %v1922, %v2060
  %v2093 = vmax.f32 %v1924, %v2062
  %v2094 = vmax.f32 %v1927, %v2065
  %v2095 = vmax.f32 %v1929, %v2067
  %v2096 = vmax.f32 %v1932, %v2070
  %v2097 = vmax.f32 %v1934, %v2072
  %v2098 = vmax.f32 %v1605, %v2074
  %v2099 = vmax.f32 %v1606, %v2075
  %v2100 = vmax.f32 %v1607, %v2076
  %v2101 = vmax.f32 %v1608, %v2077
  %v2102 = vmax.f32 %v1609, %v2078
  %v2103 = vmax.f32 %v1610, %v2079
  %v2104 = vmax.f32 %v1611, %v2080
  %v2105 = vmax.f32 %v1612, %v2081
  %v2106 = vmax.f32 %v1613, %v2082
  %v2107 = vmax.f32 %v1614, %v2083
  %v2108 = vmax.f32 %v1615, %v2084
  %v2109 = vmax.f32 %v1616, %v2085
  %v2110 = vmax.f32 %v1617, %v2086
  %v2111 = vmax.f32 %v1618, %v2087
  %v2112 = vmax.f32 %v1619, %v2088
  %v2113 = vmax.f32 %v1620, %v2089
  %v2114 = vmax.f32 %v1621, %v2090
  %v2115 = vmax.f32 %v1622, %v2091
  %v2116 = vmax.f32 %v1623, %v2092
  %v2117 = vmax.f32 %v1624, %v2093
  %v2118 = vmax.f32 %v1625, %v2094
  %v2119 = vmax.f32 %v1626, %v2095
  %v2120 = vmax.f32 %v1627, %v2096
  %v2121 = vmax.f32 %v1628, %v2097
  %v2122 = vadd.f32 %v2098, %v1110
  %v2123 = vadd.f32 %v2099, %v1110
  %v2124 = vadd.f32 %v2100, %v1110
  %v2125 = vadd.f32 %v2101, %v1110
  %v2126 = vadd.f32 %v2102, %v1110
  %v2127 = vadd.f32 %v2103, %v1110
  %v2128 = vadd.f32 %v2104, %v1110
  %v2129 = vadd.f32 %v2105, %v1110
  %v2130 = vadd.f32 %v2106, %v1110
  %v2131 = vadd.f32 %v2107, %v1110
  %v2132 = vadd.f32 %v2108, %v1110
  %v2133 = vadd.f32 %v2109, %v1110
  %v2134 = vadd.f32 %v2110, %v1110
  %v2135 = vadd.f32 %v2111, %v1110
  %v2136 = vadd.f32 %v2112, %v1110
  %v2137 = vadd.f32 %v2113, %v1110
  %v2138 = vadd.f32 %v2114, %v1110
  %v2139 = vadd.f32 %v2115, %v1110
  %v2140 = vadd.f32 %v2116, %v1110
  %v2141 = vadd.f32 %v2117, %v1110
  %v2142 = vadd.f32 %v2118, %v1110
  %v2143 = vadd.f32 %v2119, %v1110
  %v2144 = vadd.f32 %v2120, %v1110
  %v2145 = vadd.f32 %v2121, %v1110
  %v2146 = vmax.f32 %v2122, 0.0
  %v2147 = vmax.f32 %v2123, 0.0
  %v2148 = vmax.f32 %v2124, 0.0
  %v2149 = vmax.f32 %v2125, 0.0
  %v2150 = vmax.f32 %v2126, 0.0
  %v2151 = vmax.f32 %v2127, 0.0
  %v2152 = vmax.f32 %v2128, 0.0
  %v2153 = vmax.f32 %v2129, 0.0
  %v2154 = vmax.f32 %v2130, 0.0
  %v2155 = vmax.f32 %v2131, 0.0
  %v2156 = vmax.f32 %v2132, 0.0
  %v2157 = vmax.f32 %v2133, 0.0
  %v2158 = vmax.f32 %v2134, 0.0
  %v2159 = vmax.f32 %v2135, 0.0
  %v2160 = vmax.f32 %v2136, 0.0
  %v2161 = vmax.f32 %v2137, 0.0
  %v2162 = vmax.f32 %v2138, 0.0
  %v2163 = vmax.f32 %v2139, 0.0
  %v2164 = vmax.f32 %v2140, 0.0
  %v2165 = vmax.f32 %v2141, 0.0
  %v2166 = vmax.f32 %v2142, 0.0
  %v2167 = vmax.f32 %v2143, 0.0
  %v2168 = vmax.f32 %v2144, 0.0
  %v2169 = vmax.f32 %v2145, 0.0
  %v2170 = vpack.c.bf16 %v1136, %v1136
  %v2171 = vpack.c.bf16 %v1137, %v1137
  %v2172 = vpack.c.bf16 %v1138, %v1138
  %v2173 = vpack.c.bf16 %v1139, %v1139
  %v2174 = vpack.c.bf16 %v1140, %v1140
  %v2175 = vpack.c.bf16 %v1141, %v1141
  %v2176 = vpack.c.bf16 %v1142, %v1142
  %v2177 = vpack.c.bf16 %v1143, %v1143
  %v2178 = vpack.c.bf16 %v1144, %v1144
  %v2179 = vpack.c.bf16 %v1145, %v1145
  %v2180 = vpack.c.bf16 %v1146, %v1146
  %v2181 = vpack.c.bf16 %v1147, %v1147
  %v2182 = vpack.c.bf16 %v1148, %v1148
  %v2183 = vpack.c.bf16 %v1149, %v1149
  %v2184 = vpack.c.bf16 %v1150, %v1150
  %v2185 = vpack.c.bf16 %v1151, %v1151
  %v2186 = vpack.c.bf16 %v1152, %v1152
  %v2187 = vpack.c.bf16 %v1153, %v1153
  %v2188 = vpack.c.bf16 %v1154, %v1154
  %v2189 = vpack.c.bf16 %v1155, %v1155
  %v2190 = vpack.c.bf16 %v1156, %v1156
  %v2191 = vpack.c.bf16 %v1157, %v1157
  %v2192 = vpack.c.bf16 %v1158, %v1158
  %v2193 = vpack.c.bf16 %v1159, %v1159
  %v2194 = vpack.c.bf16 %v2146, %v2146
  %v2195 = vpack.c.bf16 %v2147, %v2147
  %v2196 = vpack.c.bf16 %v2148, %v2148
  %v2197 = vpack.c.bf16 %v2149, %v2149
  %v2198 = vpack.c.bf16 %v2150, %v2150
  %v2199 = vpack.c.bf16 %v2151, %v2151
  %v2200 = vpack.c.bf16 %v2152, %v2152
  %v2201 = vpack.c.bf16 %v2153, %v2153
  %v2202 = vpack.c.bf16 %v2154, %v2154
  %v2203 = vpack.c.bf16 %v2155, %v2155
  %v2204 = vpack.c.bf16 %v2156, %v2156
  %v2205 = vpack.c.bf16 %v2157, %v2157
  %v2206 = vpack.c.bf16 %v2158, %v2158
  %v2207 = vpack.c.bf16 %v2159, %v2159
  %v2208 = vpack.c.bf16 %v2160, %v2160
  %v2209 = vpack.c.bf16 %v2161, %v2161
  %v2210 = vpack.c.bf16 %v2162, %v2162
  %v2211 = vpack.c.bf16 %v2163, %v2163
  %v2212 = vpack.c.bf16 %v2164, %v2164
  %v2213 = vpack.c.bf16 %v2165, %v2165
  %v2214 = vpack.c.bf16 %v2166, %v2166
  %v2215 = vpack.c.bf16 %v2167, %v2167
  %v2216 = vpack.c.bf16 %v2168, %v2168
  %v2217 = vpack.c.bf16 %v2169, %v2169
  %v2218 = vld [vmem:[%s3] sm:$0xff]
  %v2219 = vld [vmem:[%s3 + $0x8] sm:$0xff]
  %v2220 = vld [vmem:[%s3 + $0x10] sm:$0xff]
  %v2221 = vld [vmem:[%s3 + $0x18] sm:$0xff]
  %v2222 = vld [vmem:[%s3 + $0x20] sm:$0xff]
  %v2223 = vld [vmem:[%s3 + $0x28] sm:$0xff]
  %v2224 = vld [vmem:[%s3 + $0x30] sm:$0xff]
  %v2225 = vld [vmem:[%s3 + $0x38] sm:$0xff]
  %v2226 = vld [vmem:[%s3 + $0x40] sm:$0xff]
  %v2227 = vld [vmem:[%s3 + $0x48] sm:$0xff]
  %v2228 = vld [vmem:[%s3 + $0x50] sm:$0xff]
  %v2229 = vld [vmem:[%s3 + $0x58] sm:$0xff]
  %v2230 = vld [vmem:[%s3 + $0x60] sm:$0xff]
  %v2231 = vld [vmem:[%s3 + $0x68] sm:$0xff]
  %v2232 = vld [vmem:[%s3 + $0x70] sm:$0xff]
  %v2233 = vld [vmem:[%s3 + $0x78] sm:$0xff]
  %s2234 = scalar_lea.vmem %s3, 128
  %v2235 = vld [vmem:[%s2234] sm:$0xff]
  %v2236 = vld [vmem:[%s2234 + $0x8] sm:$0xff]
  %v2237 = vld [vmem:[%s2234 + $0x10] sm:$0xff]
  %v2238 = vld [vmem:[%s2234 + $0x18] sm:$0xff]
  %v2239 = vld [vmem:[%s2234 + $0x20] sm:$0xff]
  %v2240 = vld [vmem:[%s2234 + $0x28] sm:$0xff]
  %v2241 = vld [vmem:[%s2234 + $0x30] sm:$0xff]
  %v2242 = vld [vmem:[%s2234 + $0x38] sm:$0xff]
  %v2243 = vld [vmem:[%s2234 + $0x40] sm:$0xff]
  %v2244 = vld [vmem:[%s2234 + $0x48] sm:$0xff]
  %v2245 = vld [vmem:[%s2234 + $0x50] sm:$0xff]
  %v2246 = vld [vmem:[%s2234 + $0x58] sm:$0xff]
  %v2247 = vld [vmem:[%s2234 + $0x60] sm:$0xff]
  %v2248 = vld [vmem:[%s2234 + $0x68] sm:$0xff]
  %v2249 = vld [vmem:[%s2234 + $0x70] sm:$0xff]
  %v2250 = vld [vmem:[%s2234 + $0x78] sm:$0xff]
  %v2267 = vunpack.c.l.b16 %v2194
  %v2268 = vunpack.c.l.b16 %v2195
  %v2269 = vunpack.c.l.b16 %v2196
  %v2270 = vunpack.c.l.b16 %v2197
  %v2271 = vunpack.c.l.b16 %v2198
  %v2272 = vunpack.c.l.b16 %v2199
  %v2273 = vunpack.c.l.b16 %v2200
  %v2274 = vunpack.c.l.b16 %v2201
  %v2275 = vunpack.c.l.b16 %v2202
  %v2276 = vunpack.c.l.b16 %v2203
  %v2277 = vunpack.c.l.b16 %v2204
  %v2278 = vunpack.c.l.b16 %v2205
  %v2279 = vunpack.c.l.b16 %v2206
  %v2280 = vunpack.c.l.b16 %v2207
  %v2281 = vunpack.c.l.b16 %v2208
  %v2282 = vunpack.c.l.b16 %v2209
  %v2283 = vpack.c.b16 %v2268, %v2267
  %v2284 = vpack.c.b16 %v2270, %v2269
  %v2285 = vpack.c.b16 %v2272, %v2271
  %v2286 = vpack.c.b16 %v2274, %v2273
  %v2287 = vpack.c.b16 %v2276, %v2275
  %v2288 = vpack.c.b16 %v2278, %v2277
  %v2289 = vpack.c.b16 %v2280, %v2279
  %v2290 = vpack.c.b16 %v2282, %v2281
  %v2315 = vunpack.c.l.b16 %v2235
  %v2316 = vunpack.c.h.b16 %v2235
  %v2317 = vunpack.c.l.b16 %v2236
  %v2318 = vunpack.c.h.b16 %v2236
  %v2319 = vunpack.c.l.b16 %v2237
  %v2320 = vunpack.c.h.b16 %v2237
  %v2321 = vunpack.c.l.b16 %v2238
  %v2322 = vunpack.c.h.b16 %v2238
  %v2323 = vunpack.c.l.b16 %v2239
  %v2324 = vunpack.c.h.b16 %v2239
  %v2325 = vunpack.c.l.b16 %v2240
  %v2326 = vunpack.c.h.b16 %v2240
  %v2327 = vunpack.c.l.b16 %v2241
  %v2328 = vunpack.c.h.b16 %v2241
  %v2329 = vunpack.c.l.b16 %v2242
  %v2330 = vunpack.c.h.b16 %v2242
  %v2331 = vunpack.c.l.b16 %v2243
  %v2332 = vunpack.c.h.b16 %v2243
  %v2333 = vunpack.c.l.b16 %v2244
  %v2334 = vunpack.c.h.b16 %v2244
  %v2335 = vunpack.c.l.b16 %v2245
  %v2336 = vunpack.c.h.b16 %v2245
  %v2337 = vunpack.c.l.b16 %v2246
  %v2338 = vunpack.c.h.b16 %v2246
  %v2339 = vunpack.c.l.b16 %v2247
  %v2340 = vunpack.c.h.b16 %v2247
  %v2341 = vunpack.c.l.b16 %v2248
  %v2342 = vunpack.c.h.b16 %v2248
  %v2343 = vunpack.c.l.b16 %v2249
  %v2344 = vunpack.c.h.b16 %v2249
  %v2345 = vunpack.c.l.b16 %v2250
  %v2346 = vunpack.c.h.b16 %v2250
  %v2347 = vpack.c.b16 %v2317, %v2315
  %v2348 = vpack.c.b16 %v2318, %v2316
  %v2349 = vpack.c.b16 %v2321, %v2319
  %v2350 = vpack.c.b16 %v2322, %v2320
  %v2351 = vpack.c.b16 %v2325, %v2323
  %v2352 = vpack.c.b16 %v2326, %v2324
  %v2353 = vpack.c.b16 %v2329, %v2327
  %v2354 = vpack.c.b16 %v2330, %v2328
  %v2355 = vpack.c.b16 %v2333, %v2331
  %v2356 = vpack.c.b16 %v2334, %v2332
  %v2357 = vpack.c.b16 %v2337, %v2335
  %v2358 = vpack.c.b16 %v2338, %v2336
  %v2359 = vpack.c.b16 %v2341, %v2339
  %v2360 = vpack.c.b16 %v2342, %v2340
  %v2361 = vpack.c.b16 %v2345, %v2343
  %v2362 = vpack.c.b16 %v2346, %v2344
  %2379 = vmatpush.bf16.msra.mxu0 %v2361
  %2380 = vmatpush.bf16.msra.mxu0 %v2359
  %2381 = vmatpush.bf16.msra.mxu0 %v2357
  %2382 = vmatpush.bf16.msra.mxu0 %v2355
  %2383 = vmatpush.bf16.msra.mxu0 %v2353
  %2384 = vmatpush.bf16.msra.mxu0 %v2351
  %2385 = vmatpush.bf16.msra.mxu0 %v2349
  %2386 = vmatpush.bf16.msra.mxu0 %v2347
  %2387 = vmatmul.bf16.gmra.mxu0 %v2283
  %v2388 = vpop.f32.mrf.mxu0
  %v2389 = vadd.f32 0.0, %v2388
  %v2390 = vpop.f32.mrf.mxu0
  %v2391 = vadd.f32 0.0, %v2390
  %2392 = vmatmul.bf16.gmra.mxu0 %v2284
  %v2393 = vpop.f32.mrf.mxu0
  %v2394 = vadd.f32 0.0, %v2393
  %v2395 = vpop.f32.mrf.mxu0
  %v2396 = vadd.f32 0.0, %v2395
  %2397 = vmatmul.bf16.gmra.mxu0 %v2285
  %v2398 = vpop.f32.mrf.mxu0
  %v2399 = vadd.f32 0.0, %v2398
  %v2400 = vpop.f32.mrf.mxu0
  %v2401 = vadd.f32 0.0, %v2400
  %2402 = vmatmul.bf16.gmra.mxu0 %v2286
  %v2403 = vpop.f32.mrf.mxu0
  %v2404 = vadd.f32 0.0, %v2403
  %v2405 = vpop.f32.mrf.mxu0
  %v2406 = vadd.f32 0.0, %v2405
  %2407 = vmatmul.bf16.gmra.mxu0 %v2287
  %v2408 = vpop.f32.mrf.mxu0
  %v2409 = vadd.f32 0.0, %v2408
  %v2410 = vpop.f32.mrf.mxu0
  %v2411 = vadd.f32 0.0, %v2410
  %2412 = vmatmul.bf16.gmra.mxu0 %v2288
  %v2413 = vpop.f32.mrf.mxu0
  %v2414 = vadd.f32 0.0, %v2413
  %v2415 = vpop.f32.mrf.mxu0
  %v2416 = vadd.f32 0.0, %v2415
  %2417 = vmatmul.bf16.gmra.mxu0 %v2289
  %v2418 = vpop.f32.mrf.mxu0
  %v2419 = vadd.f32 0.0, %v2418
  %v2420 = vpop.f32.mrf.mxu0
  %v2421 = vadd.f32 0.0, %v2420
  %2422 = vmatmul.bf16.gmra.mxu0 %v2290
  %v2423 = vpop.f32.mrf.mxu0
  %v2424 = vadd.f32 0.0, %v2423
  %v2425 = vpop.f32.mrf.mxu0
  %v2426 = vadd.f32 0.0, %v2425
  %2427 = vdwg.mxu0
  %2428 = vmatpush.bf16.msra.mxu0 %v2362
  %2429 = vmatpush.bf16.msra.mxu0 %v2360
  %2430 = vmatpush.bf16.msra.mxu0 %v2358
  %2431 = vmatpush.bf16.msra.mxu0 %v2356
  %2432 = vmatpush.bf16.msra.mxu0 %v2354
  %2433 = vmatpush.bf16.msra.mxu0 %v2352
  %2434 = vmatpush.bf16.msra.mxu0 %v2350
  %2435 = vmatpush.bf16.msra.mxu0 %v2348
  %2436 = vmatmul.bf16.gmra.mxu0 %v2283
  %v2437 = vpop.f32.mrf.mxu0
  %v2438 = vadd.f32 0.0, %v2437
  %v2439 = vpop.f32.mrf.mxu0
  %v2440 = vadd.f32 0.0, %v2439
  %2441 = vmatmul.bf16.gmra.mxu0 %v2284
  %v2442 = vpop.f32.mrf.mxu0
  %v2443 = vadd.f32 0.0, %v2442
  %v2444 = vpop.f32.mrf.mxu0
  %v2445 = vadd.f32 0.0, %v2444
  %2446 = vmatmul.bf16.gmra.mxu0 %v2285
  %v2447 = vpop.f32.mrf.mxu0
  %v2448 = vadd.f32 0.0, %v2447
  %v2449 = vpop.f32.mrf.mxu0
  %v2450 = vadd.f32 0.0, %v2449
  %2451 = vmatmul.bf16.gmra.mxu0 %v2286
  %v2452 = vpop.f32.mrf.mxu0
  %v2453 = vadd.f32 0.0, %v2452
  %v2454 = vpop.f32.mrf.mxu0
  %v2455 = vadd.f32 0.0, %v2454
  %2456 = vmatmul.bf16.gmra.mxu0 %v2287
  %v2457 = vpop.f32.mrf.mxu0
  %v2458 = vadd.f32 0.0, %v2457
  %v2459 = vpop.f32.mrf.mxu0
  %v2460 = vadd.f32 0.0, %v2459
  %2461 = vmatmul.bf16.gmra.mxu0 %v2288
  %v2462 = vpop.f32.mrf.mxu0
  %v2463 = vadd.f32 0.0, %v2462
  %v2464 = vpop.f32.mrf.mxu0
  %v2465 = vadd.f32 0.0, %v2464
  %2466 = vmatmul.bf16.gmra.mxu0 %v2289
  %v2467 = vpop.f32.mrf.mxu0
  %v2468 = vadd.f32 0.0, %v2467
  %v2469 = vpop.f32.mrf.mxu0
  %v2470 = vadd.f32 0.0, %v2469
  %2471 = vmatmul.bf16.gmra.mxu0 %v2290
  %v2472 = vpop.f32.mrf.mxu0
  %v2473 = vadd.f32 0.0, %v2472
  %v2474 = vpop.f32.mrf.mxu0
  %v2475 = vadd.f32 0.0, %v2474
  %2476 = vdwg.mxu0
  %v2493 = vunpack.c.l.b16 %v2170
  %v2494 = vunpack.c.l.b16 %v2171
  %v2495 = vunpack.c.l.b16 %v2172
  %v2496 = vunpack.c.l.b16 %v2173
  %v2497 = vunpack.c.l.b16 %v2174
  %v2498 = vunpack.c.l.b16 %v2175
  %v2499 = vunpack.c.l.b16 %v2176
  %v2500 = vunpack.c.l.b16 %v2177
  %v2501 = vunpack.c.l.b16 %v2178
  %v2502 = vunpack.c.l.b16 %v2179
  %v2503 = vunpack.c.l.b16 %v2180
  %v2504 = vunpack.c.l.b16 %v2181
  %v2505 = vunpack.c.l.b16 %v2182
  %v2506 = vunpack.c.l.b16 %v2183
  %v2507 = vunpack.c.l.b16 %v2184
  %v2508 = vunpack.c.l.b16 %v2185
  %v2509 = vpack.c.b16 %v2494, %v2493
  %v2510 = vpack.c.b16 %v2496, %v2495
  %v2511 = vpack.c.b16 %v2498, %v2497
  %v2512 = vpack.c.b16 %v2500, %v2499
  %v2513 = vpack.c.b16 %v2502, %v2501
  %v2514 = vpack.c.b16 %v2504, %v2503
  %v2515 = vpack.c.b16 %v2506, %v2505
  %v2516 = vpack.c.b16 %v2508, %v2507
  %v2541 = vunpack.c.l.b16 %v2218
  %v2542 = vunpack.c.h.b16 %v2218
  %v2543 = vunpack.c.l.b16 %v2219
  %v2544 = vunpack.c.h.b16 %v2219
  %v2545 = vunpack.c.l.b16 %v2220
  %v2546 = vunpack.c.h.b16 %v2220
  %v2547 = vunpack.c.l.b16 %v2221
  %v2548 = vunpack.c.h.b16 %v2221
  %v2549 = vunpack.c.l.b16 %v2222
  %v2550 = vunpack.c.h.b16 %v2222
  %v2551 = vunpack.c.l.b16 %v2223
  %v2552 = vunpack.c.h.b16 %v2223
  %v2553 = vunpack.c.l.b16 %v2224
  %v2554 = vunpack.c.h.b16 %v2224
  %v2555 = vunpack.c.l.b16 %v2225
  %v2556 = vunpack.c.h.b16 %v2225
  %v2557 = vunpack.c.l.b16 %v2226
  %v2558 = vunpack.c.h.b16 %v2226
  %v2559 = vunpack.c.l.b16 %v2227
  %v2560 = vunpack.c.h.b16 %v2227
  %v2561 = vunpack.c.l.b16 %v2228
  %v2562 = vunpack.c.h.b16 %v2228
  %v2563 = vunpack.c.l.b16 %v2229
  %v2564 = vunpack.c.h.b16 %v2229
  %v2565 = vunpack.c.l.b16 %v2230
  %v2566 = vunpack.c.h.b16 %v2230
  %v2567 = vunpack.c.l.b16 %v2231
  %v2568 = vunpack.c.h.b16 %v2231
  %v2569 = vunpack.c.l.b16 %v2232
  %v2570 = vunpack.c.h.b16 %v2232
  %v2571 = vunpack.c.l.b16 %v2233
  %v2572 = vunpack.c.h.b16 %v2233
  %v2573 = vpack.c.b16 %v2543, %v2541
  %v2574 = vpack.c.b16 %v2544, %v2542
  %v2575 = vpack.c.b16 %v2547, %v2545
  %v2576 = vpack.c.b16 %v2548, %v2546
  %v2577 = vpack.c.b16 %v2551, %v2549
  %v2578 = vpack.c.b16 %v2552, %v2550
  %v2579 = vpack.c.b16 %v2555, %v2553
  %v2580 = vpack.c.b16 %v2556, %v2554
  %v2581 = vpack.c.b16 %v2559, %v2557
  %v2582 = vpack.c.b16 %v2560, %v2558
  %v2583 = vpack.c.b16 %v2563, %v2561
  %v2584 = vpack.c.b16 %v2564, %v2562
  %v2585 = vpack.c.b16 %v2567, %v2565
  %v2586 = vpack.c.b16 %v2568, %v2566
  %v2587 = vpack.c.b16 %v2571, %v2569
  %v2588 = vpack.c.b16 %v2572, %v2570
  %2605 = vmatpush.bf16.msra.mxu0 %v2587
  %2606 = vmatpush.bf16.msra.mxu0 %v2585
  %2607 = vmatpush.bf16.msra.mxu0 %v2583
  %2608 = vmatpush.bf16.msra.mxu0 %v2581
  %2609 = vmatpush.bf16.msra.mxu0 %v2579
  %2610 = vmatpush.bf16.msra.mxu0 %v2577
  %2611 = vmatpush.bf16.msra.mxu0 %v2575
  %2612 = vmatpush.bf16.msra.mxu0 %v2573
  %2613 = vmatmul.bf16.gmra.mxu0 %v2509
  %v2614 = vpop.f32.mrf.mxu0
  %v2615 = vadd.f32 %v2389, %v2614
  %v2616 = vpop.f32.mrf.mxu0
  %v2617 = vadd.f32 %v2391, %v2616
  %2618 = vmatmul.bf16.gmra.mxu0 %v2510
  %v2619 = vpop.f32.mrf.mxu0
  %v2620 = vadd.f32 %v2394, %v2619
  %v2621 = vpop.f32.mrf.mxu0
  %v2622 = vadd.f32 %v2396, %v2621
  %2623 = vmatmul.bf16.gmra.mxu0 %v2511
  %v2624 = vpop.f32.mrf.mxu0
  %v2625 = vadd.f32 %v2399, %v2624
  %v2626 = vpop.f32.mrf.mxu0
  %v2627 = vadd.f32 %v2401, %v2626
  %2628 = vmatmul.bf16.gmra.mxu0 %v2512
  %v2629 = vpop.f32.mrf.mxu0
  %v2630 = vadd.f32 %v2404, %v2629
  %v2631 = vpop.f32.mrf.mxu0
  %v2632 = vadd.f32 %v2406, %v2631
  %2633 = vmatmul.bf16.gmra.mxu0 %v2513
  %v2634 = vpop.f32.mrf.mxu0
  %v2635 = vadd.f32 %v2409, %v2634
  %v2636 = vpop.f32.mrf.mxu0
  %v2637 = vadd.f32 %v2411, %v2636
  %2638 = vmatmul.bf16.gmra.mxu0 %v2514
  %v2639 = vpop.f32.mrf.mxu0
  %v2640 = vadd.f32 %v2414, %v2639
  %v2641 = vpop.f32.mrf.mxu0
  %v2642 = vadd.f32 %v2416, %v2641
  %2643 = vmatmul.bf16.gmra.mxu0 %v2515
  %v2644 = vpop.f32.mrf.mxu0
  %v2645 = vadd.f32 %v2419, %v2644
  %v2646 = vpop.f32.mrf.mxu0
  %v2647 = vadd.f32 %v2421, %v2646
  %2648 = vmatmul.bf16.gmra.mxu0 %v2516
  %v2649 = vpop.f32.mrf.mxu0
  %v2650 = vadd.f32 %v2424, %v2649
  %v2651 = vpop.f32.mrf.mxu0
  %v2652 = vadd.f32 %v2426, %v2651
  %2653 = vdwg.mxu0
  %2654 = vmatpush.bf16.msra.mxu0 %v2588
  %2655 = vmatpush.bf16.msra.mxu0 %v2586
  %2656 = vmatpush.bf16.msra.mxu0 %v2584
  %2657 = vmatpush.bf16.msra.mxu0 %v2582
  %2658 = vmatpush.bf16.msra.mxu0 %v2580
  %2659 = vmatpush.bf16.msra.mxu0 %v2578
  %2660 = vmatpush.bf16.msra.mxu0 %v2576
  %2661 = vmatpush.bf16.msra.mxu0 %v2574
  %2662 = vmatmul.bf16.gmra.mxu0 %v2509
  %v2663 = vpop.f32.mrf.mxu0
  %v2664 = vadd.f32 %v2438, %v2663
  %v2665 = vpop.f32.mrf.mxu0
  %v2666 = vadd.f32 %v2440, %v2665
  %2667 = vmatmul.bf16.gmra.mxu0 %v2510
  %v2668 = vpop.f32.mrf.mxu0
  %v2669 = vadd.f32 %v2443, %v2668
  %v2670 = vpop.f32.mrf.mxu0
  %v2671 = vadd.f32 %v2445, %v2670
  %2672 = vmatmul.bf16.gmra.mxu0 %v2511
  %v2673 = vpop.f32.mrf.mxu0
  %v2674 = vadd.f32 %v2448, %v2673
  %v2675 = vpop.f32.mrf.mxu0
  %v2676 = vadd.f32 %v2450, %v2675
  %2677 = vmatmul.bf16.gmra.mxu0 %v2512
  %v2678 = vpop.f32.mrf.mxu0
  %v2679 = vadd.f32 %v2453, %v2678
  %v2680 = vpop.f32.mrf.mxu0
  %v2681 = vadd.f32 %v2455, %v2680
  %2682 = vmatmul.bf16.gmra.mxu0 %v2513
  %v2683 = vpop.f32.mrf.mxu0
  %v2684 = vadd.f32 %v2458, %v2683
  %v2685 = vpop.f32.mrf.mxu0
  %v2686 = vadd.f32 %v2460, %v2685
  %2687 = vmatmul.bf16.gmra.mxu0 %v2514
  %v2688 = vpop.f32.mrf.mxu0
  %v2689 = vadd.f32 %v2463, %v2688
  %v2690 = vpop.f32.mrf.mxu0
  %v2691 = vadd.f32 %v2465, %v2690
  %2692 = vmatmul.bf16.gmra.mxu0 %v2515
  %v2693 = vpop.f32.mrf.mxu0
  %v2694 = vadd.f32 %v2468, %v2693
  %v2695 = vpop.f32.mrf.mxu0
  %v2696 = vadd.f32 %v2470, %v2695
  %2697 = vmatmul.bf16.gmra.mxu0 %v2516
  %v2698 = vpop.f32.mrf.mxu0
  %v2699 = vadd.f32 %v2473, %v2698
  %v2700 = vpop.f32.mrf.mxu0
  %v2701 = vadd.f32 %v2475, %v2700
  %2702 = vdwg.mxu0
  %s2703 = scalar_lea.vmem %s3, 256
  %v2704 = vld [vmem:[%s2703] sm:$0xff]
  %v2705 = vld [vmem:[%s2703 + $0x8] sm:$0xff]
  %v2706 = vld [vmem:[%s2703 + $0x10] sm:$0xff]
  %v2707 = vld [vmem:[%s2703 + $0x18] sm:$0xff]
  %v2708 = vld [vmem:[%s2703 + $0x20] sm:$0xff]
  %v2709 = vld [vmem:[%s2703 + $0x28] sm:$0xff]
  %v2710 = vld [vmem:[%s2703 + $0x30] sm:$0xff]
  %v2711 = vld [vmem:[%s2703 + $0x38] sm:$0xff]
  %v2712 = vld [vmem:[%s2703 + $0x40] sm:$0xff]
  %v2713 = vld [vmem:[%s2703 + $0x48] sm:$0xff]
  %v2714 = vld [vmem:[%s2703 + $0x50] sm:$0xff]
  %v2715 = vld [vmem:[%s2703 + $0x58] sm:$0xff]
  %v2716 = vld [vmem:[%s2703 + $0x60] sm:$0xff]
  %v2717 = vld [vmem:[%s2703 + $0x68] sm:$0xff]
  %v2718 = vld [vmem:[%s2703 + $0x70] sm:$0xff]
  %v2719 = vld [vmem:[%s2703 + $0x78] sm:$0xff]
  %v2724 = vunpack.c.l.b16 %v2186
  %v2725 = vunpack.c.l.b16 %v2187
  %v2726 = vunpack.c.l.b16 %v2188
  %v2727 = vunpack.c.l.b16 %v2189
  %v2728 = vpack.c.b16 %v2725, %v2724
  %v2729 = vpack.c.b16 %v2727, %v2726
  %v2748 = vunpack.c.l.b16 %v2704
  %v2749 = vunpack.c.h.b16 %v2704
  %v2750 = vunpack.c.l.b16 %v2705
  %v2751 = vunpack.c.h.b16 %v2705
  %v2752 = vunpack.c.l.b16 %v2706
  %v2753 = vunpack.c.h.b16 %v2706
  %v2754 = vunpack.c.l.b16 %v2707
  %v2755 = vunpack.c.h.b16 %v2707
  %v2756 = vunpack.c.l.b16 %v2708
  %v2757 = vunpack.c.h.b16 %v2708
  %v2758 = vunpack.c.l.b16 %v2709
  %v2759 = vunpack.c.h.b16 %v2709
  %v2760 = vunpack.c.l.b16 %v2710
  %v2761 = vunpack.c.h.b16 %v2710
  %v2762 = vunpack.c.l.b16 %v2711
  %v2763 = vunpack.c.h.b16 %v2711
  %v2764 = vunpack.c.l.b16 %v2712
  %v2765 = vunpack.c.h.b16 %v2712
  %v2766 = vunpack.c.l.b16 %v2713
  %v2767 = vunpack.c.h.b16 %v2713
  %v2768 = vunpack.c.l.b16 %v2714
  %v2769 = vunpack.c.h.b16 %v2714
  %v2770 = vunpack.c.l.b16 %v2715
  %v2771 = vunpack.c.h.b16 %v2715
  %v2772 = vunpack.c.l.b16 %v2716
  %v2773 = vunpack.c.h.b16 %v2716
  %v2774 = vunpack.c.l.b16 %v2717
  %v2775 = vunpack.c.h.b16 %v2717
  %v2776 = vunpack.c.l.b16 %v2718
  %v2777 = vunpack.c.h.b16 %v2718
  %v2778 = vunpack.c.l.b16 %v2719
  %v2779 = vunpack.c.h.b16 %v2719
  %v2780 = vpack.c.b16 %v2750, %v2748
  %v2781 = vpack.c.b16 %v2751, %v2749
  %v2782 = vpack.c.b16 %v2754, %v2752
  %v2783 = vpack.c.b16 %v2755, %v2753
  %v2784 = vpack.c.b16 %v2758, %v2756
  %v2785 = vpack.c.b16 %v2759, %v2757
  %v2786 = vpack.c.b16 %v2762, %v2760
  %v2787 = vpack.c.b16 %v2763, %v2761
  %v2788 = vpack.c.b16 %v2766, %v2764
  %v2789 = vpack.c.b16 %v2767, %v2765
  %v2790 = vpack.c.b16 %v2770, %v2768
  %v2791 = vpack.c.b16 %v2771, %v2769
  %v2792 = vpack.c.b16 %v2774, %v2772
  %v2793 = vpack.c.b16 %v2775, %v2773
  %v2794 = vpack.c.b16 %v2778, %v2776
  %v2795 = vpack.c.b16 %v2779, %v2777
  %2812 = vmatpush.bf16.msra.mxu0 %v2794
  %2813 = vmatpush.bf16.msra.mxu0 %v2792
  %2814 = vmatpush.bf16.msra.mxu0 %v2790
  %2815 = vmatpush.bf16.msra.mxu0 %v2788
  %2816 = vmatpush.bf16.msra.mxu0 %v2786
  %2817 = vmatpush.bf16.msra.mxu0 %v2784
  %2818 = vmatpush.bf16.msra.mxu0 %v2782
  %2819 = vmatpush.bf16.msra.mxu0 %v2780
  %2820 = vmatmul.bf16.gmra.mxu0 %v2511
  %v2821 = vpop.f32.mrf.mxu0
  %v2822 = vadd.f32 0.0, %v2821
  %v2823 = vpop.f32.mrf.mxu0
  %v2824 = vadd.f32 0.0, %v2823
  %2825 = vmatmul.bf16.gmra.mxu0 %v2512
  %v2826 = vpop.f32.mrf.mxu0
  %v2827 = vadd.f32 0.0, %v2826
  %v2828 = vpop.f32.mrf.mxu0
  %v2829 = vadd.f32 0.0, %v2828
  %2830 = vmatmul.bf16.gmra.mxu0 %v2513
  %v2831 = vpop.f32.mrf.mxu0
  %v2832 = vadd.f32 0.0, %v2831
  %v2833 = vpop.f32.mrf.mxu0
  %v2834 = vadd.f32 0.0, %v2833
  %2835 = vmatmul.bf16.gmra.mxu0 %v2514
  %v2836 = vpop.f32.mrf.mxu0
  %v2837 = vadd.f32 0.0, %v2836
  %v2838 = vpop.f32.mrf.mxu0
  %v2839 = vadd.f32 0.0, %v2838
  %2840 = vmatmul.bf16.gmra.mxu0 %v2515
  %v2841 = vpop.f32.mrf.mxu0
  %v2842 = vadd.f32 0.0, %v2841
  %v2843 = vpop.f32.mrf.mxu0
  %v2844 = vadd.f32 0.0, %v2843
  %2845 = vmatmul.bf16.gmra.mxu0 %v2516
  %v2846 = vpop.f32.mrf.mxu0
  %v2847 = vadd.f32 0.0, %v2846
  %v2848 = vpop.f32.mrf.mxu0
  %v2849 = vadd.f32 0.0, %v2848
  %2850 = vmatmul.bf16.gmra.mxu0 %v2728
  %v2851 = vpop.f32.mrf.mxu0
  %v2852 = vadd.f32 0.0, %v2851
  %v2853 = vpop.f32.mrf.mxu0
  %v2854 = vadd.f32 0.0, %v2853
  %2855 = vmatmul.bf16.gmra.mxu0 %v2729
  %v2856 = vpop.f32.mrf.mxu0
  %v2857 = vadd.f32 0.0, %v2856
  %v2858 = vpop.f32.mrf.mxu0
  %v2859 = vadd.f32 0.0, %v2858
  %2860 = vdwg.mxu0
  %2861 = vmatpush.bf16.msra.mxu0 %v2795
  %2862 = vmatpush.bf16.msra.mxu0 %v2793
  %2863 = vmatpush.bf16.msra.mxu0 %v2791
  %2864 = vmatpush.bf16.msra.mxu0 %v2789
  %2865 = vmatpush.bf16.msra.mxu0 %v2787
  %2866 = vmatpush.bf16.msra.mxu0 %v2785
  %2867 = vmatpush.bf16.msra.mxu0 %v2783
  %2868 = vmatpush.bf16.msra.mxu0 %v2781
  %2869 = vmatmul.bf16.gmra.mxu0 %v2511
  %v2870 = vpop.f32.mrf.mxu0
  %v2871 = vadd.f32 0.0, %v2870
  %v2872 = vpop.f32.mrf.mxu0
  %v2873 = vadd.f32 0.0, %v2872
  %2874 = vmatmul.bf16.gmra.mxu0 %v2512
  %v2875 = vpop.f32.mrf.mxu0
  %v2876 = vadd.f32 0.0, %v2875
  %v2877 = vpop.f32.mrf.mxu0
  %v2878 = vadd.f32 0.0, %v2877
  %2879 = vmatmul.bf16.gmra.mxu0 %v2513
  %v2880 = vpop.f32.mrf.mxu0
  %v2881 = vadd.f32 0.0, %v2880
  %v2882 = vpop.f32.mrf.mxu0
  %v2883 = vadd.f32 0.0, %v2882
  %2884 = vmatmul.bf16.gmra.mxu0 %v2514
  %v2885 = vpop.f32.mrf.mxu0
  %v2886 = vadd.f32 0.0, %v2885
  %v2887 = vpop.f32.mrf.mxu0
  %v2888 = vadd.f32 0.0, %v2887
  %2889 = vmatmul.bf16.gmra.mxu0 %v2515
  %v2890 = vpop.f32.mrf.mxu0
  %v2891 = vadd.f32 0.0, %v2890
  %v2892 = vpop.f32.mrf.mxu0
  %v2893 = vadd.f32 0.0, %v2892
  %2894 = vmatmul.bf16.gmra.mxu0 %v2516
  %v2895 = vpop.f32.mrf.mxu0
  %v2896 = vadd.f32 0.0, %v2895
  %v2897 = vpop.f32.mrf.mxu0
  %v2898 = vadd.f32 0.0, %v2897
  %2899 = vmatmul.bf16.gmra.mxu0 %v2728
  %v2900 = vpop.f32.mrf.mxu0
  %v2901 = vadd.f32 0.0, %v2900
  %v2902 = vpop.f32.mrf.mxu0
  %v2903 = vadd.f32 0.0, %v2902
  %2904 = vmatmul.bf16.gmra.mxu0 %v2729
  %v2905 = vpop.f32.mrf.mxu0
  %v2906 = vadd.f32 0.0, %v2905
  %v2907 = vpop.f32.mrf.mxu0
  %v2908 = vadd.f32 0.0, %v2907
  %2909 = vdwg.mxu0
  %v2910 = vadd.f32 %v2615, %v2822
  %v2911 = vadd.f32 %v2664, %v2871
  %v2912 = vadd.f32 %v2617, %v2824
  %v2913 = vadd.f32 %v2666, %v2873
  %v2914 = vadd.f32 %v2620, %v2827
  %v2915 = vadd.f32 %v2669, %v2876
  %v2916 = vadd.f32 %v2622, %v2829
  %v2917 = vadd.f32 %v2671, %v2878
  %v2918 = vadd.f32 %v2625, %v2832
  %v2919 = vadd.f32 %v2674, %v2881
  %v2920 = vadd.f32 %v2627, %v2834
  %v2921 = vadd.f32 %v2676, %v2883
  %v2922 = vadd.f32 %v2630, %v2837
  %v2923 = vadd.f32 %v2679, %v2886
  %v2924 = vadd.f32 %v2632, %v2839
  %v2925 = vadd.f32 %v2681, %v2888
  %v2926 = vadd.f32 %v2635, %v2842
  %v2927 = vadd.f32 %v2684, %v2891
  %v2928 = vadd.f32 %v2637, %v2844
  %v2929 = vadd.f32 %v2686, %v2893
  %v2930 = vadd.f32 %v2640, %v2847
  %v2931 = vadd.f32 %v2689, %v2896
  %v2932 = vadd.f32 %v2642, %v2849
  %v2933 = vadd.f32 %v2691, %v2898
  %v2934 = vadd.f32 %v2645, %v2852
  %v2935 = vadd.f32 %v2694, %v2901
  %v2936 = vadd.f32 %v2647, %v2854
  %v2937 = vadd.f32 %v2696, %v2903
  %v2938 = vadd.f32 %v2650, %v2857
  %v2939 = vadd.f32 %v2699, %v2906
  %v2940 = vadd.f32 %v2652, %v2859
  %v2941 = vadd.f32 %v2701, %v2908
  %s2942 = scalar_lea.vmem %s3, 384
  %v2943 = vld [vmem:[%s2942] sm:$0xff]
  %v2944 = vld [vmem:[%s2942 + $0x8] sm:$0xff]
  %v2945 = vld [vmem:[%s2942 + $0x10] sm:$0xff]
  %v2946 = vld [vmem:[%s2942 + $0x18] sm:$0xff]
  %v2947 = vld [vmem:[%s2942 + $0x20] sm:$0xff]
  %v2948 = vld [vmem:[%s2942 + $0x28] sm:$0xff]
  %v2949 = vld [vmem:[%s2942 + $0x30] sm:$0xff]
  %v2950 = vld [vmem:[%s2942 + $0x38] sm:$0xff]
  %v2951 = vld [vmem:[%s2942 + $0x40] sm:$0xff]
  %v2952 = vld [vmem:[%s2942 + $0x48] sm:$0xff]
  %v2953 = vld [vmem:[%s2942 + $0x50] sm:$0xff]
  %v2954 = vld [vmem:[%s2942 + $0x58] sm:$0xff]
  %v2955 = vld [vmem:[%s2942 + $0x60] sm:$0xff]
  %v2956 = vld [vmem:[%s2942 + $0x68] sm:$0xff]
  %v2957 = vld [vmem:[%s2942 + $0x70] sm:$0xff]
  %v2958 = vld [vmem:[%s2942 + $0x78] sm:$0xff]
  %v2963 = vunpack.c.l.b16 %v2210
  %v2964 = vunpack.c.l.b16 %v2211
  %v2965 = vunpack.c.l.b16 %v2212
  %v2966 = vunpack.c.l.b16 %v2213
  %v2967 = vpack.c.b16 %v2964, %v2963
  %v2968 = vpack.c.b16 %v2966, %v2965
  %v2987 = vunpack.c.l.b16 %v2943
  %v2988 = vunpack.c.h.b16 %v2943
  %v2989 = vunpack.c.l.b16 %v2944
  %v2990 = vunpack.c.h.b16 %v2944
  %v2991 = vunpack.c.l.b16 %v2945
  %v2992 = vunpack.c.h.b16 %v2945
  %v2993 = vunpack.c.l.b16 %v2946
  %v2994 = vunpack.c.h.b16 %v2946
  %v2995 = vunpack.c.l.b16 %v2947
  %v2996 = vunpack.c.h.b16 %v2947
  %v2997 = vunpack.c.l.b16 %v2948
  %v2998 = vunpack.c.h.b16 %v2948
  %v2999 = vunpack.c.l.b16 %v2949
  %v3000 = vunpack.c.h.b16 %v2949
  %v3001 = vunpack.c.l.b16 %v2950
  %v3002 = vunpack.c.h.b16 %v2950
  %v3003 = vunpack.c.l.b16 %v2951
  %v3004 = vunpack.c.h.b16 %v2951
  %v3005 = vunpack.c.l.b16 %v2952
  %v3006 = vunpack.c.h.b16 %v2952
  %v3007 = vunpack.c.l.b16 %v2953
  %v3008 = vunpack.c.h.b16 %v2953
  %v3009 = vunpack.c.l.b16 %v2954
  %v3010 = vunpack.c.h.b16 %v2954
  %v3011 = vunpack.c.l.b16 %v2955
  %v3012 = vunpack.c.h.b16 %v2955
  %v3013 = vunpack.c.l.b16 %v2956
  %v3014 = vunpack.c.h.b16 %v2956
  %v3015 = vunpack.c.l.b16 %v2957
  %v3016 = vunpack.c.h.b16 %v2957
  %v3017 = vunpack.c.l.b16 %v2958
  %v3018 = vunpack.c.h.b16 %v2958
  %v3019 = vpack.c.b16 %v2989, %v2987
  %v3020 = vpack.c.b16 %v2990, %v2988
  %v3021 = vpack.c.b16 %v2993, %v2991
  %v3022 = vpack.c.b16 %v2994, %v2992
  %v3023 = vpack.c.b16 %v2997, %v2995
  %v3024 = vpack.c.b16 %v2998, %v2996
  %v3025 = vpack.c.b16 %v3001, %v2999
  %v3026 = vpack.c.b16 %v3002, %v3000
  %v3027 = vpack.c.b16 %v3005, %v3003
  %v3028 = vpack.c.b16 %v3006, %v3004
  %v3029 = vpack.c.b16 %v3009, %v3007
  %v3030 = vpack.c.b16 %v3010, %v3008
  %v3031 = vpack.c.b16 %v3013, %v3011
  %v3032 = vpack.c.b16 %v3014, %v3012
  %v3033 = vpack.c.b16 %v3017, %v3015
  %v3034 = vpack.c.b16 %v3018, %v3016
  %3051 = vmatpush.bf16.msra.mxu0 %v3033
  %3052 = vmatpush.bf16.msra.mxu0 %v3031
  %3053 = vmatpush.bf16.msra.mxu0 %v3029
  %3054 = vmatpush.bf16.msra.mxu0 %v3027
  %3055 = vmatpush.bf16.msra.mxu0 %v3025
  %3056 = vmatpush.bf16.msra.mxu0 %v3023
  %3057 = vmatpush.bf16.msra.mxu0 %v3021
  %3058 = vmatpush.bf16.msra.mxu0 %v3019
  %3059 = vmatmul.bf16.gmra.mxu0 %v2285
  %v3060 = vpop.f32.mrf.mxu0
  %v3061 = vadd.f32 0.0, %v3060
  %v3062 = vpop.f32.mrf.mxu0
  %v3063 = vadd.f32 0.0, %v3062
  %3064 = vmatmul.bf16.gmra.mxu0 %v2286
  %v3065 = vpop.f32.mrf.mxu0
  %v3066 = vadd.f32 0.0, %v3065
  %v3067 = vpop.f32.mrf.mxu0
  %v3068 = vadd.f32 0.0, %v3067
  %3069 = vmatmul.bf16.gmra.mxu0 %v2287
  %v3070 = vpop.f32.mrf.mxu0
  %v3071 = vadd.f32 0.0, %v3070
  %v3072 = vpop.f32.mrf.mxu0
  %v3073 = vadd.f32 0.0, %v3072
  %3074 = vmatmul.bf16.gmra.mxu0 %v2288
  %v3075 = vpop.f32.mrf.mxu0
  %v3076 = vadd.f32 0.0, %v3075
  %v3077 = vpop.f32.mrf.mxu0
  %v3078 = vadd.f32 0.0, %v3077
  %3079 = vmatmul.bf16.gmra.mxu0 %v2289
  %v3080 = vpop.f32.mrf.mxu0
  %v3081 = vadd.f32 0.0, %v3080
  %v3082 = vpop.f32.mrf.mxu0
  %v3083 = vadd.f32 0.0, %v3082
  %3084 = vmatmul.bf16.gmra.mxu0 %v2290
  %v3085 = vpop.f32.mrf.mxu0
  %v3086 = vadd.f32 0.0, %v3085
  %v3087 = vpop.f32.mrf.mxu0
  %v3088 = vadd.f32 0.0, %v3087
  %3089 = vmatmul.bf16.gmra.mxu0 %v2967
  %v3090 = vpop.f32.mrf.mxu0
  %v3091 = vadd.f32 0.0, %v3090
  %v3092 = vpop.f32.mrf.mxu0
  %v3093 = vadd.f32 0.0, %v3092
  %3094 = vmatmul.bf16.gmra.mxu0 %v2968
  %v3095 = vpop.f32.mrf.mxu0
  %v3096 = vadd.f32 0.0, %v3095
  %v3097 = vpop.f32.mrf.mxu0
  %v3098 = vadd.f32 0.0, %v3097
  %3099 = vdwg.mxu0
  %3100 = vmatpush.bf16.msra.mxu0 %v3034
  %3101 = vmatpush.bf16.msra.mxu0 %v3032
  %3102 = vmatpush.bf16.msra.mxu0 %v3030
  %3103 = vmatpush.bf16.msra.mxu0 %v3028
  %3104 = vmatpush.bf16.msra.mxu0 %v3026
  %3105 = vmatpush.bf16.msra.mxu0 %v3024
  %3106 = vmatpush.bf16.msra.mxu0 %v3022
  %3107 = vmatpush.bf16.msra.mxu0 %v3020
  %3108 = vmatmul.bf16.gmra.mxu0 %v2285
  %v3109 = vpop.f32.mrf.mxu0
  %v3110 = vadd.f32 0.0, %v3109
  %v3111 = vpop.f32.mrf.mxu0
  %v3112 = vadd.f32 0.0, %v3111
  %3113 = vmatmul.bf16.gmra.mxu0 %v2286
  %v3114 = vpop.f32.mrf.mxu0
  %v3115 = vadd.f32 0.0, %v3114
  %v3116 = vpop.f32.mrf.mxu0
  %v3117 = vadd.f32 0.0, %v3116
  %3118 = vmatmul.bf16.gmra.mxu0 %v2287
  %v3119 = vpop.f32.mrf.mxu0
  %v3120 = vadd.f32 0.0, %v3119
  %v3121 = vpop.f32.mrf.mxu0
  %v3122 = vadd.f32 0.0, %v3121
  %3123 = vmatmul.bf16.gmra.mxu0 %v2288
  %v3124 = vpop.f32.mrf.mxu0
  %v3125 = vadd.f32 0.0, %v3124
  %v3126 = vpop.f32.mrf.mxu0
  %v3127 = vadd.f32 0.0, %v3126
  %3128 = vmatmul.bf16.gmra.mxu0 %v2289
  %v3129 = vpop.f32.mrf.mxu0
  %v3130 = vadd.f32 0.0, %v3129
  %v3131 = vpop.f32.mrf.mxu0
  %v3132 = vadd.f32 0.0, %v3131
  %3133 = vmatmul.bf16.gmra.mxu0 %v2290
  %v3134 = vpop.f32.mrf.mxu0
  %v3135 = vadd.f32 0.0, %v3134
  %v3136 = vpop.f32.mrf.mxu0
  %v3137 = vadd.f32 0.0, %v3136
  %3138 = vmatmul.bf16.gmra.mxu0 %v2967
  %v3139 = vpop.f32.mrf.mxu0
  %v3140 = vadd.f32 0.0, %v3139
  %v3141 = vpop.f32.mrf.mxu0
  %v3142 = vadd.f32 0.0, %v3141
  %3143 = vmatmul.bf16.gmra.mxu0 %v2968
  %v3144 = vpop.f32.mrf.mxu0
  %v3145 = vadd.f32 0.0, %v3144
  %v3146 = vpop.f32.mrf.mxu0
  %v3147 = vadd.f32 0.0, %v3146
  %3148 = vdwg.mxu0
  %v3149 = vadd.f32 %v2910, %v3061
  %v3150 = vadd.f32 %v2911, %v3110
  %v3151 = vadd.f32 %v2912, %v3063
  %v3152 = vadd.f32 %v2913, %v3112
  %v3153 = vadd.f32 %v2914, %v3066
  %v3154 = vadd.f32 %v2915, %v3115
  %v3155 = vadd.f32 %v2916, %v3068
  %v3156 = vadd.f32 %v2917, %v3117
  %v3157 = vadd.f32 %v2918, %v3071
  %v3158 = vadd.f32 %v2919, %v3120
  %v3159 = vadd.f32 %v2920, %v3073
  %v3160 = vadd.f32 %v2921, %v3122
  %v3161 = vadd.f32 %v2922, %v3076
  %v3162 = vadd.f32 %v2923, %v3125
  %v3163 = vadd.f32 %v2924, %v3078
  %v3164 = vadd.f32 %v2925, %v3127
  %v3165 = vadd.f32 %v2926, %v3081
  %v3166 = vadd.f32 %v2927, %v3130
  %v3167 = vadd.f32 %v2928, %v3083
  %v3168 = vadd.f32 %v2929, %v3132
  %v3169 = vadd.f32 %v2930, %v3086
  %v3170 = vadd.f32 %v2931, %v3135
  %v3171 = vadd.f32 %v2932, %v3088
  %v3172 = vadd.f32 %v2933, %v3137
  %v3173 = vadd.f32 %v2934, %v3091
  %v3174 = vadd.f32 %v2935, %v3140
  %v3175 = vadd.f32 %v2936, %v3093
  %v3176 = vadd.f32 %v2937, %v3142
  %v3177 = vadd.f32 %v2938, %v3096
  %v3178 = vadd.f32 %v2939, %v3145
  %v3179 = vadd.f32 %v2940, %v3098
  %v3180 = vadd.f32 %v2941, %v3147
  %s3181 = scalar_lea.vmem %s3, 512
  %v3182 = vld [vmem:[%s3181] sm:$0xff]
  %v3183 = vld [vmem:[%s3181 + $0x8] sm:$0xff]
  %v3184 = vld [vmem:[%s3181 + $0x10] sm:$0xff]
  %v3185 = vld [vmem:[%s3181 + $0x18] sm:$0xff]
  %v3186 = vld [vmem:[%s3181 + $0x20] sm:$0xff]
  %v3187 = vld [vmem:[%s3181 + $0x28] sm:$0xff]
  %v3188 = vld [vmem:[%s3181 + $0x30] sm:$0xff]
  %v3189 = vld [vmem:[%s3181 + $0x38] sm:$0xff]
  %v3190 = vld [vmem:[%s3181 + $0x40] sm:$0xff]
  %v3191 = vld [vmem:[%s3181 + $0x48] sm:$0xff]
  %v3192 = vld [vmem:[%s3181 + $0x50] sm:$0xff]
  %v3193 = vld [vmem:[%s3181 + $0x58] sm:$0xff]
  %v3194 = vld [vmem:[%s3181 + $0x60] sm:$0xff]
  %v3195 = vld [vmem:[%s3181 + $0x68] sm:$0xff]
  %v3196 = vld [vmem:[%s3181 + $0x70] sm:$0xff]
  %v3197 = vld [vmem:[%s3181 + $0x78] sm:$0xff]
  %v3202 = vunpack.c.l.b16 %v2190
  %v3203 = vunpack.c.l.b16 %v2191
  %v3204 = vunpack.c.l.b16 %v2192
  %v3205 = vunpack.c.l.b16 %v2193
  %v3206 = vpack.c.b16 %v3203, %v3202
  %v3207 = vpack.c.b16 %v3205, %v3204
  %v3226 = vunpack.c.l.b16 %v3182
  %v3227 = vunpack.c.h.b16 %v3182
  %v3228 = vunpack.c.l.b16 %v3183
  %v3229 = vunpack.c.h.b16 %v3183
  %v3230 = vunpack.c.l.b16 %v3184
  %v3231 = vunpack.c.h.b16 %v3184
  %v3232 = vunpack.c.l.b16 %v3185
  %v3233 = vunpack.c.h.b16 %v3185
  %v3234 = vunpack.c.l.b16 %v3186
  %v3235 = vunpack.c.h.b16 %v3186
  %v3236 = vunpack.c.l.b16 %v3187
  %v3237 = vunpack.c.h.b16 %v3187
  %v3238 = vunpack.c.l.b16 %v3188
  %v3239 = vunpack.c.h.b16 %v3188
  %v3240 = vunpack.c.l.b16 %v3189
  %v3241 = vunpack.c.h.b16 %v3189
  %v3242 = vunpack.c.l.b16 %v3190
  %v3243 = vunpack.c.h.b16 %v3190
  %v3244 = vunpack.c.l.b16 %v3191
  %v3245 = vunpack.c.h.b16 %v3191
  %v3246 = vunpack.c.l.b16 %v3192
  %v3247 = vunpack.c.h.b16 %v3192
  %v3248 = vunpack.c.l.b16 %v3193
  %v3249 = vunpack.c.h.b16 %v3193
  %v3250 = vunpack.c.l.b16 %v3194
  %v3251 = vunpack.c.h.b16 %v3194
  %v3252 = vunpack.c.l.b16 %v3195
  %v3253 = vunpack.c.h.b16 %v3195
  %v3254 = vunpack.c.l.b16 %v3196
  %v3255 = vunpack.c.h.b16 %v3196
  %v3256 = vunpack.c.l.b16 %v3197
  %v3257 = vunpack.c.h.b16 %v3197
  %v3258 = vpack.c.b16 %v3228, %v3226
  %v3259 = vpack.c.b16 %v3229, %v3227
  %v3260 = vpack.c.b16 %v3232, %v3230
  %v3261 = vpack.c.b16 %v3233, %v3231
  %v3262 = vpack.c.b16 %v3236, %v3234
  %v3263 = vpack.c.b16 %v3237, %v3235
  %v3264 = vpack.c.b16 %v3240, %v3238
  %v3265 = vpack.c.b16 %v3241, %v3239
  %v3266 = vpack.c.b16 %v3244, %v3242
  %v3267 = vpack.c.b16 %v3245, %v3243
  %v3268 = vpack.c.b16 %v3248, %v3246
  %v3269 = vpack.c.b16 %v3249, %v3247
  %v3270 = vpack.c.b16 %v3252, %v3250
  %v3271 = vpack.c.b16 %v3253, %v3251
  %v3272 = vpack.c.b16 %v3256, %v3254
  %v3273 = vpack.c.b16 %v3257, %v3255
  %3290 = vmatpush.bf16.msra.mxu0 %v3272
  %3291 = vmatpush.bf16.msra.mxu0 %v3270
  %3292 = vmatpush.bf16.msra.mxu0 %v3268
  %3293 = vmatpush.bf16.msra.mxu0 %v3266
  %3294 = vmatpush.bf16.msra.mxu0 %v3264
  %3295 = vmatpush.bf16.msra.mxu0 %v3262
  %3296 = vmatpush.bf16.msra.mxu0 %v3260
  %3297 = vmatpush.bf16.msra.mxu0 %v3258
  %3298 = vmatmul.bf16.gmra.mxu0 %v2513
  %v3299 = vpop.f32.mrf.mxu0
  %v3300 = vadd.f32 0.0, %v3299
  %v3301 = vpop.f32.mrf.mxu0
  %v3302 = vadd.f32 0.0, %v3301
  %3303 = vmatmul.bf16.gmra.mxu0 %v2514
  %v3304 = vpop.f32.mrf.mxu0
  %v3305 = vadd.f32 0.0, %v3304
  %v3306 = vpop.f32.mrf.mxu0
  %v3307 = vadd.f32 0.0, %v3306
  %3308 = vmatmul.bf16.gmra.mxu0 %v2515
  %v3309 = vpop.f32.mrf.mxu0
  %v3310 = vadd.f32 0.0, %v3309
  %v3311 = vpop.f32.mrf.mxu0
  %v3312 = vadd.f32 0.0, %v3311
  %3313 = vmatmul.bf16.gmra.mxu0 %v2516
  %v3314 = vpop.f32.mrf.mxu0
  %v3315 = vadd.f32 0.0, %v3314
  %v3316 = vpop.f32.mrf.mxu0
  %v3317 = vadd.f32 0.0, %v3316
  %3318 = vmatmul.bf16.gmra.mxu0 %v2728
  %v3319 = vpop.f32.mrf.mxu0
  %v3320 = vadd.f32 0.0, %v3319
  %v3321 = vpop.f32.mrf.mxu0
  %v3322 = vadd.f32 0.0, %v3321
  %3323 = vmatmul.bf16.gmra.mxu0 %v2729
  %v3324 = vpop.f32.mrf.mxu0
  %v3325 = vadd.f32 0.0, %v3324
  %v3326 = vpop.f32.mrf.mxu0
  %v3327 = vadd.f32 0.0, %v3326
  %3328 = vmatmul.bf16.gmra.mxu0 %v3206
  %v3329 = vpop.f32.mrf.mxu0
  %v3330 = vadd.f32 0.0, %v3329
  %v3331 = vpop.f32.mrf.mxu0
  %v3332 = vadd.f32 0.0, %v3331
  %3333 = vmatmul.bf16.gmra.mxu0 %v3207
  %v3334 = vpop.f32.mrf.mxu0
  %v3335 = vadd.f32 0.0, %v3334
  %v3336 = vpop.f32.mrf.mxu0
  %v3337 = vadd.f32 0.0, %v3336
  %3338 = vdwg.mxu0
  %3339 = vmatpush.bf16.msra.mxu0 %v3273
  %3340 = vmatpush.bf16.msra.mxu0 %v3271
  %3341 = vmatpush.bf16.msra.mxu0 %v3269
  %3342 = vmatpush.bf16.msra.mxu0 %v3267
  %3343 = vmatpush.bf16.msra.mxu0 %v3265
  %3344 = vmatpush.bf16.msra.mxu0 %v3263
  %3345 = vmatpush.bf16.msra.mxu0 %v3261
  %3346 = vmatpush.bf16.msra.mxu0 %v3259
  %3347 = vmatmul.bf16.gmra.mxu0 %v2513
  %v3348 = vpop.f32.mrf.mxu0
  %v3349 = vadd.f32 0.0, %v3348
  %v3350 = vpop.f32.mrf.mxu0
  %v3351 = vadd.f32 0.0, %v3350
  %3352 = vmatmul.bf16.gmra.mxu0 %v2514
  %v3353 = vpop.f32.mrf.mxu0
  %v3354 = vadd.f32 0.0, %v3353
  %v3355 = vpop.f32.mrf.mxu0
  %v3356 = vadd.f32 0.0, %v3355
  %3357 = vmatmul.bf16.gmra.mxu0 %v2515
  %v3358 = vpop.f32.mrf.mxu0
  %v3359 = vadd.f32 0.0, %v3358
  %v3360 = vpop.f32.mrf.mxu0
  %v3361 = vadd.f32 0.0, %v3360
  %3362 = vmatmul.bf16.gmra.mxu0 %v2516
  %v3363 = vpop.f32.mrf.mxu0
  %v3364 = vadd.f32 0.0, %v3363
  %v3365 = vpop.f32.mrf.mxu0
  %v3366 = vadd.f32 0.0, %v3365
  %3367 = vmatmul.bf16.gmra.mxu0 %v2728
  %v3368 = vpop.f32.mrf.mxu0
  %v3369 = vadd.f32 0.0, %v3368
  %v3370 = vpop.f32.mrf.mxu0
  %v3371 = vadd.f32 0.0, %v3370
  %3372 = vmatmul.bf16.gmra.mxu0 %v2729
  %v3373 = vpop.f32.mrf.mxu0
  %v3374 = vadd.f32 0.0, %v3373
  %v3375 = vpop.f32.mrf.mxu0
  %v3376 = vadd.f32 0.0, %v3375
  %3377 = vmatmul.bf16.gmra.mxu0 %v3206
  %v3378 = vpop.f32.mrf.mxu0
  %v3379 = vadd.f32 0.0, %v3378
  %v3380 = vpop.f32.mrf.mxu0
  %v3381 = vadd.f32 0.0, %v3380
  %3382 = vmatmul.bf16.gmra.mxu0 %v3207
  %v3383 = vpop.f32.mrf.mxu0
  %v3384 = vadd.f32 0.0, %v3383
  %v3385 = vpop.f32.mrf.mxu0
  %v3386 = vadd.f32 0.0, %v3385
  %3387 = vdwg.mxu0
  %v3388 = vadd.f32 %v3149, %v3300
  %v3389 = vadd.f32 %v3150, %v3349
  %v3390 = vadd.f32 %v3151, %v3302
  %v3391 = vadd.f32 %v3152, %v3351
  %v3392 = vadd.f32 %v3153, %v3305
  %v3393 = vadd.f32 %v3154, %v3354
  %v3394 = vadd.f32 %v3155, %v3307
  %v3395 = vadd.f32 %v3156, %v3356
  %v3396 = vadd.f32 %v3157, %v3310
  %v3397 = vadd.f32 %v3158, %v3359
  %v3398 = vadd.f32 %v3159, %v3312
  %v3399 = vadd.f32 %v3160, %v3361
  %v3400 = vadd.f32 %v3161, %v3315
  %v3401 = vadd.f32 %v3162, %v3364
  %v3402 = vadd.f32 %v3163, %v3317
  %v3403 = vadd.f32 %v3164, %v3366
  %v3404 = vadd.f32 %v3165, %v3320
  %v3405 = vadd.f32 %v3166, %v3369
  %v3406 = vadd.f32 %v3167, %v3322
  %v3407 = vadd.f32 %v3168, %v3371
  %v3408 = vadd.f32 %v3169, %v3325
  %v3409 = vadd.f32 %v3170, %v3374
  %v3410 = vadd.f32 %v3171, %v3327
  %v3411 = vadd.f32 %v3172, %v3376
  %v3412 = vadd.f32 %v3173, %v3330
  %v3413 = vadd.f32 %v3174, %v3379
  %v3414 = vadd.f32 %v3175, %v3332
  %v3415 = vadd.f32 %v3176, %v3381
  %v3416 = vadd.f32 %v3177, %v3335
  %v3417 = vadd.f32 %v3178, %v3384
  %v3418 = vadd.f32 %v3179, %v3337
  %v3419 = vadd.f32 %v3180, %v3386
  %v3420 = vmax.f32 %v3388, %v3389
  %v3421 = vmax.f32 %v3390, %v3391
  %v3422 = vmax.f32 %v3392, %v3393
  %v3423 = vmax.f32 %v3394, %v3395
  %v3424 = vmax.f32 %v3396, %v3397
  %v3425 = vmax.f32 %v3398, %v3399
  %v3426 = vmax.f32 %v3400, %v3401
  %v3427 = vmax.f32 %v3402, %v3403
  %v3428 = vmax.f32 %v3404, %v3405
  %v3429 = vmax.f32 %v3406, %v3407
  %v3430 = vmax.f32 %v3408, %v3409
  %v3431 = vmax.f32 %v3410, %v3411
  %v3432 = vmax.f32 %v3412, %v3413
  %v3433 = vmax.f32 %v3414, %v3415
  %v3434 = vmax.f32 %v3416, %v3417
  %v3435 = vmax.f32 %v3418, %v3419
  %3436 = vmatpush.bf16.msra.mxu0 %v2361
  %3437 = vmatpush.bf16.msra.mxu0 %v2359
  %3438 = vmatpush.bf16.msra.mxu0 %v2357
  %3439 = vmatpush.bf16.msra.mxu0 %v2355
  %3440 = vmatpush.bf16.msra.mxu0 %v2353
  %3441 = vmatpush.bf16.msra.mxu0 %v2351
  %3442 = vmatpush.bf16.msra.mxu0 %v2349
  %3443 = vmatpush.bf16.msra.mxu0 %v2347
  %3444 = vmatmul.bf16.gmra.mxu0 %v2511
  %v3445 = vpop.f32.mrf.mxu0
  %v3446 = vadd.f32 0.0, %v3445
  %v3447 = vpop.f32.mrf.mxu0
  %v3448 = vadd.f32 0.0, %v3447
  %3449 = vmatmul.bf16.gmra.mxu0 %v2512
  %v3450 = vpop.f32.mrf.mxu0
  %v3451 = vadd.f32 0.0, %v3450
  %v3452 = vpop.f32.mrf.mxu0
  %v3453 = vadd.f32 0.0, %v3452
  %3454 = vmatmul.bf16.gmra.mxu0 %v2513
  %v3455 = vpop.f32.mrf.mxu0
  %v3456 = vadd.f32 0.0, %v3455
  %v3457 = vpop.f32.mrf.mxu0
  %v3458 = vadd.f32 0.0, %v3457
  %3459 = vmatmul.bf16.gmra.mxu0 %v2514
  %v3460 = vpop.f32.mrf.mxu0
  %v3461 = vadd.f32 0.0, %v3460
  %v3462 = vpop.f32.mrf.mxu0
  %v3463 = vadd.f32 0.0, %v3462
  %3464 = vmatmul.bf16.gmra.mxu0 %v2515
  %v3465 = vpop.f32.mrf.mxu0
  %v3466 = vadd.f32 0.0, %v3465
  %v3467 = vpop.f32.mrf.mxu0
  %v3468 = vadd.f32 0.0, %v3467
  %3469 = vmatmul.bf16.gmra.mxu0 %v2516
  %v3470 = vpop.f32.mrf.mxu0
  %v3471 = vadd.f32 0.0, %v3470
  %v3472 = vpop.f32.mrf.mxu0
  %v3473 = vadd.f32 0.0, %v3472
  %3474 = vmatmul.bf16.gmra.mxu0 %v2728
  %v3475 = vpop.f32.mrf.mxu0
  %v3476 = vadd.f32 0.0, %v3475
  %v3477 = vpop.f32.mrf.mxu0
  %v3478 = vadd.f32 0.0, %v3477
  %3479 = vmatmul.bf16.gmra.mxu0 %v2729
  %v3480 = vpop.f32.mrf.mxu0
  %v3481 = vadd.f32 0.0, %v3480
  %v3482 = vpop.f32.mrf.mxu0
  %v3483 = vadd.f32 0.0, %v3482
  %3484 = vdwg.mxu0
  %3485 = vmatpush.bf16.msra.mxu0 %v2362
  %3486 = vmatpush.bf16.msra.mxu0 %v2360
  %3487 = vmatpush.bf16.msra.mxu0 %v2358
  %3488 = vmatpush.bf16.msra.mxu0 %v2356
  %3489 = vmatpush.bf16.msra.mxu0 %v2354
  %3490 = vmatpush.bf16.msra.mxu0 %v2352
  %3491 = vmatpush.bf16.msra.mxu0 %v2350
  %3492 = vmatpush.bf16.msra.mxu0 %v2348
  %3493 = vmatmul.bf16.gmra.mxu0 %v2511
  %v3494 = vpop.f32.mrf.mxu0
  %v3495 = vadd.f32 0.0, %v3494
  %v3496 = vpop.f32.mrf.mxu0
  %v3497 = vadd.f32 0.0, %v3496
  %3498 = vmatmul.bf16.gmra.mxu0 %v2512
  %v3499 = vpop.f32.mrf.mxu0
  %v3500 = vadd.f32 0.0, %v3499
  %v3501 = vpop.f32.mrf.mxu0
  %v3502 = vadd.f32 0.0, %v3501
  %3503 = vmatmul.bf16.gmra.mxu0 %v2513
  %v3504 = vpop.f32.mrf.mxu0
  %v3505 = vadd.f32 0.0, %v3504
  %v3506 = vpop.f32.mrf.mxu0
  %v3507 = vadd.f32 0.0, %v3506
  %3508 = vmatmul.bf16.gmra.mxu0 %v2514
  %v3509 = vpop.f32.mrf.mxu0
  %v3510 = vadd.f32 0.0, %v3509
  %v3511 = vpop.f32.mrf.mxu0
  %v3512 = vadd.f32 0.0, %v3511
  %3513 = vmatmul.bf16.gmra.mxu0 %v2515
  %v3514 = vpop.f32.mrf.mxu0
  %v3515 = vadd.f32 0.0, %v3514
  %v3516 = vpop.f32.mrf.mxu0
  %v3517 = vadd.f32 0.0, %v3516
  %3518 = vmatmul.bf16.gmra.mxu0 %v2516
  %v3519 = vpop.f32.mrf.mxu0
  %v3520 = vadd.f32 0.0, %v3519
  %v3521 = vpop.f32.mrf.mxu0
  %v3522 = vadd.f32 0.0, %v3521
  %3523 = vmatmul.bf16.gmra.mxu0 %v2728
  %v3524 = vpop.f32.mrf.mxu0
  %v3525 = vadd.f32 0.0, %v3524
  %v3526 = vpop.f32.mrf.mxu0
  %v3527 = vadd.f32 0.0, %v3526
  %3528 = vmatmul.bf16.gmra.mxu0 %v2729
  %v3529 = vpop.f32.mrf.mxu0
  %v3530 = vadd.f32 0.0, %v3529
  %v3531 = vpop.f32.mrf.mxu0
  %v3532 = vadd.f32 0.0, %v3531
  %3533 = vdwg.mxu0
  %3534 = vmatpush.bf16.msra.mxu0 %v2587
  %3535 = vmatpush.bf16.msra.mxu0 %v2585
  %3536 = vmatpush.bf16.msra.mxu0 %v2583
  %3537 = vmatpush.bf16.msra.mxu0 %v2581
  %3538 = vmatpush.bf16.msra.mxu0 %v2579
  %3539 = vmatpush.bf16.msra.mxu0 %v2577
  %3540 = vmatpush.bf16.msra.mxu0 %v2575
  %3541 = vmatpush.bf16.msra.mxu0 %v2573
  %3542 = vmatmul.bf16.gmra.mxu0 %v2283
  %v3543 = vpop.f32.mrf.mxu0
  %v3544 = vadd.f32 %v3446, %v3543
  %v3545 = vpop.f32.mrf.mxu0
  %v3546 = vadd.f32 %v3448, %v3545
  %3547 = vmatmul.bf16.gmra.mxu0 %v2284
  %v3548 = vpop.f32.mrf.mxu0
  %v3549 = vadd.f32 %v3451, %v3548
  %v3550 = vpop.f32.mrf.mxu0
  %v3551 = vadd.f32 %v3453, %v3550
  %3552 = vmatmul.bf16.gmra.mxu0 %v2285
  %v3553 = vpop.f32.mrf.mxu0
  %v3554 = vadd.f32 %v3456, %v3553
  %v3555 = vpop.f32.mrf.mxu0
  %v3556 = vadd.f32 %v3458, %v3555
  %3557 = vmatmul.bf16.gmra.mxu0 %v2286
  %v3558 = vpop.f32.mrf.mxu0
  %v3559 = vadd.f32 %v3461, %v3558
  %v3560 = vpop.f32.mrf.mxu0
  %v3561 = vadd.f32 %v3463, %v3560
  %3562 = vmatmul.bf16.gmra.mxu0 %v2287
  %v3563 = vpop.f32.mrf.mxu0
  %v3564 = vadd.f32 %v3466, %v3563
  %v3565 = vpop.f32.mrf.mxu0
  %v3566 = vadd.f32 %v3468, %v3565
  %3567 = vmatmul.bf16.gmra.mxu0 %v2288
  %v3568 = vpop.f32.mrf.mxu0
  %v3569 = vadd.f32 %v3471, %v3568
  %v3570 = vpop.f32.mrf.mxu0
  %v3571 = vadd.f32 %v3473, %v3570
  %3572 = vmatmul.bf16.gmra.mxu0 %v2289
  %v3573 = vpop.f32.mrf.mxu0
  %v3574 = vadd.f32 %v3476, %v3573
  %v3575 = vpop.f32.mrf.mxu0
  %v3576 = vadd.f32 %v3478, %v3575
  %3577 = vmatmul.bf16.gmra.mxu0 %v2290
  %v3578 = vpop.f32.mrf.mxu0
  %v3579 = vadd.f32 %v3481, %v3578
  %v3580 = vpop.f32.mrf.mxu0
  %v3581 = vadd.f32 %v3483, %v3580
  %3582 = vdwg.mxu0
  %3583 = vmatpush.bf16.msra.mxu0 %v2588
  %3584 = vmatpush.bf16.msra.mxu0 %v2586
  %3585 = vmatpush.bf16.msra.mxu0 %v2584
  %3586 = vmatpush.bf16.msra.mxu0 %v2582
  %3587 = vmatpush.bf16.msra.mxu0 %v2580
  %3588 = vmatpush.bf16.msra.mxu0 %v2578
  %3589 = vmatpush.bf16.msra.mxu0 %v2576
  %3590 = vmatpush.bf16.msra.mxu0 %v2574
  %3591 = vmatmul.bf16.gmra.mxu0 %v2283
  %v3592 = vpop.f32.mrf.mxu0
  %v3593 = vadd.f32 %v3495, %v3592
  %v3594 = vpop.f32.mrf.mxu0
  %v3595 = vadd.f32 %v3497, %v3594
  %3596 = vmatmul.bf16.gmra.mxu0 %v2284
  %v3597 = vpop.f32.mrf.mxu0
  %v3598 = vadd.f32 %v3500, %v3597
  %v3599 = vpop.f32.mrf.mxu0
  %v3600 = vadd.f32 %v3502, %v3599
  %3601 = vmatmul.bf16.gmra.mxu0 %v2285
  %v3602 = vpop.f32.mrf.mxu0
  %v3603 = vadd.f32 %v3505, %v3602
  %v3604 = vpop.f32.mrf.mxu0
  %v3605 = vadd.f32 %v3507, %v3604
  %3606 = vmatmul.bf16.gmra.mxu0 %v2286
  %v3607 = vpop.f32.mrf.mxu0
  %v3608 = vadd.f32 %v3510, %v3607
  %v3609 = vpop.f32.mrf.mxu0
  %v3610 = vadd.f32 %v3512, %v3609
  %3611 = vmatmul.bf16.gmra.mxu0 %v2287
  %v3612 = vpop.f32.mrf.mxu0
  %v3613 = vadd.f32 %v3515, %v3612
  %v3614 = vpop.f32.mrf.mxu0
  %v3615 = vadd.f32 %v3517, %v3614
  %3616 = vmatmul.bf16.gmra.mxu0 %v2288
  %v3617 = vpop.f32.mrf.mxu0
  %v3618 = vadd.f32 %v3520, %v3617
  %v3619 = vpop.f32.mrf.mxu0
  %v3620 = vadd.f32 %v3522, %v3619
  %3621 = vmatmul.bf16.gmra.mxu0 %v2289
  %v3622 = vpop.f32.mrf.mxu0
  %v3623 = vadd.f32 %v3525, %v3622
  %v3624 = vpop.f32.mrf.mxu0
  %v3625 = vadd.f32 %v3527, %v3624
  %3626 = vmatmul.bf16.gmra.mxu0 %v2290
  %v3627 = vpop.f32.mrf.mxu0
  %v3628 = vadd.f32 %v3530, %v3627
  %v3629 = vpop.f32.mrf.mxu0
  %v3630 = vadd.f32 %v3532, %v3629
  %3631 = vdwg.mxu0
  %3632 = vmatpush.bf16.msra.mxu0 %v2794
  %3633 = vmatpush.bf16.msra.mxu0 %v2792
  %3634 = vmatpush.bf16.msra.mxu0 %v2790
  %3635 = vmatpush.bf16.msra.mxu0 %v2788
  %3636 = vmatpush.bf16.msra.mxu0 %v2786
  %3637 = vmatpush.bf16.msra.mxu0 %v2784
  %3638 = vmatpush.bf16.msra.mxu0 %v2782
  %3639 = vmatpush.bf16.msra.mxu0 %v2780
  %3640 = vmatmul.bf16.gmra.mxu0 %v2285
  %v3641 = vpop.f32.mrf.mxu0
  %v3642 = vadd.f32 0.0, %v3641
  %v3643 = vpop.f32.mrf.mxu0
  %v3644 = vadd.f32 0.0, %v3643
  %3645 = vmatmul.bf16.gmra.mxu0 %v2286
  %v3646 = vpop.f32.mrf.mxu0
  %v3647 = vadd.f32 0.0, %v3646
  %v3648 = vpop.f32.mrf.mxu0
  %v3649 = vadd.f32 0.0, %v3648
  %3650 = vmatmul.bf16.gmra.mxu0 %v2287
  %v3651 = vpop.f32.mrf.mxu0
  %v3652 = vadd.f32 0.0, %v3651
  %v3653 = vpop.f32.mrf.mxu0
  %v3654 = vadd.f32 0.0, %v3653
  %3655 = vmatmul.bf16.gmra.mxu0 %v2288
  %v3656 = vpop.f32.mrf.mxu0
  %v3657 = vadd.f32 0.0, %v3656
  %v3658 = vpop.f32.mrf.mxu0
  %v3659 = vadd.f32 0.0, %v3658
  %3660 = vmatmul.bf16.gmra.mxu0 %v2289
  %v3661 = vpop.f32.mrf.mxu0
  %v3662 = vadd.f32 0.0, %v3661
  %v3663 = vpop.f32.mrf.mxu0
  %v3664 = vadd.f32 0.0, %v3663
  %3665 = vmatmul.bf16.gmra.mxu0 %v2290
  %v3666 = vpop.f32.mrf.mxu0
  %v3667 = vadd.f32 0.0, %v3666
  %v3668 = vpop.f32.mrf.mxu0
  %v3669 = vadd.f32 0.0, %v3668
  %3670 = vmatmul.bf16.gmra.mxu0 %v2967
  %v3671 = vpop.f32.mrf.mxu0
  %v3672 = vadd.f32 0.0, %v3671
  %v3673 = vpop.f32.mrf.mxu0
  %v3674 = vadd.f32 0.0, %v3673
  %3675 = vmatmul.bf16.gmra.mxu0 %v2968
  %v3676 = vpop.f32.mrf.mxu0
  %v3677 = vadd.f32 0.0, %v3676
  %v3678 = vpop.f32.mrf.mxu0
  %v3679 = vadd.f32 0.0, %v3678
  %3680 = vdwg.mxu0
  %3681 = vmatpush.bf16.msra.mxu0 %v2795
  %3682 = vmatpush.bf16.msra.mxu0 %v2793
  %3683 = vmatpush.bf16.msra.mxu0 %v2791
  %3684 = vmatpush.bf16.msra.mxu0 %v2789
  %3685 = vmatpush.bf16.msra.mxu0 %v2787
  %3686 = vmatpush.bf16.msra.mxu0 %v2785
  %3687 = vmatpush.bf16.msra.mxu0 %v2783
  %3688 = vmatpush.bf16.msra.mxu0 %v2781
  %3689 = vmatmul.bf16.gmra.mxu0 %v2285
  %v3690 = vpop.f32.mrf.mxu0
  %v3691 = vadd.f32 0.0, %v3690
  %v3692 = vpop.f32.mrf.mxu0
  %v3693 = vadd.f32 0.0, %v3692
  %3694 = vmatmul.bf16.gmra.mxu0 %v2286
  %v3695 = vpop.f32.mrf.mxu0
  %v3696 = vadd.f32 0.0, %v3695
  %v3697 = vpop.f32.mrf.mxu0
  %v3698 = vadd.f32 0.0, %v3697
  %3699 = vmatmul.bf16.gmra.mxu0 %v2287
  %v3700 = vpop.f32.mrf.mxu0
  %v3701 = vadd.f32 0.0, %v3700
  %v3702 = vpop.f32.mrf.mxu0
  %v3703 = vadd.f32 0.0, %v3702
  %3704 = vmatmul.bf16.gmra.mxu0 %v2288
  %v3705 = vpop.f32.mrf.mxu0
  %v3706 = vadd.f32 0.0, %v3705
  %v3707 = vpop.f32.mrf.mxu0
  %v3708 = vadd.f32 0.0, %v3707
  %3709 = vmatmul.bf16.gmra.mxu0 %v2289
  %v3710 = vpop.f32.mrf.mxu0
  %v3711 = vadd.f32 0.0, %v3710
  %v3712 = vpop.f32.mrf.mxu0
  %v3713 = vadd.f32 0.0, %v3712
  %3714 = vmatmul.bf16.gmra.mxu0 %v2290
  %v3715 = vpop.f32.mrf.mxu0
  %v3716 = vadd.f32 0.0, %v3715
  %v3717 = vpop.f32.mrf.mxu0
  %v3718 = vadd.f32 0.0, %v3717
  %3719 = vmatmul.bf16.gmra.mxu0 %v2967
  %v3720 = vpop.f32.mrf.mxu0
  %v3721 = vadd.f32 0.0, %v3720
  %v3722 = vpop.f32.mrf.mxu0
  %v3723 = vadd.f32 0.0, %v3722
  %3724 = vmatmul.bf16.gmra.mxu0 %v2968
  %v3725 = vpop.f32.mrf.mxu0
  %v3726 = vadd.f32 0.0, %v3725
  %v3727 = vpop.f32.mrf.mxu0
  %v3728 = vadd.f32 0.0, %v3727
  %3729 = vdwg.mxu0
  %v3730 = vadd.f32 %v3544, %v3642
  %v3731 = vadd.f32 %v3593, %v3691
  %v3732 = vadd.f32 %v3546, %v3644
  %v3733 = vadd.f32 %v3595, %v3693
  %v3734 = vadd.f32 %v3549, %v3647
  %v3735 = vadd.f32 %v3598, %v3696
  %v3736 = vadd.f32 %v3551, %v3649
  %v3737 = vadd.f32 %v3600, %v3698
  %v3738 = vadd.f32 %v3554, %v3652
  %v3739 = vadd.f32 %v3603, %v3701
  %v3740 = vadd.f32 %v3556, %v3654
  %v3741 = vadd.f32 %v3605, %v3703
  %v3742 = vadd.f32 %v3559, %v3657
  %v3743 = vadd.f32 %v3608, %v3706
  %v3744 = vadd.f32 %v3561, %v3659
  %v3745 = vadd.f32 %v3610, %v3708
  %v3746 = vadd.f32 %v3564, %v3662
  %v3747 = vadd.f32 %v3613, %v3711
  %v3748 = vadd.f32 %v3566, %v3664
  %v3749 = vadd.f32 %v3615, %v3713
  %v3750 = vadd.f32 %v3569, %v3667
  %v3751 = vadd.f32 %v3618, %v3716
  %v3752 = vadd.f32 %v3571, %v3669
  %v3753 = vadd.f32 %v3620, %v3718
  %v3754 = vadd.f32 %v3574, %v3672
  %v3755 = vadd.f32 %v3623, %v3721
  %v3756 = vadd.f32 %v3576, %v3674
  %v3757 = vadd.f32 %v3625, %v3723
  %v3758 = vadd.f32 %v3579, %v3677
  %v3759 = vadd.f32 %v3628, %v3726
  %v3760 = vadd.f32 %v3581, %v3679
  %v3761 = vadd.f32 %v3630, %v3728
  %3762 = vmatpush.bf16.msra.mxu0 %v3033
  %3763 = vmatpush.bf16.msra.mxu0 %v3031
  %3764 = vmatpush.bf16.msra.mxu0 %v3029
  %3765 = vmatpush.bf16.msra.mxu0 %v3027
  %3766 = vmatpush.bf16.msra.mxu0 %v3025
  %3767 = vmatpush.bf16.msra.mxu0 %v3023
  %3768 = vmatpush.bf16.msra.mxu0 %v3021
  %3769 = vmatpush.bf16.msra.mxu0 %v3019
  %3770 = vmatmul.bf16.gmra.mxu0 %v2513
  %v3771 = vpop.f32.mrf.mxu0
  %v3772 = vadd.f32 0.0, %v3771
  %v3773 = vpop.f32.mrf.mxu0
  %v3774 = vadd.f32 0.0, %v3773
  %3775 = vmatmul.bf16.gmra.mxu0 %v2514
  %v3776 = vpop.f32.mrf.mxu0
  %v3777 = vadd.f32 0.0, %v3776
  %v3778 = vpop.f32.mrf.mxu0
  %v3779 = vadd.f32 0.0, %v3778
  %3780 = vmatmul.bf16.gmra.mxu0 %v2515
  %v3781 = vpop.f32.mrf.mxu0
  %v3782 = vadd.f32 0.0, %v3781
  %v3783 = vpop.f32.mrf.mxu0
  %v3784 = vadd.f32 0.0, %v3783
  %3785 = vmatmul.bf16.gmra.mxu0 %v2516
  %v3786 = vpop.f32.mrf.mxu0
  %v3787 = vadd.f32 0.0, %v3786
  %v3788 = vpop.f32.mrf.mxu0
  %v3789 = vadd.f32 0.0, %v3788
  %3790 = vmatmul.bf16.gmra.mxu0 %v2728
  %v3791 = vpop.f32.mrf.mxu0
  %v3792 = vadd.f32 0.0, %v3791
  %v3793 = vpop.f32.mrf.mxu0
  %v3794 = vadd.f32 0.0, %v3793
  %3795 = vmatmul.bf16.gmra.mxu0 %v2729
  %v3796 = vpop.f32.mrf.mxu0
  %v3797 = vadd.f32 0.0, %v3796
  %v3798 = vpop.f32.mrf.mxu0
  %v3799 = vadd.f32 0.0, %v3798
  %3800 = vmatmul.bf16.gmra.mxu0 %v3206
  %v3801 = vpop.f32.mrf.mxu0
  %v3802 = vadd.f32 0.0, %v3801
  %v3803 = vpop.f32.mrf.mxu0
  %v3804 = vadd.f32 0.0, %v3803
  %3805 = vmatmul.bf16.gmra.mxu0 %v3207
  %v3806 = vpop.f32.mrf.mxu0
  %v3807 = vadd.f32 0.0, %v3806
  %v3808 = vpop.f32.mrf.mxu0
  %v3809 = vadd.f32 0.0, %v3808
  %3810 = vdwg.mxu0
  %3811 = vmatpush.bf16.msra.mxu0 %v3034
  %3812 = vmatpush.bf16.msra.mxu0 %v3032
  %3813 = vmatpush.bf16.msra.mxu0 %v3030
  %3814 = vmatpush.bf16.msra.mxu0 %v3028
  %3815 = vmatpush.bf16.msra.mxu0 %v3026
  %3816 = vmatpush.bf16.msra.mxu0 %v3024
  %3817 = vmatpush.bf16.msra.mxu0 %v3022
  %3818 = vmatpush.bf16.msra.mxu0 %v3020
  %3819 = vmatmul.bf16.gmra.mxu0 %v2513
  %v3820 = vpop.f32.mrf.mxu0
  %v3821 = vadd.f32 0.0, %v3820
  %v3822 = vpop.f32.mrf.mxu0
  %v3823 = vadd.f32 0.0, %v3822
  %3824 = vmatmul.bf16.gmra.mxu0 %v2514
  %v3825 = vpop.f32.mrf.mxu0
  %v3826 = vadd.f32 0.0, %v3825
  %v3827 = vpop.f32.mrf.mxu0
  %v3828 = vadd.f32 0.0, %v3827
  %3829 = vmatmul.bf16.gmra.mxu0 %v2515
  %v3830 = vpop.f32.mrf.mxu0
  %v3831 = vadd.f32 0.0, %v3830
  %v3832 = vpop.f32.mrf.mxu0
  %v3833 = vadd.f32 0.0, %v3832
  %3834 = vmatmul.bf16.gmra.mxu0 %v2516
  %v3835 = vpop.f32.mrf.mxu0
  %v3836 = vadd.f32 0.0, %v3835
  %v3837 = vpop.f32.mrf.mxu0
  %v3838 = vadd.f32 0.0, %v3837
  %3839 = vmatmul.bf16.gmra.mxu0 %v2728
  %v3840 = vpop.f32.mrf.mxu0
  %v3841 = vadd.f32 0.0, %v3840
  %v3842 = vpop.f32.mrf.mxu0
  %v3843 = vadd.f32 0.0, %v3842
  %3844 = vmatmul.bf16.gmra.mxu0 %v2729
  %v3845 = vpop.f32.mrf.mxu0
  %v3846 = vadd.f32 0.0, %v3845
  %v3847 = vpop.f32.mrf.mxu0
  %v3848 = vadd.f32 0.0, %v3847
  %3849 = vmatmul.bf16.gmra.mxu0 %v3206
  %v3850 = vpop.f32.mrf.mxu0
  %v3851 = vadd.f32 0.0, %v3850
  %v3852 = vpop.f32.mrf.mxu0
  %v3853 = vadd.f32 0.0, %v3852
  %3854 = vmatmul.bf16.gmra.mxu0 %v3207
  %v3855 = vpop.f32.mrf.mxu0
  %v3856 = vadd.f32 0.0, %v3855
  %v3857 = vpop.f32.mrf.mxu0
  %v3858 = vadd.f32 0.0, %v3857
  %3859 = vdwg.mxu0
  %v3860 = vadd.f32 %v3730, %v3772
  %v3861 = vadd.f32 %v3731, %v3821
  %v3862 = vadd.f32 %v3732, %v3774
  %v3863 = vadd.f32 %v3733, %v3823
  %v3864 = vadd.f32 %v3734, %v3777
  %v3865 = vadd.f32 %v3735, %v3826
  %v3866 = vadd.f32 %v3736, %v3779
  %v3867 = vadd.f32 %v3737, %v3828
  %v3868 = vadd.f32 %v3738, %v3782
  %v3869 = vadd.f32 %v3739, %v3831
  %v3870 = vadd.f32 %v3740, %v3784
  %v3871 = vadd.f32 %v3741, %v3833
  %v3872 = vadd.f32 %v3742, %v3787
  %v3873 = vadd.f32 %v3743, %v3836
  %v3874 = vadd.f32 %v3744, %v3789
  %v3875 = vadd.f32 %v3745, %v3838
  %v3876 = vadd.f32 %v3746, %v3792
  %v3877 = vadd.f32 %v3747, %v3841
  %v3878 = vadd.f32 %v3748, %v3794
  %v3879 = vadd.f32 %v3749, %v3843
  %v3880 = vadd.f32 %v3750, %v3797
  %v3881 = vadd.f32 %v3751, %v3846
  %v3882 = vadd.f32 %v3752, %v3799
  %v3883 = vadd.f32 %v3753, %v3848
  %v3884 = vadd.f32 %v3754, %v3802
  %v3885 = vadd.f32 %v3755, %v3851
  %v3886 = vadd.f32 %v3756, %v3804
  %v3887 = vadd.f32 %v3757, %v3853
  %v3888 = vadd.f32 %v3758, %v3807
  %v3889 = vadd.f32 %v3759, %v3856
  %v3890 = vadd.f32 %v3760, %v3809
  %v3891 = vadd.f32 %v3761, %v3858
  %v3896 = vunpack.c.l.b16 %v2214
  %v3897 = vunpack.c.l.b16 %v2215
  %v3898 = vunpack.c.l.b16 %v2216
  %v3899 = vunpack.c.l.b16 %v2217
  %v3900 = vpack.c.b16 %v3897, %v3896
  %v3901 = vpack.c.b16 %v3899, %v3898
  %3904 = vmatpush.bf16.msra.mxu0 %v3272
  %3905 = vmatpush.bf16.msra.mxu0 %v3270
  %3906 = vmatpush.bf16.msra.mxu0 %v3268
  %3907 = vmatpush.bf16.msra.mxu0 %v3266
  %3908 = vmatpush.bf16.msra.mxu0 %v3264
  %3909 = vmatpush.bf16.msra.mxu0 %v3262
  %3910 = vmatpush.bf16.msra.mxu0 %v3260
  %3911 = vmatpush.bf16.msra.mxu0 %v3258
  %3912 = vmatmul.bf16.gmra.mxu0 %v2287
  %v3913 = vpop.f32.mrf.mxu0
  %v3914 = vadd.f32 0.0, %v3913
  %v3915 = vpop.f32.mrf.mxu0
  %v3916 = vadd.f32 0.0, %v3915
  %3917 = vmatmul.bf16.gmra.mxu0 %v2288
  %v3918 = vpop.f32.mrf.mxu0
  %v3919 = vadd.f32 0.0, %v3918
  %v3920 = vpop.f32.mrf.mxu0
  %v3921 = vadd.f32 0.0, %v3920
  %3922 = vmatmul.bf16.gmra.mxu0 %v2289
  %v3923 = vpop.f32.mrf.mxu0
  %v3924 = vadd.f32 0.0, %v3923
  %v3925 = vpop.f32.mrf.mxu0
  %v3926 = vadd.f32 0.0, %v3925
  %3927 = vmatmul.bf16.gmra.mxu0 %v2290
  %v3928 = vpop.f32.mrf.mxu0
  %v3929 = vadd.f32 0.0, %v3928
  %v3930 = vpop.f32.mrf.mxu0
  %v3931 = vadd.f32 0.0, %v3930
  %3932 = vmatmul.bf16.gmra.mxu0 %v2967
  %v3933 = vpop.f32.mrf.mxu0
  %v3934 = vadd.f32 0.0, %v3933
  %v3935 = vpop.f32.mrf.mxu0
  %v3936 = vadd.f32 0.0, %v3935
  %3937 = vmatmul.bf16.gmra.mxu0 %v2968
  %v3938 = vpop.f32.mrf.mxu0
  %v3939 = vadd.f32 0.0, %v3938
  %v3940 = vpop.f32.mrf.mxu0
  %v3941 = vadd.f32 0.0, %v3940
  %3942 = vmatmul.bf16.gmra.mxu0 %v3900
  %v3943 = vpop.f32.mrf.mxu0
  %v3944 = vadd.f32 0.0, %v3943
  %v3945 = vpop.f32.mrf.mxu0
  %v3946 = vadd.f32 0.0, %v3945
  %3947 = vmatmul.bf16.gmra.mxu0 %v3901
  %v3948 = vpop.f32.mrf.mxu0
  %v3949 = vadd.f32 0.0, %v3948
  %v3950 = vpop.f32.mrf.mxu0
  %v3951 = vadd.f32 0.0, %v3950
  %3952 = vdwg.mxu0
  %3953 = vmatpush.bf16.msra.mxu0 %v3273
  %3954 = vmatpush.bf16.msra.mxu0 %v3271
  %3955 = vmatpush.bf16.msra.mxu0 %v3269
  %3956 = vmatpush.bf16.msra.mxu0 %v3267
  %3957 = vmatpush.bf16.msra.mxu0 %v3265
  %3958 = vmatpush.bf16.msra.mxu0 %v3263
  %3959 = vmatpush.bf16.msra.mxu0 %v3261
  %3960 = vmatpush.bf16.msra.mxu0 %v3259
  %3961 = vmatmul.bf16.gmra.mxu0 %v2287
  %v3962 = vpop.f32.mrf.mxu0
  %v3963 = vadd.f32 0.0, %v3962
  %v3964 = vpop.f32.mrf.mxu0
  %v3965 = vadd.f32 0.0, %v3964
  %3966 = vmatmul.bf16.gmra.mxu0 %v2288
  %v3967 = vpop.f32.mrf.mxu0
  %v3968 = vadd.f32 0.0, %v3967
  %v3969 = vpop.f32.mrf.mxu0
  %v3970 = vadd.f32 0.0, %v3969
  %3971 = vmatmul.bf16.gmra.mxu0 %v2289
  %v3972 = vpop.f32.mrf.mxu0
  %v3973 = vadd.f32 0.0, %v3972
  %v3974 = vpop.f32.mrf.mxu0
  %v3975 = vadd.f32 0.0, %v3974
  %3976 = vmatmul.bf16.gmra.mxu0 %v2290
  %v3977 = vpop.f32.mrf.mxu0
  %v3978 = vadd.f32 0.0, %v3977
  %v3979 = vpop.f32.mrf.mxu0
  %v3980 = vadd.f32 0.0, %v3979
  %3981 = vmatmul.bf16.gmra.mxu0 %v2967
  %v3982 = vpop.f32.mrf.mxu0
  %v3983 = vadd.f32 0.0, %v3982
  %v3984 = vpop.f32.mrf.mxu0
  %v3985 = vadd.f32 0.0, %v3984
  %3986 = vmatmul.bf16.gmra.mxu0 %v2968
  %v3987 = vpop.f32.mrf.mxu0
  %v3988 = vadd.f32 0.0, %v3987
  %v3989 = vpop.f32.mrf.mxu0
  %v3990 = vadd.f32 0.0, %v3989
  %3991 = vmatmul.bf16.gmra.mxu0 %v3900
  %v3992 = vpop.f32.mrf.mxu0
  %v3993 = vadd.f32 0.0, %v3992
  %v3994 = vpop.f32.mrf.mxu0
  %v3995 = vadd.f32 0.0, %v3994
  %3996 = vmatmul.bf16.gmra.mxu0 %v3901
  %v3997 = vpop.f32.mrf.mxu0
  %v3998 = vadd.f32 0.0, %v3997
  %v3999 = vpop.f32.mrf.mxu0
  %v4000 = vadd.f32 0.0, %v3999
  %4001 = vdwg.mxu0
  %v4002 = vadd.f32 %v3860, %v3914
  %v4003 = vadd.f32 %v3861, %v3963
  %v4004 = vadd.f32 %v3862, %v3916
  %v4005 = vadd.f32 %v3863, %v3965
  %v4006 = vadd.f32 %v3864, %v3919
  %v4007 = vadd.f32 %v3865, %v3968
  %v4008 = vadd.f32 %v3866, %v3921
  %v4009 = vadd.f32 %v3867, %v3970
  %v4010 = vadd.f32 %v3868, %v3924
  %v4011 = vadd.f32 %v3869, %v3973
  %v4012 = vadd.f32 %v3870, %v3926
  %v4013 = vadd.f32 %v3871, %v3975
  %v4014 = vadd.f32 %v3872, %v3929
  %v4015 = vadd.f32 %v3873, %v3978
  %v4016 = vadd.f32 %v3874, %v3931
  %v4017 = vadd.f32 %v3875, %v3980
  %v4018 = vadd.f32 %v3876, %v3934
  %v4019 = vadd.f32 %v3877, %v3983
  %v4020 = vadd.f32 %v3878, %v3936
  %v4021 = vadd.f32 %v3879, %v3985
  %v4022 = vadd.f32 %v3880, %v3939
  %v4023 = vadd.f32 %v3881, %v3988
  %v4024 = vadd.f32 %v3882, %v3941
  %v4025 = vadd.f32 %v3883, %v3990
  %v4026 = vadd.f32 %v3884, %v3944
  %v4027 = vadd.f32 %v3885, %v3993
  %v4028 = vadd.f32 %v3886, %v3946
  %v4029 = vadd.f32 %v3887, %v3995
  %v4030 = vadd.f32 %v3888, %v3949
  %v4031 = vadd.f32 %v3889, %v3998
  %v4032 = vadd.f32 %v3890, %v3951
  %v4033 = vadd.f32 %v3891, %v4000
  %v4034 = vmax.f32 %v4002, %v4003
  %v4035 = vmax.f32 %v4004, %v4005
  %v4036 = vmax.f32 %v4006, %v4007
  %v4037 = vmax.f32 %v4008, %v4009
  %v4038 = vmax.f32 %v4010, %v4011
  %v4039 = vmax.f32 %v4012, %v4013
  %v4040 = vmax.f32 %v4014, %v4015
  %v4041 = vmax.f32 %v4016, %v4017
  %v4042 = vmax.f32 %v4018, %v4019
  %v4043 = vmax.f32 %v4020, %v4021
  %v4044 = vmax.f32 %v4022, %v4023
  %v4045 = vmax.f32 %v4024, %v4025
  %v4046 = vmax.f32 %v4026, %v4027
  %v4047 = vmax.f32 %v4028, %v4029
  %v4048 = vmax.f32 %v4030, %v4031
  %v4049 = vmax.f32 %v4032, %v4033
  %v4050 = vmax.f32 %v3420, %v4034
  %v4051 = vmax.f32 %v3421, %v4035
  %v4052 = vmax.f32 %v3422, %v4036
  %v4053 = vmax.f32 %v3423, %v4037
  %v4054 = vmax.f32 %v3424, %v4038
  %v4055 = vmax.f32 %v3425, %v4039
  %v4056 = vmax.f32 %v3426, %v4040
  %v4057 = vmax.f32 %v3427, %v4041
  %v4058 = vmax.f32 %v3428, %v4042
  %v4059 = vmax.f32 %v3429, %v4043
  %v4060 = vmax.f32 %v3430, %v4044
  %v4061 = vmax.f32 %v3431, %v4045
  %v4062 = vmax.f32 %v3432, %v4046
  %v4063 = vmax.f32 %v3433, %v4047
  %v4064 = vmax.f32 %v3434, %v4048
  %v4065 = vmax.f32 %v3435, %v4049
  %v4066 = vld [vmem:[%s4] sm:$0x1]
  %v4068 = vperm.slane %v4066, 0
  %v4070 = vadd.f32 %v4050, %v4068
  %v4071 = vadd.f32 %v4051, %v4068
  %v4072 = vadd.f32 %v4052, %v4068
  %v4073 = vadd.f32 %v4053, %v4068
  %v4074 = vadd.f32 %v4054, %v4068
  %v4075 = vadd.f32 %v4055, %v4068
  %v4076 = vadd.f32 %v4056, %v4068
  %v4077 = vadd.f32 %v4057, %v4068
  %v4078 = vadd.f32 %v4058, %v4068
  %v4079 = vadd.f32 %v4059, %v4068
  %v4080 = vadd.f32 %v4060, %v4068
  %v4081 = vadd.f32 %v4061, %v4068
  %v4082 = vadd.f32 %v4062, %v4068
  %v4083 = vadd.f32 %v4063, %v4068
  %v4084 = vadd.f32 %v4064, %v4068
  %v4085 = vadd.f32 %v4065, %v4068
  %v4086 = vmax.f32 %v4070, 0.0
  %v4087 = vmax.f32 %v4071, 0.0
  %v4088 = vmax.f32 %v4072, 0.0
  %v4089 = vmax.f32 %v4073, 0.0
  %v4090 = vmax.f32 %v4074, 0.0
  %v4091 = vmax.f32 %v4075, 0.0
  %v4092 = vmax.f32 %v4076, 0.0
  %v4093 = vmax.f32 %v4077, 0.0
  %v4094 = vmax.f32 %v4078, 0.0
  %v4095 = vmax.f32 %v4079, 0.0
  %v4096 = vmax.f32 %v4080, 0.0
  %v4097 = vmax.f32 %v4081, 0.0
  %v4098 = vmax.f32 %v4082, 0.0
  %v4099 = vmax.f32 %v4083, 0.0
  %v4100 = vmax.f32 %v4084, 0.0
  %v4101 = vmax.f32 %v4085, 0.0
  %v4102 = vpack.c.bf16 %v4086, %v4086
  %v4103 = vpack.c.bf16 %v4087, %v4087
  %v4104 = vpack.c.bf16 %v4088, %v4088
  %v4105 = vpack.c.bf16 %v4089, %v4089
  %v4106 = vpack.c.bf16 %v4090, %v4090
  %v4107 = vpack.c.bf16 %v4091, %v4091
  %v4108 = vpack.c.bf16 %v4092, %v4092
  %v4109 = vpack.c.bf16 %v4093, %v4093
  %v4110 = vpack.c.bf16 %v4094, %v4094
  %v4111 = vpack.c.bf16 %v4095, %v4095
  %v4112 = vpack.c.bf16 %v4096, %v4096
  %v4113 = vpack.c.bf16 %v4097, %v4097
  %v4114 = vpack.c.bf16 %v4098, %v4098
  %v4115 = vpack.c.bf16 %v4099, %v4099
  %v4116 = vpack.c.bf16 %v4100, %v4100
  %v4117 = vpack.c.bf16 %v4101, %v4101
  %v4118 = vld [vmem:[%s5] sm:$0xf]
  %v4119 = vld [vmem:[%s5 + $0x4] sm:$0xf]
  %v4120 = vld [vmem:[%s5 + $0x8] sm:$0xf]
  %v4121 = vld [vmem:[%s5 + $0xc] sm:$0xf]
  %v4122 = vld [vmem:[%s5 + $0x10] sm:$0xf]
  %v4123 = vld [vmem:[%s5 + $0x14] sm:$0xf]
  %v4124 = vld [vmem:[%s5 + $0x18] sm:$0xf]
  %v4125 = vld [vmem:[%s5 + $0x1c] sm:$0xf]
  %v4126 = vld [vmem:[%s5 + $0x20] sm:$0xf]
  %v4127 = vld [vmem:[%s5 + $0x24] sm:$0xf]
  %v4128 = vld [vmem:[%s5 + $0x28] sm:$0xf]
  %v4129 = vld [vmem:[%s5 + $0x2c] sm:$0xf]
  %v4130 = vld [vmem:[%s5 + $0x30] sm:$0xf]
  %v4131 = vld [vmem:[%s5 + $0x34] sm:$0xf]
  %v4132 = vld [vmem:[%s5 + $0x38] sm:$0xf]
  %v4133 = vld [vmem:[%s5 + $0x3c] sm:$0xf]
  %s4134 = scalar_lea.vmem %s5, 64
  %v4135 = vld [vmem:[%s4134] sm:$0xf]
  %v4136 = vld [vmem:[%s4134 + $0x4] sm:$0xf]
  %v4137 = vld [vmem:[%s4134 + $0x8] sm:$0xf]
  %v4138 = vld [vmem:[%s4134 + $0xc] sm:$0xf]
  %v4139 = vld [vmem:[%s4134 + $0x10] sm:$0xf]
  %v4140 = vld [vmem:[%s4134 + $0x14] sm:$0xf]
  %v4141 = vld [vmem:[%s4134 + $0x18] sm:$0xf]
  %v4142 = vld [vmem:[%s4134 + $0x1c] sm:$0xf]
  %v4143 = vld [vmem:[%s4134 + $0x20] sm:$0xf]
  %v4144 = vld [vmem:[%s4134 + $0x24] sm:$0xf]
  %v4145 = vld [vmem:[%s4134 + $0x28] sm:$0xf]
  %v4146 = vld [vmem:[%s4134 + $0x2c] sm:$0xf]
  %v4147 = vld [vmem:[%s4134 + $0x30] sm:$0xf]
  %v4148 = vld [vmem:[%s4134 + $0x34] sm:$0xf]
  %v4149 = vld [vmem:[%s4134 + $0x38] sm:$0xf]
  %v4150 = vld [vmem:[%s4134 + $0x3c] sm:$0xf]
  %v4155 = vunpack.c.l.b16 %v4106
  %v4156 = vunpack.c.l.b16 %v4107
  %v4157 = vunpack.c.l.b16 %v4108
  %v4158 = vunpack.c.l.b16 %v4109
  %v4159 = vpack.c.b16 %v4156, %v4155
  %v4160 = vpack.c.b16 %v4158, %v4157
  %v4179 = vunpack.c.l.b16 %v4135
  %v4180 = vunpack.c.l.b16 %v4136
  %v4181 = vunpack.c.l.b16 %v4137
  %v4182 = vunpack.c.l.b16 %v4138
  %v4183 = vunpack.c.l.b16 %v4139
  %v4184 = vunpack.c.l.b16 %v4140
  %v4185 = vunpack.c.l.b16 %v4141
  %v4186 = vunpack.c.l.b16 %v4142
  %v4187 = vunpack.c.l.b16 %v4143
  %v4188 = vunpack.c.l.b16 %v4144
  %v4189 = vunpack.c.l.b16 %v4145
  %v4190 = vunpack.c.l.b16 %v4146
  %v4191 = vunpack.c.l.b16 %v4147
  %v4192 = vunpack.c.l.b16 %v4148
  %v4193 = vunpack.c.l.b16 %v4149
  %v4194 = vunpack.c.l.b16 %v4150
  %v4195 = vpack.c.b16 %v4180, %v4179
  %v4196 = vpack.c.b16 %v4182, %v4181
  %v4197 = vpack.c.b16 %v4184, %v4183
  %v4198 = vpack.c.b16 %v4186, %v4185
  %v4199 = vpack.c.b16 %v4188, %v4187
  %v4200 = vpack.c.b16 %v4190, %v4189
  %v4201 = vpack.c.b16 %v4192, %v4191
  %v4202 = vpack.c.b16 %v4194, %v4193
  %4211 = vmatpush.bf16.msra.mxu0 %v4202
  %4212 = vmatpush.bf16.msra.mxu0 %v4201
  %4213 = vmatpush.bf16.msra.mxu0 %v4200
  %4214 = vmatpush.bf16.msra.mxu0 %v4199
  %4215 = vmatpush.bf16.msra.mxu0 %v4198
  %4216 = vmatpush.bf16.msra.mxu0 %v4197
  %4217 = vmatpush.bf16.msra.mxu0 %v4196
  %4218 = vmatpush.bf16.msra.mxu0 %v4195
  %4219 = vmatmul.bf16.gmra.mxu0 %v4159
  %v4220 = vpop.f32.mrf.mxu0
  %v4221 = vadd.f32 0.0, %v4220
  %v4222 = vpop.f32.mrf.mxu0
  %v4223 = vadd.f32 0.0, %v4222
  %4224 = vmatmul.bf16.gmra.mxu0 %v4160
  %v4225 = vpop.f32.mrf.mxu0
  %v4226 = vadd.f32 0.0, %v4225
  %v4227 = vpop.f32.mrf.mxu0
  %v4228 = vadd.f32 0.0, %v4227
  %4229 = vdwg.mxu0
  %v4234 = vunpack.c.l.b16 %v4102
  %v4235 = vunpack.c.l.b16 %v4103
  %v4236 = vunpack.c.l.b16 %v4104
  %v4237 = vunpack.c.l.b16 %v4105
  %v4238 = vpack.c.b16 %v4235, %v4234
  %v4239 = vpack.c.b16 %v4237, %v4236
  %v4258 = vunpack.c.l.b16 %v4118
  %v4259 = vunpack.c.l.b16 %v4119
  %v4260 = vunpack.c.l.b16 %v4120
  %v4261 = vunpack.c.l.b16 %v4121
  %v4262 = vunpack.c.l.b16 %v4122
  %v4263 = vunpack.c.l.b16 %v4123
  %v4264 = vunpack.c.l.b16 %v4124
  %v4265 = vunpack.c.l.b16 %v4125
  %v4266 = vunpack.c.l.b16 %v4126
  %v4267 = vunpack.c.l.b16 %v4127
  %v4268 = vunpack.c.l.b16 %v4128
  %v4269 = vunpack.c.l.b16 %v4129
  %v4270 = vunpack.c.l.b16 %v4130
  %v4271 = vunpack.c.l.b16 %v4131
  %v4272 = vunpack.c.l.b16 %v4132
  %v4273 = vunpack.c.l.b16 %v4133
  %v4274 = vpack.c.b16 %v4259, %v4258
  %v4275 = vpack.c.b16 %v4261, %v4260
  %v4276 = vpack.c.b16 %v4263, %v4262
  %v4277 = vpack.c.b16 %v4265, %v4264
  %v4278 = vpack.c.b16 %v4267, %v4266
  %v4279 = vpack.c.b16 %v4269, %v4268
  %v4280 = vpack.c.b16 %v4271, %v4270
  %v4281 = vpack.c.b16 %v4273, %v4272
  %4290 = vmatpush.bf16.msra.mxu0 %v4281
  %4291 = vmatpush.bf16.msra.mxu0 %v4280
  %4292 = vmatpush.bf16.msra.mxu0 %v4279
  %4293 = vmatpush.bf16.msra.mxu0 %v4278
  %4294 = vmatpush.bf16.msra.mxu0 %v4277
  %4295 = vmatpush.bf16.msra.mxu0 %v4276
  %4296 = vmatpush.bf16.msra.mxu0 %v4275
  %4297 = vmatpush.bf16.msra.mxu0 %v4274
  %4298 = vmatmul.bf16.gmra.mxu0 %v4238
  %v4299 = vpop.f32.mrf.mxu0
  %v4300 = vadd.f32 %v4221, %v4299
  %v4301 = vpop.f32.mrf.mxu0
  %v4302 = vadd.f32 %v4223, %v4301
  %4303 = vmatmul.bf16.gmra.mxu0 %v4239
  %v4304 = vpop.f32.mrf.mxu0
  %v4305 = vadd.f32 %v4226, %v4304
  %v4306 = vpop.f32.mrf.mxu0
  %v4307 = vadd.f32 %v4228, %v4306
  %4308 = vdwg.mxu0
  %s4309 = scalar_lea.vmem %s5, 128
  %v4310 = vld [vmem:[%s4309] sm:$0xf]
  %v4311 = vld [vmem:[%s4309 + $0x4] sm:$0xf]
  %v4312 = vld [vmem:[%s4309 + $0x8] sm:$0xf]
  %v4313 = vld [vmem:[%s4309 + $0xc] sm:$0xf]
  %v4314 = vld [vmem:[%s4309 + $0x10] sm:$0xf]
  %v4315 = vld [vmem:[%s4309 + $0x14] sm:$0xf]
  %v4316 = vld [vmem:[%s4309 + $0x18] sm:$0xf]
  %v4317 = vld [vmem:[%s4309 + $0x1c] sm:$0xf]
  %v4318 = vld [vmem:[%s4309 + $0x20] sm:$0xf]
  %v4319 = vld [vmem:[%s4309 + $0x24] sm:$0xf]
  %v4320 = vld [vmem:[%s4309 + $0x28] sm:$0xf]
  %v4321 = vld [vmem:[%s4309 + $0x2c] sm:$0xf]
  %v4322 = vld [vmem:[%s4309 + $0x30] sm:$0xf]
  %v4323 = vld [vmem:[%s4309 + $0x34] sm:$0xf]
  %v4324 = vld [vmem:[%s4309 + $0x38] sm:$0xf]
  %v4325 = vld [vmem:[%s4309 + $0x3c] sm:$0xf]
  %v4330 = vunpack.c.l.b16 %v4110
  %v4331 = vunpack.c.l.b16 %v4111
  %v4332 = vunpack.c.l.b16 %v4112
  %v4333 = vunpack.c.l.b16 %v4113
  %v4334 = vpack.c.b16 %v4331, %v4330
  %v4335 = vpack.c.b16 %v4333, %v4332
  %v4354 = vunpack.c.l.b16 %v4310
  %v4355 = vunpack.c.l.b16 %v4311
  %v4356 = vunpack.c.l.b16 %v4312
  %v4357 = vunpack.c.l.b16 %v4313
  %v4358 = vunpack.c.l.b16 %v4314
  %v4359 = vunpack.c.l.b16 %v4315
  %v4360 = vunpack.c.l.b16 %v4316
  %v4361 = vunpack.c.l.b16 %v4317
  %v4362 = vunpack.c.l.b16 %v4318
  %v4363 = vunpack.c.l.b16 %v4319
  %v4364 = vunpack.c.l.b16 %v4320
  %v4365 = vunpack.c.l.b16 %v4321
  %v4366 = vunpack.c.l.b16 %v4322
  %v4367 = vunpack.c.l.b16 %v4323
  %v4368 = vunpack.c.l.b16 %v4324
  %v4369 = vunpack.c.l.b16 %v4325
  %v4370 = vpack.c.b16 %v4355, %v4354
  %v4371 = vpack.c.b16 %v4357, %v4356
  %v4372 = vpack.c.b16 %v4359, %v4358
  %v4373 = vpack.c.b16 %v4361, %v4360
  %v4374 = vpack.c.b16 %v4363, %v4362
  %v4375 = vpack.c.b16 %v4365, %v4364
  %v4376 = vpack.c.b16 %v4367, %v4366
  %v4377 = vpack.c.b16 %v4369, %v4368
  %4386 = vmatpush.bf16.msra.mxu0 %v4377
  %4387 = vmatpush.bf16.msra.mxu0 %v4376
  %4388 = vmatpush.bf16.msra.mxu0 %v4375
  %4389 = vmatpush.bf16.msra.mxu0 %v4374
  %4390 = vmatpush.bf16.msra.mxu0 %v4373
  %4391 = vmatpush.bf16.msra.mxu0 %v4372
  %4392 = vmatpush.bf16.msra.mxu0 %v4371
  %4393 = vmatpush.bf16.msra.mxu0 %v4370
  %4394 = vmatmul.bf16.gmra.mxu0 %v4334
  %v4395 = vpop.f32.mrf.mxu0
  %v4396 = vadd.f32 0.0, %v4395
  %v4397 = vpop.f32.mrf.mxu0
  %v4398 = vadd.f32 0.0, %v4397
  %4399 = vmatmul.bf16.gmra.mxu0 %v4335
  %v4400 = vpop.f32.mrf.mxu0
  %v4401 = vadd.f32 0.0, %v4400
  %v4402 = vpop.f32.mrf.mxu0
  %v4403 = vadd.f32 0.0, %v4402
  %4404 = vdwg.mxu0
  %v4405 = vadd.f32 %v4300, %v4396
  %v4406 = vadd.f32 %v4302, %v4398
  %v4407 = vadd.f32 %v4305, %v4401
  %v4408 = vadd.f32 %v4307, %v4403
  %s4409 = scalar_lea.vmem %s5, 192
  %v4410 = vld [vmem:[%s4409] sm:$0xf]
  %v4411 = vld [vmem:[%s4409 + $0x4] sm:$0xf]
  %v4412 = vld [vmem:[%s4409 + $0x8] sm:$0xf]
  %v4413 = vld [vmem:[%s4409 + $0xc] sm:$0xf]
  %v4414 = vld [vmem:[%s4409 + $0x10] sm:$0xf]
  %v4415 = vld [vmem:[%s4409 + $0x14] sm:$0xf]
  %v4416 = vld [vmem:[%s4409 + $0x18] sm:$0xf]
  %v4417 = vld [vmem:[%s4409 + $0x1c] sm:$0xf]
  %v4418 = vld [vmem:[%s4409 + $0x20] sm:$0xf]
  %v4419 = vld [vmem:[%s4409 + $0x24] sm:$0xf]
  %v4420 = vld [vmem:[%s4409 + $0x28] sm:$0xf]
  %v4421 = vld [vmem:[%s4409 + $0x2c] sm:$0xf]
  %v4422 = vld [vmem:[%s4409 + $0x30] sm:$0xf]
  %v4423 = vld [vmem:[%s4409 + $0x34] sm:$0xf]
  %v4424 = vld [vmem:[%s4409 + $0x38] sm:$0xf]
  %v4425 = vld [vmem:[%s4409 + $0x3c] sm:$0xf]
  %v4430 = vunpack.c.l.b16 %v4114
  %v4431 = vunpack.c.l.b16 %v4115
  %v4432 = vunpack.c.l.b16 %v4116
  %v4433 = vunpack.c.l.b16 %v4117
  %v4434 = vpack.c.b16 %v4431, %v4430
  %v4435 = vpack.c.b16 %v4433, %v4432
  %v4454 = vunpack.c.l.b16 %v4410
  %v4455 = vunpack.c.l.b16 %v4411
  %v4456 = vunpack.c.l.b16 %v4412
  %v4457 = vunpack.c.l.b16 %v4413
  %v4458 = vunpack.c.l.b16 %v4414
  %v4459 = vunpack.c.l.b16 %v4415
  %v4460 = vunpack.c.l.b16 %v4416
  %v4461 = vunpack.c.l.b16 %v4417
  %v4462 = vunpack.c.l.b16 %v4418
  %v4463 = vunpack.c.l.b16 %v4419
  %v4464 = vunpack.c.l.b16 %v4420
  %v4465 = vunpack.c.l.b16 %v4421
  %v4466 = vunpack.c.l.b16 %v4422
  %v4467 = vunpack.c.l.b16 %v4423
  %v4468 = vunpack.c.l.b16 %v4424
  %v4469 = vunpack.c.l.b16 %v4425
  %v4470 = vpack.c.b16 %v4455, %v4454
  %v4471 = vpack.c.b16 %v4457, %v4456
  %v4472 = vpack.c.b16 %v4459, %v4458
  %v4473 = vpack.c.b16 %v4461, %v4460
  %v4474 = vpack.c.b16 %v4463, %v4462
  %v4475 = vpack.c.b16 %v4465, %v4464
  %v4476 = vpack.c.b16 %v4467, %v4466
  %v4477 = vpack.c.b16 %v4469, %v4468
  %4486 = vmatpush.bf16.msra.mxu0 %v4477
  %4487 = vmatpush.bf16.msra.mxu0 %v4476
  %4488 = vmatpush.bf16.msra.mxu0 %v4475
  %4489 = vmatpush.bf16.msra.mxu0 %v4474
  %4490 = vmatpush.bf16.msra.mxu0 %v4473
  %4491 = vmatpush.bf16.msra.mxu0 %v4472
  %4492 = vmatpush.bf16.msra.mxu0 %v4471
  %4493 = vmatpush.bf16.msra.mxu0 %v4470
  %4494 = vmatmul.bf16.gmra.mxu0 %v4434
  %v4495 = vpop.f32.mrf.mxu0
  %v4496 = vadd.f32 0.0, %v4495
  %v4497 = vpop.f32.mrf.mxu0
  %v4498 = vadd.f32 0.0, %v4497
  %4499 = vmatmul.bf16.gmra.mxu0 %v4435
  %v4500 = vpop.f32.mrf.mxu0
  %v4501 = vadd.f32 0.0, %v4500
  %v4502 = vpop.f32.mrf.mxu0
  %v4503 = vadd.f32 0.0, %v4502
  %4504 = vdwg.mxu0
  %v4505 = vadd.f32 %v4405, %v4496
  %v4506 = vadd.f32 %v4406, %v4498
  %v4507 = vadd.f32 %v4407, %v4501
  %v4508 = vadd.f32 %v4408, %v4503
  %v4509 = vld [vmem:[%s6] sm:$0x1]
  %v4511 = vperm.slane %v4509, 0
  %v4513 = vadd.f32 %v4505, %v4511
  %v4514 = vadd.f32 %v4506, %v4511
  %v4515 = vadd.f32 %v4507, %v4511
  %v4516 = vadd.f32 %v4508, %v4511
  %v4517 = vmax.f32 %v4513, 0.0
  %v4518 = vmax.f32 %v4514, 0.0
  %v4519 = vmax.f32 %v4515, 0.0
  %v4520 = vmax.f32 %v4516, 0.0
  %v4521 = vpack.c.bf16 %v4518, %v4517
  %v4522 = vpack.c.bf16 %v4520, %v4519
  %v4523 = vld [vmem:[%s7] sm:$0xf]
  %v4524 = vld [vmem:[%s7 + $0x4] sm:$0xf]
  %v4525 = vld [vmem:[%s7 + $0x8] sm:$0xf]
  %v4526 = vld [vmem:[%s7 + $0xc] sm:$0xf]
  %v4527 = vld [vmem:[%s7 + $0x10] sm:$0xf]
  %v4528 = vld [vmem:[%s7 + $0x14] sm:$0xf]
  %v4529 = vld [vmem:[%s7 + $0x18] sm:$0x1]
  %v4530 = vld [vmem:[%s8] sm:$0x1]
  %v4532 = vperm.slane %v4530, 0
  %v4541 = vunpack.c.l.b16 %v4523
  %v4542 = vunpack.c.l.b16 %v4524
  %v4543 = vunpack.c.l.b16 %v4525
  %v4544 = vunpack.c.l.b16 %v4526
  %v4545 = vunpack.c.l.b16 %v4527
  %v4546 = vunpack.c.l.b16 %v4528
  %v4547 = vunpack.c.l.b16 %v4529
  %v4548 = vpack.c.b16 %v4542, %v4541
  %v4549 = vpack.c.b16 %v4544, %v4543
  %v4550 = vpack.c.b16 %v4546, %v4545
  %v4551 = vpack.c.b16 %v4547, %v4547
  %vm4555 = vcmask 408576
  %v4557 = vsel %vm4555, %v4521, 0
  %v4560 = vsel %vm4555, %v4522, 0
  %vm4562 = vcmask 1040384
  %v4564 = vsel %vm4562, %v4551, 0
  %4566 = vmatpush.bf16.msra.mxu0 0
  %4567 = vmatpush.bf16.msra.mxu0 0
  %4568 = vmatpush.bf16.msra.mxu0 0
  %4569 = vmatpush.bf16.msra.mxu0 0
  %4570 = vmatpush.bf16.msra.mxu0 %v4564
  %4571 = vmatpush.bf16.msra.mxu0 %v4550
  %4572 = vmatpush.bf16.msra.mxu0 %v4549
  %4573 = vmatpush.bf16.msra.mxu0 %v4548
  %4574 = vmatmul.bf16.gmra.mxu0 %v4557
  %v4575 = vpop.f32.mrf.mxu0
  %v4576 = vadd.f32 %v4532, %v4575
  %v4577 = vpop.f32.mrf.mxu0
  %v4578 = vadd.f32 %v4532, %v4577
  %4579 = vmatmul.bf16.gmra.mxu0 %v4560
  %v4580 = vpop.f32.mrf.mxu0
  %v4581 = vadd.f32 %v4532, %v4580
  %v4582 = vpop.f32.mrf.mxu0
  %v4583 = vadd.f32 %v4532, %v4582
  %4584 = vdwg.mxu0
  %4585 = vmax.xlane.f32.xlu0 %v4576
  %v4586 = vpop.xlane.xlu0 %4585
  %4587 = vmax.xlane.f32.xlu0 %v4578
  %v4588 = vpop.xlane.xlu0 %4587
  %4589 = vmax.xlane.f32.xlu0 %v4581
  %v4590 = vpop.xlane.xlu0 %4589
  %4591 = vmax.xlane.f32.xlu0 %v4583
  %v4592 = vpop.xlane.xlu0 %4591
  %v4593 = vsub.f32 %v4576, %v4586
  %v4594 = vsub.f32 %v4578, %v4588
  %v4595 = vsub.f32 %v4581, %v4590
  %v4596 = vsub.f32 %v4583, %v4592
  %v4597 = vmul.f32 %v4593, 1.442695
  %v4598 = vpow.pop %v4597
  %v4599 = vmul.f32 %v4594, 1.442695
  %v4600 = vpow.pop %v4599
  %v4601 = vmul.f32 %v4595, 1.442695
  %v4602 = vpow.pop %v4601
  %v4603 = vmul.f32 %v4596, 1.442695
  %v4604 = vpow.pop %v4603
  %4605 = vadd.xlane.f32.xlu0 %v4598
  %v4606 = vpop.xlane.xlu0 %4605
  %4607 = vadd.xlane.f32.xlu0 %v4600
  %v4608 = vpop.xlane.xlu0 %4607
  %4609 = vadd.xlane.f32.xlu0 %v4602
  %v4610 = vpop.xlane.xlu0 %4609
  %4611 = vadd.xlane.f32.xlu0 %v4604
  %v4612 = vpop.xlane.xlu0 %4611
  %v4613 = vlog2.pop %v4606
  %v4614 = vmul.f32 %v4613, 0.6931472
  %v4615 = vlog2.pop %v4608
  %v4616 = vmul.f32 %v4615, 0.6931472
  %v4617 = vlog2.pop %v4610
  %v4618 = vmul.f32 %v4617, 0.6931472
  %v4619 = vlog2.pop %v4612
  %v4620 = vmul.f32 %v4619, 0.6931472
  %v4621 = vsub.f32 %v4593, %v4614
  %v4622 = vsub.f32 %v4594, %v4616
  %v4623 = vsub.f32 %v4595, %v4618
  %v4624 = vsub.f32 %v4596, %v4620
  %4625 = vst [vmem:[%s9] sm:$0xff] %v4621
  %4626 = vst [vmem:[%s9 + $0x8] sm:$0xff] %v4622
  %4627 = vst [vmem:[%s9 + $0x10] sm:$0xff] %v4623
  %4628 = vst [vmem:[%s9 + $0x18] sm:$0xff] %v4624
  // Predicated region
  $region38: #{net_forward.1} parent=0 // pred_check
    _
  $region39: #{net_forward.1} parent=0 // pred_check_branch
    %4630 = sbr.rel (0) target = $region41
  $region40: #{net_forward.1} parent=0 // pred_region
    _
  $region41: #{net_forward.1} parent=0 // pred_fallthru
    _
  // Predicated region
  $region42: #{net_forward.1} parent=0 // pred_check
    _
  $region43: #{net_forward.1} parent=0 // pred_check_branch
    %4632 = sbr.rel (0) target = $region45
  $region44: #{net_forward.1} parent=0 // pred_region
    _
  $region45: #{net_forward.1} parent=0 // pred_fallthru
    _

</llo_original>
